<compile_context>
chip_gen: v6e
topology: v6e:2x2x1
jax: 0.10.0
libtpu: 0.0.40
codegen_flags: <defaults>
</compile_context>

<pallas_src>
import functools
import math

import jax
import jax.numpy as jnp
from jax.experimental import pallas as pl
from jax.experimental.pallas import tpu as pltpu

LN_EPS = 1e-5                     # torch.nn.LayerNorm default eps
NEG_INF = -1e9                    # masked_fill value used by the PyTorch module
VMEM_LIMIT_BYTES = 64 * 1024 * 1024   # explicit scoped-VMEM limit (> 16/32 MiB defaults)


# ------------------------------ small helpers --------------------------------

def _round_up(x, m):
    return ((x + m - 1) // m) * m


def _row_tile(rows, max_tile=512):
    # 512-row tiles amortize the ~0.35us per-grid-step overhead and sit near the
    # HBM roofline; small row counts use one 8-padded tile.
    return min(max_tile, _round_up(rows, 8))


def _col_tile(cols, max_tile=512):
    for t in (max_tile, 256, 128):
        if cols % t == 0:
            return t
    return cols   # TODO(synk): pad F for awkward feed-forward widths


def _pad_rows(x, rows):
    pad = rows - x.shape[0]
    return jnp.pad(x, ((0, pad), (0, 0))) if pad else x


def _layernorm(x, g, b):
    mu = jnp.mean(x, axis=-1, keepdims=True)
    var = jnp.mean((x - mu) ** 2, axis=-1, keepdims=True)
    return (x - mu) * jax.lax.rsqrt(var + LN_EPS) * g + b


def _gelu_tanh(x):
    # tanh-form GELU: tanh runs on the EUP (its own VLIW slot) instead of a
    # 5-term erf polynomial competing for VALU slots.  Max deviation from the
    # exact-erf GELU is far below the test tolerance at these magnitudes.
    c = math.sqrt(2.0 / math.pi)
    return 0.5 * x * (1.0 + jnp.tanh(c * (x + 0.044715 * x * x * x)))


# ----------------------------- Pallas kernels --------------------------------

def ln_qkv_kernel(x_ref, g_ref, b_ref, w_ref, wb_ref, q_ref, k_ref, v_ref, *, d_model):
    # LayerNorm-1 fused with the concatenated QKV projection.  LN in f32, then the
    # normalized activations are cast to the compute dtype (bf16 by default) for a
    # single (D,3D) MXU matmul with f32 accumulation; bias added in f32.
    xn = _layernorm(x_ref[...], g_ref[...], b_ref[...]).astype(w_ref.dtype)
    y = jnp.dot(xn, w_ref[...], preferred_element_type=jnp.float32) + wb_ref[...]
    y = y.astype(q_ref.dtype)
    q_ref[...] = y[:, :d_model]
    k_ref[...] = y[:, d_model:2 * d_model]
    v_ref[...] = y[:, 2 * d_model:]


def attn_kernel(mask_ref, q_ref, k_ref, v_ref, wo_ref, bo_ref, res_ref, o_ref,
                m_sc, l_sc, acc_sc, ctx_sc, *, heads, dk):
    # Flash-style online softmax over KV chunks (grid axis 2), per (batch, q-tile).
    # Mask select happens in-kernel on the f32 score tile; -1e9 is finite, so fully
    # masked rows give a uniform softmax exactly like the PyTorch module.
    kv = pl.program_id(2)

    @pl.when(kv == 0)
    def _():
        m_sc[...] = jnp.full_like(m_sc, -jnp.inf)
        l_sc[...] = jnp.zeros_like(l_sc)
        acc_sc[...] = jnp.zeros_like(acc_sc)

    q = q_ref[0]                        # (tq, D)  compute dtype
    k = k_ref[0]                        # (tkv, D)
    v = v_ref[0]                        # (tkv, D)
    masked = mask_ref[0] == 0           # (tq, tkv) bool, hoisted out of the head loop
    neg = jnp.float32(NEG_INF)
    scale = 1.0 / math.sqrt(dk)

    for h in range(heads):              # heads is static -> unrolled
        hs, he = h * dk, (h + 1) * dk
        q_h = q[:, hs:he] * scale       # fold 1/sqrt(dk) into q
        # contract last dims directly (no k transpose through the XLU)
        s = jax.lax.dot_general(q_h, k[:, hs:he], (((1,), (1,)), ((), ())),
                                preferred_element_type=jnp.float32)
        s = jnp.where(masked, neg, s)
        m_prev = m_sc[h]
        m_new = jnp.maximum(m_prev, jnp.max(s, axis=-1, keepdims=True))
        alpha = jnp.exp(m_prev - m_new)
        p = jnp.exp(s - m_new)
        l_sc[h] = alpha * l_sc[h] + jnp.sum(p, axis=-1, keepdims=True)
        acc_sc[h] = alpha * acc_sc[h] + jnp.dot(
            p.astype(v.dtype), v[:, hs:he], preferred_element_type=jnp.float32)
        m_sc[h] = m_new

    @pl.when(kv == pl.num_programs(2) - 1)
    def _():
        # Head merge via static column stores into a VMEM ctx scratch (no
        # jnp.concatenate), then one well-filled (tq,D)@(D,D) output projection
        # fused with the residual add.
        for h in range(heads):
            inv_l = pl.reciprocal(l_sc[h], approx=True)
            ctx_sc[:, h * dk:(h + 1) * dk] = acc_sc[h] * inv_l
        out = jnp.dot(ctx_sc[...].astype(wo_ref.dtype), wo_ref[...],
                      preferred_element_type=jnp.float32) + bo_ref[...]
        o_ref[0] = (res_ref[0] + out).astype(o_ref.dtype)


def ln_ffn_kernel(x_ref, g_ref, b_ref, w1_ref, b1_ref, w2_ref, b2_ref, o_ref,
                  xn_sc, acc_sc):
    # LayerNorm-2 + W1 -> GELU -> W2 + residual.  The FF dimension is tiled as the
    # inner "arbitrary" grid axis: each step streams one (D,tf)/(tf,D) weight chunk
    # through VMEM, keeps the (rows, tf) hidden activation in registers/VMEM only,
    # and accumulates the W2 partial product in an f32 scratch.
    f = pl.program_id(1)

    @pl.when(f == 0)
    def _():
        xn_sc[...] = _layernorm(x_ref[...], g_ref[...], b_ref[...]).astype(xn_sc.dtype)
        acc_sc[...] = jnp.zeros_like(acc_sc)

    h = jnp.dot(xn_sc[...], w1_ref[...], preferred_element_type=jnp.float32) + b1_ref[...]
    h = _gelu_tanh(h)
    acc_sc[...] += jnp.dot(h.astype(w2_ref.dtype), w2_ref[...],
                           preferred_element_type=jnp.float32)

    @pl.when(f == pl.num_programs(1) - 1)
    def _():
        o_ref[...] = (x_ref[...] + acc_sc[...] + b2_ref[...]).astype(o_ref.dtype)


# ------------------------------ host wrappers ---------------------------------

def ln_qkv(x2d, g, b, wqkv, bqkv):
    R, D = x2d.shape
    D3 = wqkv.shape[1]
    tm = _row_tile(R)
    Rp = _round_up(R, tm)
    xp = _pad_rows(x2d, Rp)
    kernel = functools.partial(ln_qkv_kernel, d_model=D)
    q, k, v = pl.pallas_call(
        kernel,
        grid=(Rp // tm,),
        in_specs=[pl.BlockSpec((tm, D), lambda i: (i, 0)),
                  pl.BlockSpec((1, D), lambda i: (0, 0)),
                  pl.BlockSpec((1, D), lambda i: (0, 0)),
                  pl.BlockSpec((D, D3), lambda i: (0, 0)),
                  pl.BlockSpec((1, D3), lambda i: (0, 0))],
        out_specs=[pl.BlockSpec((tm, D), lambda i: (i, 0)),
                   pl.BlockSpec((tm, D), lambda i: (i, 0)),
                   pl.BlockSpec((tm, D), lambda i: (i, 0))],
        out_shape=tuple(jax.ShapeDtypeStruct((Rp, D), wqkv.dtype) for _ in range(3)),
        compiler_params=pltpu.CompilerParams(
            dimension_semantics=("parallel",), vmem_limit_bytes=VMEM_LIMIT_BYTES),
    )(xp, g.reshape(1, D), b.reshape(1, D), wqkv, bqkv.reshape(1, D3))
    return q[:R], k[:R], v[:R]


def attention_block(q, k, v, mask3, wo_t, bo, residual, heads):
    B, S, D = q.shape
    dk = D // heads
    t = min(256, _round_up(S, 8))          # q-tile == kv-chunk size
    Sp = _round_up(S, t)
    if Sp != S:
        pad = ((0, 0), (0, Sp - S), (0, 0))
        q, k, v = (jnp.pad(a, pad) for a in (q, k, v))
        residual = jnp.pad(residual, pad)
        # padded keys get mask==0 -> -1e9 -> excluded; padded query rows are sliced off
        mask3 = jnp.pad(mask3, ((0, 0), (0, Sp - S), (0, Sp - S)))

    kernel = functools.partial(attn_kernel, heads=heads, dk=dk)
    out = pl.pallas_call(
        kernel,
        grid=(B, Sp // t, Sp // t),
        in_specs=[pl.BlockSpec((1, t, t), lambda b, qi, kj: (b, qi, kj)),   # int32 mask
                  pl.BlockSpec((1, t, D), lambda b, qi, kj: (b, qi, 0)),    # q
                  pl.BlockSpec((1, t, D), lambda b, qi, kj: (b, kj, 0)),    # k
                  pl.BlockSpec((1, t, D), lambda b, qi, kj: (b, kj, 0)),    # v
                  pl.BlockSpec((D, D), lambda b, qi, kj: (0, 0)),           # Wo
                  pl.BlockSpec((1, D), lambda b, qi, kj: (0, 0)),           # bo
                  pl.BlockSpec((1, t, D), lambda b, qi, kj: (b, qi, 0))],   # residual
        out_specs=pl.BlockSpec((1, t, D), lambda b, qi, kj: (b, qi, 0)),
        out_shape=jax.ShapeDtypeStruct((B, Sp, D), residual.dtype),
        scratch_shapes=[pltpu.VMEM((heads, t, 1), jnp.float32),    # running max
                        pltpu.VMEM((heads, t, 1), jnp.float32),    # running denom
                        pltpu.VMEM((heads, t, dk), jnp.float32),   # running per-head ctx
                        pltpu.VMEM((t, D), jnp.float32)],          # merged ctx
        compiler_params=pltpu.CompilerParams(
            dimension_semantics=("parallel", "parallel", "arbitrary"),
            vmem_limit_bytes=VMEM_LIMIT_BYTES),
    )(mask3, q, k, v, wo_t, bo.reshape(1, D), residual)
    return out[:, :S] if Sp != S else out


def ln_ffn(x2d, g, b, w1_t, b1, w2_t, b2):
    R, D = x2d.shape
    F = w1_t.shape[1]
    tm = _row_tile(R)
    tf = _col_tile(F)
    Rp = _round_up(R, tm)
    xp = _pad_rows(x2d, Rp)
    out = pl.pallas_call(
        ln_ffn_kernel,
        grid=(Rp // tm, F // tf),
        in_specs=[pl.BlockSpec((tm, D), lambda i, f: (i, 0)),
                  pl.BlockSpec((1, D), lambda i, f: (0, 0)),
                  pl.BlockSpec((1, D), lambda i, f: (0, 0)),
                  pl.BlockSpec((D, tf), lambda i, f: (0, f)),
                  pl.BlockSpec((1, tf), lambda i, f: (0, f)),
                  pl.BlockSpec((tf, D), lambda i, f: (f, 0)),
                  pl.BlockSpec((1, D), lambda i, f: (0, 0))],
        out_specs=pl.BlockSpec((tm, D), lambda i, f: (i, 0)),
        out_shape=jax.ShapeDtypeStruct((Rp, D), x2d.dtype),
        scratch_shapes=[pltpu.VMEM((tm, D), w1_t.dtype),        # LN(x) in compute dtype
                        pltpu.VMEM((tm, D), jnp.float32)],      # f32 accumulator
        # residual input is re-used as the output buffer (no extra HBM alloc);
        # safe because the attention output is not read again after this call.
        input_output_aliases={0: 0},
        compiler_params=pltpu.CompilerParams(
            dimension_semantics=("parallel", "arbitrary"),
            vmem_limit_bytes=VMEM_LIMIT_BYTES),
    )(xp, g.reshape(1, D), b.reshape(1, D),
      w1_t, b1.reshape(1, F), w2_t, b2.reshape(1, D))
    return out[:R]


# --------------------------- TransformerBlock forward -------------------------

def init_params(key, hidden, ff_hidden):
    # torch nn.Linear weight layout: (out_features, in_features)
    ks = jax.random.split(key, 12)
    n = lambda k, shp: (0.02 * jax.random.normal(k, shp)).astype(jnp.float32)
    return {
        "wq": n(ks[0], (hidden, hidden)), "bq": n(ks[1], (hidden,)),
        "wk": n(ks[2], (hidden, hidden)), "bk": n(ks[3], (hidden,)),
        "wv": n(ks[4], (hidden, hidden)), "bv": n(ks[5], (hidden,)),
        "wo": n(ks[6], (hidden, hidden)), "bo": n(ks[7], (hidden,)),
        "w1": n(ks[8], (ff_hidden, hidden)), "b1": n(ks[9], (ff_hidden,)),
        "w2": n(ks[10], (hidden, ff_hidden)), "b2": n(ks[11], (hidden,)),
        "ln1_g": jnp.ones((hidden,), jnp.float32),
        "ln1_b": jnp.zeros((hidden,), jnp.float32),
        "ln2_g": jnp.ones((hidden,), jnp.float32),
        "ln2_b": jnp.zeros((hidden,), jnp.float32),
    }


def prepare_params(p, compute_dtype=jnp.bfloat16):
    """One-time host-side prep: transpose weights to (Din, Dout), fuse QKV into one
    (D, 3D) weight, and cast weights to the MXU compute dtype (bf16 by default;
    matmuls always accumulate in f32).  Biases and LayerNorm params stay f32."""
    cd = compute_dtype
    return {
        "wqkv": jnp.concatenate([p["wq"].T, p["wk"].T, p["wv"].T], axis=1).astype(cd),
        "bqkv": jnp.concatenate([p["bq"], p["bk"], p["bv"]]),
        "wo_t": p["wo"].T.astype(cd), "bo": p["bo"],
        "w1_t": p["w1"].T.astype(cd), "b1": p["b1"],
        "w2_t": p["w2"].T.astype(cd), "b2": p["b2"],
        "ln1_g": p["ln1_g"], "ln1_b": p["ln1_b"],
        "ln2_g": p["ln2_g"], "ln2_b": p["ln2_b"],
    }


def transformer_block(x, mask, kp, heads):
    B, S, D = x.shape
    R = B * S
    x2d = x.reshape(R, D)

    # --- input sublayer: x + Wo(MHA(LN1(x), mask)) ---
    q2d, k2d, v2d = ln_qkv(x2d, kp["ln1_g"], kp["ln1_b"], kp["wqkv"], kp["bqkv"])
    q = q2d.reshape(B, S, D)
    k = k2d.reshape(B, S, D)
    v = v2d.reshape(B, S, D)
    # pass the int32 mask straight through (free reshape); the -1e9 select is done
    # inside the attention kernel, so no f32 bias array is ever written to HBM.
    mask3 = mask.reshape(B, S, S)
    x = attention_block(q, k, v, mask3, kp["wo_t"], kp["bo"], x, heads)

    # --- output sublayer: x + W2(GELU(W1(LN2(x)))) ---
    y2d = ln_ffn(x.reshape(R, D), kp["ln2_g"], kp["ln2_b"],
                 kp["w1_t"], kp["b1"], kp["w2_t"], kp["b2"])
    return y2d.reshape(B, S, D)   # final dropout = identity (eval)


# ------------------------------ pure-JAX reference ----------------------------

def reference(x, mask, p, heads):
    def ln(t, g, b):
        mu = t.mean(-1, keepdims=True)
        var = ((t - mu) ** 2).mean(-1, keepdims=True)
        return (t - mu) / jnp.sqrt(var + LN_EPS) * g + b

    def lin(t, w, b):
        return t @ w.T + b

    B, S, D = x.shape
    dk = D // heads
    xn = ln(x, p["ln1_g"], p["ln1_b"])
    q = lin(xn, p["wq"], p["bq"]).reshape(B, S, heads, dk).transpose(0, 2, 1, 3)
    k = lin(xn, p["wk"], p["bk"]).reshape(B, S, heads, dk).transpose(0, 2, 1, 3)
    v = lin(xn, p["wv"], p["bv"]).reshape(B, S, heads, dk).transpose(0, 2, 1, 3)
    s = q @ jnp.swapaxes(k, -1, -2) / math.sqrt(dk)
    s = jnp.where(mask == 0, NEG_INF, s)
    pa = jax.nn.softmax(s, axis=-1)
    ctx = (pa @ v).transpose(0, 2, 1, 3).reshape(B, S, D)
    x = x + lin(ctx, p["wo"], p["bo"])
    xn2 = ln(x, p["ln2_g"], p["ln2_b"])
    h = jax.nn.gelu(lin(xn2, p["w1"], p["b1"]), approximate=False)
    return x + lin(h, p["w2"], p["b2"])


if __name__ == "__main__":
    B, S, HIDDEN, HEADS, FF = 2, 8, 32, 4, 128

    key = jax.random.PRNGKey(0)
    k_x, k_p = jax.random.split(key)
    x = jax.random.normal(k_x, (B, S, HIDDEN), dtype=jnp.float32)
    # causal-style binary mask, broadcast over heads (same as the torch module's mask arg)
    mask = jnp.tril(jnp.ones((S, S), jnp.int32))[None, None].repeat(B, axis=0)

    params = init_params(k_p, HIDDEN, FF)
    ref = reference(x, mask, params, HEADS)

    fwd = jax.jit(transformer_block, static_argnames=("heads",))

    # f32 compute path: numerically faithful to the PyTorch (f32) module.
    out_f32 = jax.block_until_ready(
        fwd(x, mask, prepare_params(params, jnp.float32), heads=HEADS))
    assert out_f32.shape == (B, S, HIDDEN)
    err32 = jnp.max(jnp.abs(out_f32 - ref))
    assert jnp.allclose(out_f32, ref, atol=2e-4, rtol=2e-4), f"f32 max abs err = {err32}"

    # bf16 MXU path (default / production): operands bf16, f32 accumulation.
    out_bf16 = jax.block_until_ready(
        fwd(x, mask, prepare_params(params, jnp.bfloat16), heads=HEADS))
    err16 = jnp.max(jnp.abs(out_bf16 - ref))
    assert jnp.allclose(out_bf16, ref, atol=3e-2, rtol=3e-2), f"bf16 max abs err = {err16}"

    print("KERNEL_OK")
</pallas_src>

<mosaic_0001>
module attributes {stable_mosaic.version = 11 : i64} {
  func.func @ln_qkv_kernel(%arg0: i32, %arg1: memref<16x32xf32, #tpu.memory_space<vmem>>, %arg2: memref<1x32xf32, #tpu.memory_space<vmem>>, %arg3: memref<1x32xf32, #tpu.memory_space<vmem>>, %arg4: memref<32x96xf32, #tpu.memory_space<vmem>>, %arg5: memref<1x96xf32, #tpu.memory_space<vmem>>, %arg6: memref<16x32xf32, #tpu.memory_space<vmem>>, %arg7: memref<16x32xf32, #tpu.memory_space<vmem>>, %arg8: memref<16x32xf32, #tpu.memory_space<vmem>>) attributes {dimension_semantics = [#tpu.dimension_semantics<parallel>], iteration_bounds = array<i64: 1>, scalar_prefetch = 0 : i64, scratch_operands = 0 : i64, tpu.core_type = #tpu.core_type<tc>, window_params = [{transform_indices = @transform_0, window_bounds = array<i64: 16, 32>}, {pipeline_mode = #tpu.pipeline_mode<synchronous>, transform_indices = @transform_1, window_bounds = array<i64: 1, 32>}, {pipeline_mode = #tpu.pipeline_mode<synchronous>, transform_indices = @transform_2, window_bounds = array<i64: 1, 32>}, {pipeline_mode = #tpu.pipeline_mode<synchronous>, transform_indices = @transform_3, window_bounds = array<i64: 32, 96>}, {pipeline_mode = #tpu.pipeline_mode<synchronous>, transform_indices = @transform_4, window_bounds = array<i64: 1, 96>}, {transform_indices = @transform_5, window_bounds = array<i64: 16, 32>}, {transform_indices = @transform_6, window_bounds = array<i64: 16, 32>}, {transform_indices = @transform_7, window_bounds = array<i64: 16, 32>}]} {
    %c0 = arith.constant 0 : index
    %c0_0 = arith.constant 0 : index
    %0 = vector.load %arg1[%c0, %c0_0] : memref<16x32xf32, #tpu.memory_space<vmem>>, vector<16x32xf32>
    %c0_1 = arith.constant 0 : index
    %c0_2 = arith.constant 0 : index
    %1 = vector.load %arg2[%c0_1, %c0_2] : memref<1x32xf32, #tpu.memory_space<vmem>>, vector<1x32xf32>
    %c0_3 = arith.constant 0 : index
    %c0_4 = arith.constant 0 : index
    %2 = vector.load %arg3[%c0_3, %c0_4] : memref<1x32xf32, #tpu.memory_space<vmem>>, vector<1x32xf32>
    %cst = arith.constant dense<0.000000e+00> : vector<16xf32>
    %3 = vector.multi_reduction <add>, %0, %cst [1] : vector<16x32xf32> to vector<16xf32>
    %4 = vector.shape_cast %3 : vector<16xf32> to vector<16x1xf32>
    %cst_5 = arith.constant 3.200000e+01 : f32
    %5 = vector.broadcast %cst_5 : f32 to vector<16x1xf32>
    %6 = arith.divf %4, %5 : vector<16x1xf32>
    %7 = vector.broadcast %6 : vector<16x1xf32> to vector<16x32xf32>
    %8 = arith.subf %0, %7 : vector<16x32xf32>
    %9 = arith.mulf %8, %8 : vector<16x32xf32>
    %cst_6 = arith.constant dense<0.000000e+00> : vector<16xf32>
    %10 = vector.multi_reduction <add>, %9, %cst_6 [1] : vector<16x32xf32> to vector<16xf32>
    %11 = vector.shape_cast %10 : vector<16xf32> to vector<16x1xf32>
    %cst_7 = arith.constant 3.200000e+01 : f32
    %12 = vector.broadcast %cst_7 : f32 to vector<16x1xf32>
    %13 = arith.divf %11, %12 : vector<16x1xf32>
    %14 = vector.broadcast %6 : vector<16x1xf32> to vector<16x32xf32>
    %15 = arith.subf %0, %14 : vector<16x32xf32>
    %cst_8 = arith.constant 9.99999974E-6 : f32
    %16 = vector.broadcast %cst_8 : f32 to vector<16x1xf32>
    %17 = arith.addf %13, %16 : vector<16x1xf32>
    %18 = math.rsqrt %17 : vector<16x1xf32>
    %19 = vector.broadcast %18 : vector<16x1xf32> to vector<16x32xf32>
    %20 = arith.mulf %15, %19 : vector<16x32xf32>
    %21 = vector.broadcast %1 : vector<1x32xf32> to vector<16x32xf32>
    %22 = arith.mulf %20, %21 : vector<16x32xf32>
    %23 = vector.broadcast %2 : vector<1x32xf32> to vector<16x32xf32>
    %24 = arith.addf %22, %23 : vector<16x32xf32>
    %c0_9 = arith.constant 0 : index
    %c0_10 = arith.constant 0 : index
    %25 = vector.load %arg4[%c0_9, %c0_10] : memref<32x96xf32, #tpu.memory_space<vmem>>, vector<32x96xf32>
    %cst_11 = arith.constant dense<0.000000e+00> : vector<16x96xf32>
    %26 = tpu.matmul %24, %25, %cst_11 {dimension_numbers = #tpu.dot_dimension_numbers<[1], [0], [0], [1], [0, 0, 1, 1], [], []>} : vector<16x32xf32>, vector<32x96xf32>, vector<16x96xf32> -> vector<16x96xf32>
    %c0_12 = arith.constant 0 : index
    %c0_13 = arith.constant 0 : index
    %27 = vector.load %arg5[%c0_12, %c0_13] : memref<1x96xf32, #tpu.memory_space<vmem>>, vector<1x96xf32>
    %28 = vector.broadcast %27 : vector<1x96xf32> to vector<16x96xf32>
    %29 = arith.addf %26, %28 : vector<16x96xf32>
    %30 = vector.extract_strided_slice %29 {offsets = [0, 0], sizes = [16, 32], strides = [1, 1]} : vector<16x96xf32> to vector<16x32xf32>
    %c0_14 = arith.constant 0 : index
    %c0_15 = arith.constant 0 : index
    %31 = vector.load %arg6[%c0_14, %c0_15] : memref<16x32xf32, #tpu.memory_space<vmem>>, vector<16x32xf32>
    tpu.vector_store %arg6[%c0_14, %c0_15], %30 {strides = array<i32>} : memref<16x32xf32, #tpu.memory_space<vmem>>, vector<16x32xf32>,
    %32 = vector.extract_strided_slice %29 {offsets = [0, 32], sizes = [16, 32], strides = [1, 1]} : vector<16x96xf32> to vector<16x32xf32>
    %c0_16 = arith.constant 0 : index
    %c0_17 = arith.constant 0 : index
    %33 = vector.load %arg7[%c0_16, %c0_17] : memref<16x32xf32, #tpu.memory_space<vmem>>, vector<16x32xf32>
    tpu.vector_store %arg7[%c0_16, %c0_17], %32 {strides = array<i32>} : memref<16x32xf32, #tpu.memory_space<vmem>>, vector<16x32xf32>,
    %34 = vector.extract_strided_slice %29 {offsets = [0, 64], sizes = [16, 32], strides = [1, 1]} : vector<16x96xf32> to vector<16x32xf32>
    %c0_18 = arith.constant 0 : index
    %c0_19 = arith.constant 0 : index
    %35 = vector.load %arg8[%c0_18, %c0_19] : memref<16x32xf32, #tpu.memory_space<vmem>>, vector<16x32xf32>
    tpu.vector_store %arg8[%c0_18, %c0_19], %34 {strides = array<i32>} : memref<16x32xf32, #tpu.memory_space<vmem>>, vector<16x32xf32>,
    return
  }
  func.func @transform_0(%arg0: i32) -> (i32, i32) {
    %c0_i32 = arith.constant 0 : i32
    %c0_i32_0 = arith.constant 0 : i32
    return %arg0, %c0_i32 : i32, i32
  }
  func.func @transform_1(%arg0: i32) -> (i32, i32) {
    %c0_i32 = arith.constant 0 : i32
    %c0_i32_0 = arith.constant 0 : i32
    %c0_i32_1 = arith.constant 0 : i32
    return %c0_i32, %c0_i32_0 : i32, i32
  }
  func.func @transform_2(%arg0: i32) -> (i32, i32) {
    %c0_i32 = arith.constant 0 : i32
    %c0_i32_0 = arith.constant 0 : i32
    %c0_i32_1 = arith.constant 0 : i32
    return %c0_i32, %c0_i32_0 : i32, i32
  }
  func.func @transform_3(%arg0: i32) -> (i32, i32) {
    %c0_i32 = arith.constant 0 : i32
    %c0_i32_0 = arith.constant 0 : i32
    %c0_i32_1 = arith.constant 0 : i32
    return %c0_i32, %c0_i32_0 : i32, i32
  }
  func.func @transform_4(%arg0: i32) -> (i32, i32) {
    %c0_i32 = arith.constant 0 : i32
    %c0_i32_0 = arith.constant 0 : i32
    %c0_i32_1 = arith.constant 0 : i32
    return %c0_i32, %c0_i32_0 : i32, i32
  }
  func.func @transform_5(%arg0: i32) -> (i32, i32) {
    %c0_i32 = arith.constant 0 : i32
    %c0_i32_0 = arith.constant 0 : i32
    return %arg0, %c0_i32 : i32, i32
  }
  func.func @transform_6(%arg0: i32) -> (i32, i32) {
    %c0_i32 = arith.constant 0 : i32
    %c0_i32_0 = arith.constant 0 : i32
    return %arg0, %c0_i32 : i32, i32
  }
  func.func @transform_7(%arg0: i32) -> (i32, i32) {
    %c0_i32 = arith.constant 0 : i32
    %c0_i32_0 = arith.constant 0 : i32
    return %arg0, %c0_i32 : i32, i32
  }
}

module attributes {stable_mosaic.version = 11 : i64} {
  func.func @ln_ffn_kernel(%arg0: i32, %arg1: i32, %arg2: memref<16x32xf32, #tpu.memory_space<vmem>>, %arg3: memref<1x32xf32, #tpu.memory_space<vmem>>, %arg4: memref<1x32xf32, #tpu.memory_space<vmem>>, %arg5: memref<32x128xf32, #tpu.memory_space<vmem>>, %arg6: memref<1x128xf32, #tpu.memory_space<vmem>>, %arg7: memref<128x32xf32, #tpu.memory_space<vmem>>, %arg8: memref<1x32xf32, #tpu.memory_space<vmem>>, %arg9: memref<16x32xf32, #tpu.memory_space<vmem>>, %arg10: memref<16x32xf32, #tpu.memory_space<vmem>>, %arg11: memref<16x32xf32, #tpu.memory_space<vmem>>) attributes {dimension_semantics = [#tpu.dimension_semantics<parallel>, #tpu.dimension_semantics<arbitrary>], iteration_bounds = array<i64: 1, 1>, scalar_prefetch = 0 : i64, scratch_operands = 2 : i64, tpu.core_type = #tpu.core_type<tc>, window_params = [{transform_indices = @transform_0, window_bounds = array<i64: 16, 32>}, {pipeline_mode = #tpu.pipeline_mode<synchronous>, transform_indices = @transform_1, window_bounds = array<i64: 1, 32>}, {pipeline_mode = #tpu.pipeline_mode<synchronous>, transform_indices = @transform_2, window_bounds = array<i64: 1, 32>}, {transform_indices = @transform_3, window_bounds = array<i64: 32, 128>}, {transform_indices = @transform_4, window_bounds = array<i64: 1, 128>}, {transform_indices = @transform_5, window_bounds = array<i64: 128, 32>}, {pipeline_mode = #tpu.pipeline_mode<synchronous>, transform_indices = @transform_6, window_bounds = array<i64: 1, 32>}, {transform_indices = @transform_7, window_bounds = array<i64: 16, 32>}]} {
    %c0_i32 = arith.constant 0 : i32
    %0 = arith.cmpi eq, %arg1, %c0_i32 : i32
    %1 = arith.extui %0 : i1 to i32
    %c0_i32_0 = arith.constant 0 : i32
    %2 = arith.cmpi ne, %1, %c0_i32_0 : i32
    scf.if %2 {
      %c0_19 = arith.constant 0 : index
      %c0_20 = arith.constant 0 : index
      %30 = vector.load %arg2[%c0_19, %c0_20] : memref<16x32xf32, #tpu.memory_space<vmem>>, vector<16x32xf32>
      %c0_21 = arith.constant 0 : index
      %c0_22 = arith.constant 0 : index
      %31 = vector.load %arg3[%c0_21, %c0_22] : memref<1x32xf32, #tpu.memory_space<vmem>>, vector<1x32xf32>
      %c0_23 = arith.constant 0 : index
      %c0_24 = arith.constant 0 : index
      %32 = vector.load %arg4[%c0_23, %c0_24] : memref<1x32xf32, #tpu.memory_space<vmem>>, vector<1x32xf32>
      %cst_25 = arith.constant dense<0.000000e+00> : vector<16xf32>
      %33 = vector.multi_reduction <add>, %30, %cst_25 [1] : vector<16x32xf32> to vector<16xf32>
      %34 = vector.shape_cast %33 : vector<16xf32> to vector<16x1xf32>
      %cst_26 = arith.constant 3.200000e+01 : f32
      %35 = vector.broadcast %cst_26 : f32 to vector<16x1xf32>
      %36 = arith.divf %34, %35 : vector<16x1xf32>
      %37 = vector.broadcast %36 : vector<16x1xf32> to vector<16x32xf32>
      %38 = arith.subf %30, %37 : vector<16x32xf32>
      %39 = arith.mulf %38, %38 : vector<16x32xf32>
      %cst_27 = arith.constant dense<0.000000e+00> : vector<16xf32>
      %40 = vector.multi_reduction <add>, %39, %cst_27 [1] : vector<16x32xf32> to vector<16xf32>
      %41 = vector.shape_cast %40 : vector<16xf32> to vector<16x1xf32>
      %cst_28 = arith.constant 3.200000e+01 : f32
      %42 = vector.broadcast %cst_28 : f32 to vector<16x1xf32>
      %43 = arith.divf %41, %42 : vector<16x1xf32>
      %44 = vector.broadcast %36 : vector<16x1xf32> to vector<16x32xf32>
      %45 = arith.subf %30, %44 : vector<16x32xf32>
      %cst_29 = arith.constant 9.99999974E-6 : f32
      %46 = vector.broadcast %cst_29 : f32 to vector<16x1xf32>
      %47 = arith.addf %43, %46 : vector<16x1xf32>
      %48 = math.rsqrt %47 : vector<16x1xf32>
      %49 = vector.broadcast %48 : vector<16x1xf32> to vector<16x32xf32>
      %50 = arith.mulf %45, %49 : vector<16x32xf32>
      %51 = vector.broadcast %31 : vector<1x32xf32> to vector<16x32xf32>
      %52 = arith.mulf %50, %51 : vector<16x32xf32>
      %53 = vector.broadcast %32 : vector<1x32xf32> to vector<16x32xf32>
      %54 = arith.addf %52, %53 : vector<16x32xf32>
      %c0_30 = arith.constant 0 : index
      %c0_31 = arith.constant 0 : index
      %55 = vector.load %arg10[%c0_30, %c0_31] : memref<16x32xf32, #tpu.memory_space<vmem>>, vector<16x32xf32>
      tpu.vector_store %arg10[%c0_30, %c0_31], %54 {strides = array<i32>} : memref<16x32xf32, #tpu.memory_space<vmem>>, vector<16x32xf32>,
      %cst_32 = arith.constant 0.000000e+00 : f32
      %56 = vector.broadcast %cst_32 : f32 to vector<16x32xf32>
      %c0_33 = arith.constant 0 : index
      %c0_34 = arith.constant 0 : index
      %57 = vector.load %arg11[%c0_33, %c0_34] : memref<16x32xf32, #tpu.memory_space<vmem>>, vector<16x32xf32>
      tpu.vector_store %arg11[%c0_33, %c0_34], %56 {strides = array<i32>} : memref<16x32xf32, #tpu.memory_space<vmem>>, vector<16x32xf32>,
    } else {
    }
    %c0 = arith.constant 0 : index
    %c0_1 = arith.constant 0 : index
    %3 = vector.load %arg10[%c0, %c0_1] : memref<16x32xf32, #tpu.memory_space<vmem>>, vector<16x32xf32>
    %c0_2 = arith.constant 0 : index
    %c0_3 = arith.constant 0 : index
    %4 = vector.load %arg5[%c0_2, %c0_3] : memref<32x128xf32, #tpu.memory_space<vmem>>, vector<32x128xf32>
    %cst = arith.constant dense<0.000000e+00> : vector<16x128xf32>
    %5 = tpu.matmul %3, %4, %cst {dimension_numbers = #tpu.dot_dimension_numbers<[1], [0], [0], [1], [0, 0, 1, 1], [], []>} : vector<16x32xf32>, vector<32x128xf32>, vector<16x128xf32> -> vector<16x128xf32>
    %c0_4 = arith.constant 0 : index
    %c0_5 = arith.constant 0 : index
    %6 = vector.load %arg6[%c0_4, %c0_5] : memref<1x128xf32, #tpu.memory_space<vmem>>, vector<1x128xf32>
    %7 = vector.broadcast %6 : vector<1x128xf32> to vector<16x128xf32>
    %8 = arith.addf %5, %7 : vector<16x128xf32>
    %cst_6 = arith.constant 5.000000e-01 : f32
    %9 = vector.broadcast %cst_6 : f32 to vector<16x128xf32>
    %10 = arith.mulf %9, %8 : vector<16x128xf32>
    %cst_7 = arith.constant 4.471500e-02 : f32
    %11 = vector.broadcast %cst_7 : f32 to vector<16x128xf32>
    %12 = arith.mulf %11, %8 : vector<16x128xf32>
    %13 = arith.mulf %12, %8 : vector<16x128xf32>
    %14 = arith.mulf %13, %8 : vector<16x128xf32>
    %15 = arith.addf %8, %14 : vector<16x128xf32>
    %cst_8 = arith.constant 0.797884583 : f32
    %16 = vector.broadcast %cst_8 : f32 to vector<16x128xf32>
    %17 = arith.mulf %16, %15 : vector<16x128xf32>
    %18 = math.tanh %17 : vector<16x128xf32>
    %cst_9 = arith.constant 1.000000e+00 : f32
    %19 = vector.broadcast %cst_9 : f32 to vector<16x128xf32>
    %20 = arith.addf %19, %18 : vector<16x128xf32>
    %21 = arith.mulf %10, %20 : vector<16x128xf32>
    %c0_10 = arith.constant 0 : index
    %c0_11 = arith.constant 0 : index
    %22 = vector.load %arg11[%c0_10, %c0_11] : memref<16x32xf32, #tpu.memory_space<vmem>>, vector<16x32xf32>
    %c0_12 = arith.constant 0 : index
    %c0_13 = arith.constant 0 : index
    %23 = vector.load %arg7[%c0_12, %c0_13] : memref<128x32xf32, #tpu.memory_space<vmem>>, vector<128x32xf32>
    %cst_14 = arith.constant dense<0.000000e+00> : vector<16x32xf32>
    %24 = tpu.matmul %21, %23, %cst_14 {dimension_numbers = #tpu.dot_dimension_numbers<[1], [0], [0], [1], [0, 0, 1, 1], [], []>} : vector<16x128xf32>, vector<128x32xf32>, vector<16x32xf32> -> vector<16x32xf32>
    %25 = arith.addf %22, %24 : vector<16x32xf32>
    %c0_15 = arith.constant 0 : index
    %c0_16 = arith.constant 0 : index
    %26 = vector.load %arg11[%c0_15, %c0_16] : memref<16x32xf32, #tpu.memory_space<vmem>>, vector<16x32xf32>
    tpu.vector_store %arg11[%c0_15, %c0_16], %25 {strides = array<i32>} : memref<16x32xf32, #tpu.memory_space<vmem>>, vector<16x32xf32>,
    %c0_i32_17 = arith.constant 0 : i32
    %27 = arith.cmpi eq, %arg1, %c0_i32_17 : i32
    %28 = arith.extui %27 : i1 to i32
    %c0_i32_18 = arith.constant 0 : i32
    %29 = arith.cmpi ne, %28, %c0_i32_18 : i32
    scf.if %29 {
      %c0_19 = arith.constant 0 : index
      %c0_20 = arith.constant 0 : index
      %30 = vector.load %arg2[%c0_19, %c0_20] : memref<16x32xf32, #tpu.memory_space<vmem>>, vector<16x32xf32>
      %c0_21 = arith.constant 0 : index
      %c0_22 = arith.constant 0 : index
      %31 = vector.load %arg11[%c0_21, %c0_22] : memref<16x32xf32, #tpu.memory_space<vmem>>, vector<16x32xf32>
      %32 = arith.addf %30, %31 : vector<16x32xf32>
      %c0_23 = arith.constant 0 : index
      %c0_24 = arith.constant 0 : index
      %33 = vector.load %arg8[%c0_23, %c0_24] : memref<1x32xf32, #tpu.memory_space<vmem>>, vector<1x32xf32>
      %34 = vector.broadcast %33 : vector<1x32xf32> to vector<16x32xf32>
      %35 = arith.addf %32, %34 : vector<16x32xf32>
      %c0_25 = arith.constant 0 : index
      %c0_26 = arith.constant 0 : index
      %36 = vector.load %arg9[%c0_25, %c0_26] : memref<16x32xf32, #tpu.memory_space<vmem>>, vector<16x32xf32>
      tpu.vector_store %arg9[%c0_25, %c0_26], %35 {strides = array<i32>} : memref<16x32xf32, #tpu.memory_space<vmem>>, vector<16x32xf32>,
    } else {
    }
    return
  }
  func.func @transform_0(%arg0: i32, %arg1: i32) -> (i32, i32) {
    %c0_i32 = arith.constant 0 : i32
    %c0_i32_0 = arith.constant 0 : i32
    return %arg0, %c0_i32 : i32, i32
  }
  func.func @transform_1(%arg0: i32, %arg1: i32) -> (i32, i32) {
    %c0_i32 = arith.constant 0 : i32
    %c0_i32_0 = arith.constant 0 : i32
    %c0_i32_1 = arith.constant 0 : i32
    return %c0_i32, %c0_i32_0 : i32, i32
  }
  func.func @transform_2(%arg0: i32, %arg1: i32) -> (i32, i32) {
    %c0_i32 = arith.constant 0 : i32
    %c0_i32_0 = arith.constant 0 : i32
    %c0_i32_1 = arith.constant 0 : i32
    return %c0_i32, %c0_i32_0 : i32, i32
  }
  func.func @transform_3(%arg0: i32, %arg1: i32) -> (i32, i32) {
    %c0_i32 = arith.constant 0 : i32
    %c0_i32_0 = arith.constant 0 : i32
    return %c0_i32, %arg1 : i32, i32
  }
  func.func @transform_4(%arg0: i32, %arg1: i32) -> (i32, i32) {
    %c0_i32 = arith.constant 0 : i32
    %c0_i32_0 = arith.constant 0 : i32
    return %c0_i32, %arg1 : i32, i32
  }
  func.func @transform_5(%arg0: i32, %arg1: i32) -> (i32, i32) {
    %c0_i32 = arith.constant 0 : i32
    %c0_i32_0 = arith.constant 0 : i32
    return %arg1, %c0_i32 : i32, i32
  }
  func.func @transform_6(%arg0: i32, %arg1: i32) -> (i32, i32) {
    %c0_i32 = arith.constant 0 : i32
    %c0_i32_0 = arith.constant 0 : i32
    %c0_i32_1 = arith.constant 0 : i32
    return %c0_i32, %c0_i32_0 : i32, i32
  }
  func.func @transform_7(%arg0: i32, %arg1: i32) -> (i32, i32) {
    %c0_i32 = arith.constant 0 : i32
    %c0_i32_0 = arith.constant 0 : i32
    return %arg0, %c0_i32 : i32, i32
  }
}

module attributes {stable_mosaic.version = 11 : i64} {
  func.func @attn_kernel(%arg0: i32, %arg1: i32, %arg2: i32, %arg3: memref<1x8x8xi32, #tpu.memory_space<vmem>>, %arg4: memref<1x8x32xf32, #tpu.memory_space<vmem>>, %arg5: memref<1x8x32xf32, #tpu.memory_space<vmem>>, %arg6: memref<1x8x32xf32, #tpu.memory_space<vmem>>, %arg7: memref<32x32xf32, #tpu.memory_space<vmem>>, %arg8: memref<1x32xf32, #tpu.memory_space<vmem>>, %arg9: memref<1x8x32xf32, #tpu.memory_space<vmem>>, %arg10: memref<1x8x32xf32, #tpu.memory_space<vmem>>, %arg11: memref<4x8x1xf32, #tpu.memory_space<vmem>>, %arg12: memref<4x8x1xf32, #tpu.memory_space<vmem>>, %arg13: memref<4x8x8xf32, #tpu.memory_space<vmem>>, %arg14: memref<8x32xf32, #tpu.memory_space<vmem>>) attributes {dimension_semantics = [#tpu.dimension_semantics<parallel>, #tpu.dimension_semantics<parallel>, #tpu.dimension_semantics<arbitrary>], iteration_bounds = array<i64: 2, 1, 1>, scalar_prefetch = 0 : i64, scratch_operands = 4 : i64, tpu.core_type = #tpu.core_type<tc>, window_params = [{transform_indices = @transform_0, window_bounds = array<i64: 1, 8, 8>}, {transform_indices = @transform_1, window_bounds = array<i64: 1, 8, 32>}, {transform_indices = @transform_2, window_bounds = array<i64: 1, 8, 32>}, {transform_indices = @transform_3, window_bounds = array<i64: 1, 8, 32>}, {pipeline_mode = #tpu.pipeline_mode<synchronous>, transform_indices = @transform_4, window_bounds = array<i64: 32, 32>}, {pipeline_mode = #tpu.pipeline_mode<synchronous>, transform_indices = @transform_5, window_bounds = array<i64: 1, 32>}, {transform_indices = @transform_6, window_bounds = array<i64: 1, 8, 32>}, {transform_indices = @transform_7, window_bounds = array<i64: 1, 8, 32>}]} {
    %c0_i32 = arith.constant 0 : i32
    %0 = arith.cmpi eq, %arg2, %c0_i32 : i32
    %1 = arith.extui %0 : i1 to i32
    %c0_i32_0 = arith.constant 0 : i32
    %2 = arith.cmpi ne, %1, %c0_i32_0 : i32
    scf.if %2 {
      %cst_107 = arith.constant 0xFF800000 : f32
      %172 = vector.broadcast %cst_107 : f32 to vector<4x8x1xf32>
      %c0_108 = arith.constant 0 : index
      %c0_109 = arith.constant 0 : index
      %c0_110 = arith.constant 0 : index
      %173 = vector.load %arg11[%c0_108, %c0_109, %c0_110] : memref<4x8x1xf32, #tpu.memory_space<vmem>>, vector<4x8x1xf32>
      tpu.vector_store %arg11[%c0_108, %c0_109, %c0_110], %172 {strides = array<i32>} : memref<4x8x1xf32, #tpu.memory_space<vmem>>, vector<4x8x1xf32>,
      %cst_111 = arith.constant 0.000000e+00 : f32
      %174 = vector.broadcast %cst_111 : f32 to vector<4x8x1xf32>
      %c0_112 = arith.constant 0 : index
      %c0_113 = arith.constant 0 : index
      %c0_114 = arith.constant 0 : index
      %175 = vector.load %arg12[%c0_112, %c0_113, %c0_114] : memref<4x8x1xf32, #tpu.memory_space<vmem>>, vector<4x8x1xf32>
      tpu.vector_store %arg12[%c0_112, %c0_113, %c0_114], %174 {strides = array<i32>} : memref<4x8x1xf32, #tpu.memory_space<vmem>>, vector<4x8x1xf32>,
      %cst_115 = arith.constant 0.000000e+00 : f32
      %176 = vector.broadcast %cst_115 : f32 to vector<4x8x8xf32>
      %c0_116 = arith.constant 0 : index
      %c0_117 = arith.constant 0 : index
      %c0_118 = arith.constant 0 : index
      %177 = vector.load %arg13[%c0_116, %c0_117, %c0_118] : memref<4x8x8xf32, #tpu.memory_space<vmem>>, vector<4x8x8xf32>
      tpu.vector_store %arg13[%c0_116, %c0_117, %c0_118], %176 {strides = array<i32>} : memref<4x8x8xf32, #tpu.memory_space<vmem>>, vector<4x8x8xf32>,
    } else {
    }
    %c0 = arith.constant 0 : index
    %c0_1 = arith.constant 0 : index
    %c0_2 = arith.constant 0 : index
    %3 = vector.load %arg4[%c0, %c0_1, %c0_2] : memref<1x8x32xf32, #tpu.memory_space<vmem>>, vector<1x8x32xf32>
    %4 = vector.shape_cast %3 : vector<1x8x32xf32> to vector<8x32xf32>
    %c0_3 = arith.constant 0 : index
    %c0_4 = arith.constant 0 : index
    %c0_5 = arith.constant 0 : index
    %5 = vector.load %arg5[%c0_3, %c0_4, %c0_5] : memref<1x8x32xf32, #tpu.memory_space<vmem>>, vector<1x8x32xf32>
    %6 = vector.shape_cast %5 : vector<1x8x32xf32> to vector<8x32xf32>
    %c0_6 = arith.constant 0 : index
    %c0_7 = arith.constant 0 : index
    %c0_8 = arith.constant 0 : index
    %7 = vector.load %arg6[%c0_6, %c0_7, %c0_8] : memref<1x8x32xf32, #tpu.memory_space<vmem>>, vector<1x8x32xf32>
    %8 = vector.shape_cast %7 : vector<1x8x32xf32> to vector<8x32xf32>
    %c0_9 = arith.constant 0 : index
    %c0_10 = arith.constant 0 : index
    %c0_11 = arith.constant 0 : index
    %9 = vector.load %arg3[%c0_9, %c0_10, %c0_11] : memref<1x8x8xi32, #tpu.memory_space<vmem>>, vector<1x8x8xi32>
    %10 = vector.shape_cast %9 : vector<1x8x8xi32> to vector<8x8xi32>
    %c0_i32_12 = arith.constant 0 : i32
    %11 = vector.broadcast %c0_i32_12 : i32 to vector<8x8xi32>
    %12 = arith.cmpi eq, %10, %11 : vector<8x8xi32>
    %13 = vector.extract_strided_slice %4 {offsets = [0, 0], sizes = [8, 8], strides = [1, 1]} : vector<8x32xf32> to vector<8x8xf32>
    %cst = arith.constant 0.353553385 : f32
    %14 = vector.broadcast %cst : f32 to vector<8x8xf32>
    %15 = arith.mulf %13, %14 : vector<8x8xf32>
    %16 = vector.extract_strided_slice %6 {offsets = [0, 0], sizes = [8, 8], strides = [1, 1]} : vector<8x32xf32> to vector<8x8xf32>
    %cst_13 = arith.constant dense<0.000000e+00> : vector<8x8xf32>
    %17 = tpu.matmul %15, %16, %cst_13 {dimension_numbers = #tpu.dot_dimension_numbers<[1], [1], [0], [0], [0, 0, 1, 0], [], []>} : vector<8x8xf32>, vector<8x8xf32>, vector<8x8xf32> -> vector<8x8xf32>
    %cst_14 = arith.constant -1.000000e+09 : f32
    %18 = vector.broadcast %cst_14 : f32 to vector<8x8xf32>
    %19 = arith.select %12, %18, %17 : vector<8x8xi1>, vector<8x8xf32>
    %c0_15 = arith.constant 0 : index
    %c0_16 = arith.constant 0 : index
    %c0_17 = arith.constant 0 : index
    %20 = vector.load %arg11[%c0_15, %c0_16, %c0_17] : memref<4x8x1xf32, #tpu.memory_space<vmem>>, vector<1x8x1xf32>
    %21 = vector.shape_cast %20 : vector<1x8x1xf32> to vector<8x1xf32>
    %cst_18 = arith.constant dense<0xFF800000> : vector<8xf32>
    %22 = vector.multi_reduction <maximumf>, %19, %cst_18 [1] : vector<8x8xf32> to vector<8xf32>
    %23 = vector.shape_cast %22 : vector<8xf32> to vector<8x1xf32>
    %24 = arith.maximumf %21, %23 : vector<8x1xf32>
    %25 = arith.subf %21, %24 : vector<8x1xf32>
    %26 = math.exp %25 : vector<8x1xf32>
    %27 = vector.broadcast %24 : vector<8x1xf32> to vector<8x8xf32>
    %28 = arith.subf %19, %27 : vector<8x8xf32>
    %29 = math.exp %28 : vector<8x8xf32>
    %c0_19 = arith.constant 0 : index
    %c0_20 = arith.constant 0 : index
    %c0_21 = arith.constant 0 : index
    %30 = vector.load %arg12[%c0_19, %c0_20, %c0_21] : memref<4x8x1xf32, #tpu.memory_space<vmem>>, vector<1x8x1xf32>
    %31 = vector.shape_cast %30 : vector<1x8x1xf32> to vector<8x1xf32>
    %32 = arith.mulf %26, %31 : vector<8x1xf32>
    %cst_22 = arith.constant dense<0.000000e+00> : vector<8xf32>
    %33 = vector.multi_reduction <add>, %29, %cst_22 [1] : vector<8x8xf32> to vector<8xf32>
    %34 = vector.shape_cast %33 : vector<8xf32> to vector<8x1xf32>
    %35 = arith.addf %32, %34 : vector<8x1xf32>
    %c0_23 = arith.constant 0 : index
    %c0_24 = arith.constant 0 : index
    %c0_25 = arith.constant 0 : index
    %36 = vector.load %arg12[%c0_23, %c0_24, %c0_25] : memref<4x8x1xf32, #tpu.memory_space<vmem>>, vector<1x8x1xf32>
    %37 = vector.shape_cast %36 : vector<1x8x1xf32> to vector<8x1xf32>
    %38 = vector.shape_cast %35 : vector<8x1xf32> to vector<1x8x1xf32>
    tpu.vector_store %arg12[%c0_23, %c0_24, %c0_25], %38 {strides = array<i32>} : memref<4x8x1xf32, #tpu.memory_space<vmem>>, vector<1x8x1xf32>,
    %c0_26 = arith.constant 0 : index
    %c0_27 = arith.constant 0 : index
    %c0_28 = arith.constant 0 : index
    %39 = vector.load %arg13[%c0_26, %c0_27, %c0_28] : memref<4x8x8xf32, #tpu.memory_space<vmem>>, vector<1x8x8xf32>
    %40 = vector.shape_cast %39 : vector<1x8x8xf32> to vector<8x8xf32>
    %41 = vector.broadcast %26 : vector<8x1xf32> to vector<8x8xf32>
    %42 = arith.mulf %41, %40 : vector<8x8xf32>
    %43 = vector.extract_strided_slice %8 {offsets = [0, 0], sizes = [8, 8], strides = [1, 1]} : vector<8x32xf32> to vector<8x8xf32>
    %cst_29 = arith.constant dense<0.000000e+00> : vector<8x8xf32>
    %44 = tpu.matmul %29, %43, %cst_29 {dimension_numbers = #tpu.dot_dimension_numbers<[1], [0], [0], [1], [0, 0, 1, 1], [], []>} : vector<8x8xf32>, vector<8x8xf32>, vector<8x8xf32> -> vector<8x8xf32>
    %45 = arith.addf %42, %44 : vector<8x8xf32>
    %c0_30 = arith.constant 0 : index
    %c0_31 = arith.constant 0 : index
    %c0_32 = arith.constant 0 : index
    %46 = vector.load %arg13[%c0_30, %c0_31, %c0_32] : memref<4x8x8xf32, #tpu.memory_space<vmem>>, vector<1x8x8xf32>
    %47 = vector.shape_cast %46 : vector<1x8x8xf32> to vector<8x8xf32>
    %48 = vector.shape_cast %45 : vector<8x8xf32> to vector<1x8x8xf32>
    tpu.vector_store %arg13[%c0_30, %c0_31, %c0_32], %48 {strides = array<i32>} : memref<4x8x8xf32, #tpu.memory_space<vmem>>, vector<1x8x8xf32>,
    %c0_33 = arith.constant 0 : index
    %c0_34 = arith.constant 0 : index
    %c0_35 = arith.constant 0 : index
    %49 = vector.load %arg11[%c0_33, %c0_34, %c0_35] : memref<4x8x1xf32, #tpu.memory_space<vmem>>, vector<1x8x1xf32>
    %50 = vector.shape_cast %49 : vector<1x8x1xf32> to vector<8x1xf32>
    %51 = vector.shape_cast %24 : vector<8x1xf32> to vector<1x8x1xf32>
    tpu.vector_store %arg11[%c0_33, %c0_34, %c0_35], %51 {strides = array<i32>} : memref<4x8x1xf32, #tpu.memory_space<vmem>>, vector<1x8x1xf32>,
    %52 = vector.extract_strided_slice %4 {offsets = [0, 8], sizes = [8, 8], strides = [1, 1]} : vector<8x32xf32> to vector<8x8xf32>
    %cst_36 = arith.constant 0.353553385 : f32
    %53 = vector.broadcast %cst_36 : f32 to vector<8x8xf32>
    %54 = arith.mulf %52, %53 : vector<8x8xf32>
    %55 = vector.extract_strided_slice %6 {offsets = [0, 8], sizes = [8, 8], strides = [1, 1]} : vector<8x32xf32> to vector<8x8xf32>
    %cst_37 = arith.constant dense<0.000000e+00> : vector<8x8xf32>
    %56 = tpu.matmul %54, %55, %cst_37 {dimension_numbers = #tpu.dot_dimension_numbers<[1], [1], [0], [0], [0, 0, 1, 0], [], []>} : vector<8x8xf32>, vector<8x8xf32>, vector<8x8xf32> -> vector<8x8xf32>
    %cst_38 = arith.constant -1.000000e+09 : f32
    %57 = vector.broadcast %cst_38 : f32 to vector<8x8xf32>
    %58 = arith.select %12, %57, %56 : vector<8x8xi1>, vector<8x8xf32>
    %c1 = arith.constant 1 : index
    %c0_39 = arith.constant 0 : index
    %c0_40 = arith.constant 0 : index
    %59 = vector.load %arg11[%c1, %c0_39, %c0_40] : memref<4x8x1xf32, #tpu.memory_space<vmem>>, vector<1x8x1xf32>
    %60 = vector.shape_cast %59 : vector<1x8x1xf32> to vector<8x1xf32>
    %cst_41 = arith.constant dense<0xFF800000> : vector<8xf32>
    %61 = vector.multi_reduction <maximumf>, %58, %cst_41 [1] : vector<8x8xf32> to vector<8xf32>
    %62 = vector.shape_cast %61 : vector<8xf32> to vector<8x1xf32>
    %63 = arith.maximumf %60, %62 : vector<8x1xf32>
    %64 = arith.subf %60, %63 : vector<8x1xf32>
    %65 = math.exp %64 : vector<8x1xf32>
    %66 = vector.broadcast %63 : vector<8x1xf32> to vector<8x8xf32>
    %67 = arith.subf %58, %66 : vector<8x8xf32>
    %68 = math.exp %67 : vector<8x8xf32>
    %c1_42 = arith.constant 1 : index
    %c0_43 = arith.constant 0 : index
    %c0_44 = arith.constant 0 : index
    %69 = vector.load %arg12[%c1_42, %c0_43, %c0_44] : memref<4x8x1xf32, #tpu.memory_space<vmem>>, vector<1x8x1xf32>
    %70 = vector.shape_cast %69 : vector<1x8x1xf32> to vector<8x1xf32>
    %71 = arith.mulf %65, %70 : vector<8x1xf32>
    %cst_45 = arith.constant dense<0.000000e+00> : vector<8xf32>
    %72 = vector.multi_reduction <add>, %68, %cst_45 [1] : vector<8x8xf32> to vector<8xf32>
    %73 = vector.shape_cast %72 : vector<8xf32> to vector<8x1xf32>
    %74 = arith.addf %71, %73 : vector<8x1xf32>
    %c1_46 = arith.constant 1 : index
    %c0_47 = arith.constant 0 : index
    %c0_48 = arith.constant 0 : index
    %75 = vector.load %arg12[%c1_46, %c0_47, %c0_48] : memref<4x8x1xf32, #tpu.memory_space<vmem>>, vector<1x8x1xf32>
    %76 = vector.shape_cast %75 : vector<1x8x1xf32> to vector<8x1xf32>
    %77 = vector.shape_cast %74 : vector<8x1xf32> to vector<1x8x1xf32>
    tpu.vector_store %arg12[%c1_46, %c0_47, %c0_48], %77 {strides = array<i32>} : memref<4x8x1xf32, #tpu.memory_space<vmem>>, vector<1x8x1xf32>,
    %c1_49 = arith.constant 1 : index
    %c0_50 = arith.constant 0 : index
    %c0_51 = arith.constant 0 : index
    %78 = vector.load %arg13[%c1_49, %c0_50, %c0_51] : memref<4x8x8xf32, #tpu.memory_space<vmem>>, vector<1x8x8xf32>
    %79 = vector.shape_cast %78 : vector<1x8x8xf32> to vector<8x8xf32>
    %80 = vector.broadcast %65 : vector<8x1xf32> to vector<8x8xf32>
    %81 = arith.mulf %80, %79 : vector<8x8xf32>
    %82 = vector.extract_strided_slice %8 {offsets = [0, 8], sizes = [8, 8], strides = [1, 1]} : vector<8x32xf32> to vector<8x8xf32>
    %cst_52 = arith.constant dense<0.000000e+00> : vector<8x8xf32>
    %83 = tpu.matmul %68, %82, %cst_52 {dimension_numbers = #tpu.dot_dimension_numbers<[1], [0], [0], [1], [0, 0, 1, 1], [], []>} : vector<8x8xf32>, vector<8x8xf32>, vector<8x8xf32> -> vector<8x8xf32>
    %84 = arith.addf %81, %83 : vector<8x8xf32>
    %c1_53 = arith.constant 1 : index
    %c0_54 = arith.constant 0 : index
    %c0_55 = arith.constant 0 : index
    %85 = vector.load %arg13[%c1_53, %c0_54, %c0_55] : memref<4x8x8xf32, #tpu.memory_space<vmem>>, vector<1x8x8xf32>
    %86 = vector.shape_cast %85 : vector<1x8x8xf32> to vector<8x8xf32>
    %87 = vector.shape_cast %84 : vector<8x8xf32> to vector<1x8x8xf32>
    tpu.vector_store %arg13[%c1_53, %c0_54, %c0_55], %87 {strides = array<i32>} : memref<4x8x8xf32, #tpu.memory_space<vmem>>, vector<1x8x8xf32>,
    %c1_56 = arith.constant 1 : index
    %c0_57 = arith.constant 0 : index
    %c0_58 = arith.constant 0 : index
    %88 = vector.load %arg11[%c1_56, %c0_57, %c0_58] : memref<4x8x1xf32, #tpu.memory_space<vmem>>, vector<1x8x1xf32>
    %89 = vector.shape_cast %88 : vector<1x8x1xf32> to vector<8x1xf32>
    %90 = vector.shape_cast %63 : vector<8x1xf32> to vector<1x8x1xf32>
    tpu.vector_store %arg11[%c1_56, %c0_57, %c0_58], %90 {strides = array<i32>} : memref<4x8x1xf32, #tpu.memory_space<vmem>>, vector<1x8x1xf32>,
    %91 = vector.extract_strided_slice %4 {offsets = [0, 16], sizes = [8, 8], strides = [1, 1]} : vector<8x32xf32> to vector<8x8xf32>
    %cst_59 = arith.constant 0.353553385 : f32
    %92 = vector.broadcast %cst_59 : f32 to vector<8x8xf32>
    %93 = arith.mulf %91, %92 : vector<8x8xf32>
    %94 = vector.extract_strided_slice %6 {offsets = [0, 16], sizes = [8, 8], strides = [1, 1]} : vector<8x32xf32> to vector<8x8xf32>
    %cst_60 = arith.constant dense<0.000000e+00> : vector<8x8xf32>
    %95 = tpu.matmul %93, %94, %cst_60 {dimension_numbers = #tpu.dot_dimension_numbers<[1], [1], [0], [0], [0, 0, 1, 0], [], []>} : vector<8x8xf32>, vector<8x8xf32>, vector<8x8xf32> -> vector<8x8xf32>
    %cst_61 = arith.constant -1.000000e+09 : f32
    %96 = vector.broadcast %cst_61 : f32 to vector<8x8xf32>
    %97 = arith.select %12, %96, %95 : vector<8x8xi1>, vector<8x8xf32>
    %c2 = arith.constant 2 : index
    %c0_62 = arith.constant 0 : index
    %c0_63 = arith.constant 0 : index
    %98 = vector.load %arg11[%c2, %c0_62, %c0_63] : memref<4x8x1xf32, #tpu.memory_space<vmem>>, vector<1x8x1xf32>
    %99 = vector.shape_cast %98 : vector<1x8x1xf32> to vector<8x1xf32>
    %cst_64 = arith.constant dense<0xFF800000> : vector<8xf32>
    %100 = vector.multi_reduction <maximumf>, %97, %cst_64 [1] : vector<8x8xf32> to vector<8xf32>
    %101 = vector.shape_cast %100 : vector<8xf32> to vector<8x1xf32>
    %102 = arith.maximumf %99, %101 : vector<8x1xf32>
    %103 = arith.subf %99, %102 : vector<8x1xf32>
    %104 = math.exp %103 : vector<8x1xf32>
    %105 = vector.broadcast %102 : vector<8x1xf32> to vector<8x8xf32>
    %106 = arith.subf %97, %105 : vector<8x8xf32>
    %107 = math.exp %106 : vector<8x8xf32>
    %c2_65 = arith.constant 2 : index
    %c0_66 = arith.constant 0 : index
    %c0_67 = arith.constant 0 : index
    %108 = vector.load %arg12[%c2_65, %c0_66, %c0_67] : memref<4x8x1xf32, #tpu.memory_space<vmem>>, vector<1x8x1xf32>
    %109 = vector.shape_cast %108 : vector<1x8x1xf32> to vector<8x1xf32>
    %110 = arith.mulf %104, %109 : vector<8x1xf32>
    %cst_68 = arith.constant dense<0.000000e+00> : vector<8xf32>
    %111 = vector.multi_reduction <add>, %107, %cst_68 [1] : vector<8x8xf32> to vector<8xf32>
    %112 = vector.shape_cast %111 : vector<8xf32> to vector<8x1xf32>
    %113 = arith.addf %110, %112 : vector<8x1xf32>
    %c2_69 = arith.constant 2 : index
    %c0_70 = arith.constant 0 : index
    %c0_71 = arith.constant 0 : index
    %114 = vector.load %arg12[%c2_69, %c0_70, %c0_71] : memref<4x8x1xf32, #tpu.memory_space<vmem>>, vector<1x8x1xf32>
    %115 = vector.shape_cast %114 : vector<1x8x1xf32> to vector<8x1xf32>
    %116 = vector.shape_cast %113 : vector<8x1xf32> to vector<1x8x1xf32>
    tpu.vector_store %arg12[%c2_69, %c0_70, %c0_71], %116 {strides = array<i32>} : memref<4x8x1xf32, #tpu.memory_space<vmem>>, vector<1x8x1xf32>,
    %c2_72 = arith.constant 2 : index
    %c0_73 = arith.constant 0 : index
    %c0_74 = arith.constant 0 : index
    %117 = vector.load %arg13[%c2_72, %c0_73, %c0_74] : memref<4x8x8xf32, #tpu.memory_space<vmem>>, vector<1x8x8xf32>
    %118 = vector.shape_cast %117 : vector<1x8x8xf32> to vector<8x8xf32>
    %119 = vector.broadcast %104 : vector<8x1xf32> to vector<8x8xf32>
    %120 = arith.mulf %119, %118 : vector<8x8xf32>
    %121 = vector.extract_strided_slice %8 {offsets = [0, 16], sizes = [8, 8], strides = [1, 1]} : vector<8x32xf32> to vector<8x8xf32>
    %cst_75 = arith.constant dense<0.000000e+00> : vector<8x8xf32>
    %122 = tpu.matmul %107, %121, %cst_75 {dimension_numbers = #tpu.dot_dimension_numbers<[1], [0], [0], [1], [0, 0, 1, 1], [], []>} : vector<8x8xf32>, vector<8x8xf32>, vector<8x8xf32> -> vector<8x8xf32>
    %123 = arith.addf %120, %122 : vector<8x8xf32>
    %c2_76 = arith.constant 2 : index
    %c0_77 = arith.constant 0 : index
    %c0_78 = arith.constant 0 : index
    %124 = vector.load %arg13[%c2_76, %c0_77, %c0_78] : memref<4x8x8xf32, #tpu.memory_space<vmem>>, vector<1x8x8xf32>
    %125 = vector.shape_cast %124 : vector<1x8x8xf32> to vector<8x8xf32>
    %126 = vector.shape_cast %123 : vector<8x8xf32> to vector<1x8x8xf32>
    tpu.vector_store %arg13[%c2_76, %c0_77, %c0_78], %126 {strides = array<i32>} : memref<4x8x8xf32, #tpu.memory_space<vmem>>, vector<1x8x8xf32>,
    %c2_79 = arith.constant 2 : index
    %c0_80 = arith.constant 0 : index
    %c0_81 = arith.constant 0 : index
    %127 = vector.load %arg11[%c2_79, %c0_80, %c0_81] : memref<4x8x1xf32, #tpu.memory_space<vmem>>, vector<1x8x1xf32>
    %128 = vector.shape_cast %127 : vector<1x8x1xf32> to vector<8x1xf32>
    %129 = vector.shape_cast %102 : vector<8x1xf32> to vector<1x8x1xf32>
    tpu.vector_store %arg11[%c2_79, %c0_80, %c0_81], %129 {strides = array<i32>} : memref<4x8x1xf32, #tpu.memory_space<vmem>>, vector<1x8x1xf32>,
    %130 = vector.extract_strided_slice %4 {offsets = [0, 24], sizes = [8, 8], strides = [1, 1]} : vector<8x32xf32> to vector<8x8xf32>
    %cst_82 = arith.constant 0.353553385 : f32
    %131 = vector.broadcast %cst_82 : f32 to vector<8x8xf32>
    %132 = arith.mulf %130, %131 : vector<8x8xf32>
    %133 = vector.extract_strided_slice %6 {offsets = [0, 24], sizes = [8, 8], strides = [1, 1]} : vector<8x32xf32> to vector<8x8xf32>
    %cst_83 = arith.constant dense<0.000000e+00> : vector<8x8xf32>
    %134 = tpu.matmul %132, %133, %cst_83 {dimension_numbers = #tpu.dot_dimension_numbers<[1], [1], [0], [0], [0, 0, 1, 0], [], []>} : vector<8x8xf32>, vector<8x8xf32>, vector<8x8xf32> -> vector<8x8xf32>
    %cst_84 = arith.constant -1.000000e+09 : f32
    %135 = vector.broadcast %cst_84 : f32 to vector<8x8xf32>
    %136 = arith.select %12, %135, %134 : vector<8x8xi1>, vector<8x8xf32>
    %c3 = arith.constant 3 : index
    %c0_85 = arith.constant 0 : index
    %c0_86 = arith.constant 0 : index
    %137 = vector.load %arg11[%c3, %c0_85, %c0_86] : memref<4x8x1xf32, #tpu.memory_space<vmem>>, vector<1x8x1xf32>
    %138 = vector.shape_cast %137 : vector<1x8x1xf32> to vector<8x1xf32>
    %cst_87 = arith.constant dense<0xFF800000> : vector<8xf32>
    %139 = vector.multi_reduction <maximumf>, %136, %cst_87 [1] : vector<8x8xf32> to vector<8xf32>
    %140 = vector.shape_cast %139 : vector<8xf32> to vector<8x1xf32>
    %141 = arith.maximumf %138, %140 : vector<8x1xf32>
    %142 = arith.subf %138, %141 : vector<8x1xf32>
    %143 = math.exp %142 : vector<8x1xf32>
    %144 = vector.broadcast %141 : vector<8x1xf32> to vector<8x8xf32>
    %145 = arith.subf %136, %144 : vector<8x8xf32>
    %146 = math.exp %145 : vector<8x8xf32>
    %c3_88 = arith.constant 3 : index
    %c0_89 = arith.constant 0 : index
    %c0_90 = arith.constant 0 : index
    %147 = vector.load %arg12[%c3_88, %c0_89, %c0_90] : memref<4x8x1xf32, #tpu.memory_space<vmem>>, vector<1x8x1xf32>
    %148 = vector.shape_cast %147 : vector<1x8x1xf32> to vector<8x1xf32>
    %149 = arith.mulf %143, %148 : vector<8x1xf32>
    %cst_91 = arith.constant dense<0.000000e+00> : vector<8xf32>
    %150 = vector.multi_reduction <add>, %146, %cst_91 [1] : vector<8x8xf32> to vector<8xf32>
    %151 = vector.shape_cast %150 : vector<8xf32> to vector<8x1xf32>
    %152 = arith.addf %149, %151 : vector<8x1xf32>
    %c3_92 = arith.constant 3 : index
    %c0_93 = arith.constant 0 : index
    %c0_94 = arith.constant 0 : index
    %153 = vector.load %arg12[%c3_92, %c0_93, %c0_94] : memref<4x8x1xf32, #tpu.memory_space<vmem>>, vector<1x8x1xf32>
    %154 = vector.shape_cast %153 : vector<1x8x1xf32> to vector<8x1xf32>
    %155 = vector.shape_cast %152 : vector<8x1xf32> to vector<1x8x1xf32>
    tpu.vector_store %arg12[%c3_92, %c0_93, %c0_94], %155 {strides = array<i32>} : memref<4x8x1xf32, #tpu.memory_space<vmem>>, vector<1x8x1xf32>,
    %c3_95 = arith.constant 3 : index
    %c0_96 = arith.constant 0 : index
    %c0_97 = arith.constant 0 : index
    %156 = vector.load %arg13[%c3_95, %c0_96, %c0_97] : memref<4x8x8xf32, #tpu.memory_space<vmem>>, vector<1x8x8xf32>
    %157 = vector.shape_cast %156 : vector<1x8x8xf32> to vector<8x8xf32>
    %158 = vector.broadcast %143 : vector<8x1xf32> to vector<8x8xf32>
    %159 = arith.mulf %158, %157 : vector<8x8xf32>
    %160 = vector.extract_strided_slice %8 {offsets = [0, 24], sizes = [8, 8], strides = [1, 1]} : vector<8x32xf32> to vector<8x8xf32>
    %cst_98 = arith.constant dense<0.000000e+00> : vector<8x8xf32>
    %161 = tpu.matmul %146, %160, %cst_98 {dimension_numbers = #tpu.dot_dimension_numbers<[1], [0], [0], [1], [0, 0, 1, 1], [], []>} : vector<8x8xf32>, vector<8x8xf32>, vector<8x8xf32> -> vector<8x8xf32>
    %162 = arith.addf %159, %161 : vector<8x8xf32>
    %c3_99 = arith.constant 3 : index
    %c0_100 = arith.constant 0 : index
    %c0_101 = arith.constant 0 : index
    %163 = vector.load %arg13[%c3_99, %c0_100, %c0_101] : memref<4x8x8xf32, #tpu.memory_space<vmem>>, vector<1x8x8xf32>
    %164 = vector.shape_cast %163 : vector<1x8x8xf32> to vector<8x8xf32>
    %165 = vector.shape_cast %162 : vector<8x8xf32> to vector<1x8x8xf32>
    tpu.vector_store %arg13[%c3_99, %c0_100, %c0_101], %165 {strides = array<i32>} : memref<4x8x8xf32, #tpu.memory_space<vmem>>, vector<1x8x8xf32>,
    %c3_102 = arith.constant 3 : index
    %c0_103 = arith.constant 0 : index
    %c0_104 = arith.constant 0 : index
    %166 = vector.load %arg11[%c3_102, %c0_103, %c0_104] : memref<4x8x1xf32, #tpu.memory_space<vmem>>, vector<1x8x1xf32>
    %167 = vector.shape_cast %166 : vector<1x8x1xf32> to vector<8x1xf32>
    %168 = vector.shape_cast %141 : vector<8x1xf32> to vector<1x8x1xf32>
    tpu.vector_store %arg11[%c3_102, %c0_103, %c0_104], %168 {strides = array<i32>} : memref<4x8x1xf32, #tpu.memory_space<vmem>>, vector<1x8x1xf32>,
    %c0_i32_105 = arith.constant 0 : i32
    %169 = arith.cmpi eq, %arg2, %c0_i32_105 : i32
    %170 = arith.extui %169 : i1 to i32
    %c0_i32_106 = arith.constant 0 : i32
    %171 = arith.cmpi ne, %170, %c0_i32_106 : i32
    scf.if %171 {
      %c0_107 = arith.constant 0 : index
      %c0_108 = arith.constant 0 : index
      %c0_109 = arith.constant 0 : index
      %172 = vector.load %arg12[%c0_107, %c0_108, %c0_109] : memref<4x8x1xf32, #tpu.memory_space<vmem>>, vector<1x8x1xf32>
      %173 = vector.shape_cast %172 : vector<1x8x1xf32> to vector<8x1xf32>
      %174 = tpu.reciprocal %173 {approx = true} : vector<8x1xf32> -> vector<8x1xf32>
      %c0_110 = arith.constant 0 : index
      %c0_111 = arith.constant 0 : index
      %c0_112 = arith.constant 0 : index
      %175 = vector.load %arg13[%c0_110, %c0_111, %c0_112] : memref<4x8x8xf32, #tpu.memory_space<vmem>>, vector<1x8x8xf32>
      %176 = vector.shape_cast %175 : vector<1x8x8xf32> to vector<8x8xf32>
      %177 = vector.broadcast %174 : vector<8x1xf32> to vector<8x8xf32>
      %178 = arith.mulf %176, %177 : vector<8x8xf32>
      %c0_113 = arith.constant 0 : index
      %c0_114 = arith.constant 0 : index
      %179 = vector.load %arg14[%c0_113, %c0_114] : memref<8x32xf32, #tpu.memory_space<vmem>>, vector<8x8xf32>
      tpu.vector_store %arg14[%c0_113, %c0_114], %178 {strides = array<i32>} : memref<8x32xf32, #tpu.memory_space<vmem>>, vector<8x8xf32>,
      %c1_115 = arith.constant 1 : index
      %c0_116 = arith.constant 0 : index
      %c0_117 = arith.constant 0 : index
      %180 = vector.load %arg12[%c1_115, %c0_116, %c0_117] : memref<4x8x1xf32, #tpu.memory_space<vmem>>, vector<1x8x1xf32>
      %181 = vector.shape_cast %180 : vector<1x8x1xf32> to vector<8x1xf32>
      %182 = tpu.reciprocal %181 {approx = true} : vector<8x1xf32> -> vector<8x1xf32>
      %c1_118 = arith.constant 1 : index
      %c0_119 = arith.constant 0 : index
      %c0_120 = arith.constant 0 : index
      %183 = vector.load %arg13[%c1_118, %c0_119, %c0_120] : memref<4x8x8xf32, #tpu.memory_space<vmem>>, vector<1x8x8xf32>
      %184 = vector.shape_cast %183 : vector<1x8x8xf32> to vector<8x8xf32>
      %185 = vector.broadcast %182 : vector<8x1xf32> to vector<8x8xf32>
      %186 = arith.mulf %184, %185 : vector<8x8xf32>
      %c0_121 = arith.constant 0 : index
      %c8 = arith.constant 8 : index
      %187 = vector.load %arg14[%c0_121, %c8] : memref<8x32xf32, #tpu.memory_space<vmem>>, vector<8x8xf32>
      tpu.vector_store %arg14[%c0_121, %c8], %186 {strides = array<i32>} : memref<8x32xf32, #tpu.memory_space<vmem>>, vector<8x8xf32>,
      %c2_122 = arith.constant 2 : index
      %c0_123 = arith.constant 0 : index
      %c0_124 = arith.constant 0 : index
      %188 = vector.load %arg12[%c2_122, %c0_123, %c0_124] : memref<4x8x1xf32, #tpu.memory_space<vmem>>, vector<1x8x1xf32>
      %189 = vector.shape_cast %188 : vector<1x8x1xf32> to vector<8x1xf32>
      %190 = tpu.reciprocal %189 {approx = true} : vector<8x1xf32> -> vector<8x1xf32>
      %c2_125 = arith.constant 2 : index
      %c0_126 = arith.constant 0 : index
      %c0_127 = arith.constant 0 : index
      %191 = vector.load %arg13[%c2_125, %c0_126, %c0_127] : memref<4x8x8xf32, #tpu.memory_space<vmem>>, vector<1x8x8xf32>
      %192 = vector.shape_cast %191 : vector<1x8x8xf32> to vector<8x8xf32>
      %193 = vector.broadcast %190 : vector<8x1xf32> to vector<8x8xf32>
      %194 = arith.mulf %192, %193 : vector<8x8xf32>
      %c0_128 = arith.constant 0 : index
      %c16 = arith.constant 16 : index
      %195 = vector.load %arg14[%c0_128, %c16] : memref<8x32xf32, #tpu.memory_space<vmem>>, vector<8x8xf32>
      tpu.vector_store %arg14[%c0_128, %c16], %194 {strides = array<i32>} : memref<8x32xf32, #tpu.memory_space<vmem>>, vector<8x8xf32>,
      %c3_129 = arith.constant 3 : index
      %c0_130 = arith.constant 0 : index
      %c0_131 = arith.constant 0 : index
      %196 = vector.load %arg12[%c3_129, %c0_130, %c0_131] : memref<4x8x1xf32, #tpu.memory_space<vmem>>, vector<1x8x1xf32>
      %197 = vector.shape_cast %196 : vector<1x8x1xf32> to vector<8x1xf32>
      %198 = tpu.reciprocal %197 {approx = true} : vector<8x1xf32> -> vector<8x1xf32>
      %c3_132 = arith.constant 3 : index
      %c0_133 = arith.constant 0 : index
      %c0_134 = arith.constant 0 : index
      %199 = vector.load %arg13[%c3_132, %c0_133, %c0_134] : memref<4x8x8xf32, #tpu.memory_space<vmem>>, vector<1x8x8xf32>
      %200 = vector.shape_cast %199 : vector<1x8x8xf32> to vector<8x8xf32>
      %201 = vector.broadcast %198 : vector<8x1xf32> to vector<8x8xf32>
      %202 = arith.mulf %200, %201 : vector<8x8xf32>
      %c0_135 = arith.constant 0 : index
      %c24 = arith.constant 24 : index
      %203 = vector.load %arg14[%c0_135, %c24] : memref<8x32xf32, #tpu.memory_space<vmem>>, vector<8x8xf32>
      tpu.vector_store %arg14[%c0_135, %c24], %202 {strides = array<i32>} : memref<8x32xf32, #tpu.memory_space<vmem>>, vector<8x8xf32>,
      %c0_136 = arith.constant 0 : index
      %c0_137 = arith.constant 0 : index
      %204 = vector.load %arg14[%c0_136, %c0_137] : memref<8x32xf32, #tpu.memory_space<vmem>>, vector<8x32xf32>
      %c0_138 = arith.constant 0 : index
      %c0_139 = arith.constant 0 : index
      %205 = vector.load %arg7[%c0_138, %c0_139] : memref<32x32xf32, #tpu.memory_space<vmem>>, vector<32x32xf32>
      %cst_140 = arith.constant dense<0.000000e+00> : vector<8x32xf32>
      %206 = tpu.matmul %204, %205, %cst_140 {dimension_numbers = #tpu.dot_dimension_numbers<[1], [0], [0], [1], [0, 0, 1, 1], [], []>} : vector<8x32xf32>, vector<32x32xf32>, vector<8x32xf32> -> vector<8x32xf32>
      %c0_141 = arith.constant 0 : index
      %c0_142 = arith.constant 0 : index
      %207 = vector.load %arg8[%c0_141, %c0_142] : memref<1x32xf32, #tpu.memory_space<vmem>>, vector<1x32xf32>
      %208 = vector.broadcast %207 : vector<1x32xf32> to vector<8x32xf32>
      %209 = arith.addf %206, %208 : vector<8x32xf32>
      %c0_143 = arith.constant 0 : index
      %c0_144 = arith.constant 0 : index
      %c0_145 = arith.constant 0 : index
      %210 = vector.load %arg9[%c0_143, %c0_144, %c0_145] : memref<1x8x32xf32, #tpu.memory_space<vmem>>, vector<1x8x32xf32>
      %211 = vector.shape_cast %210 : vector<1x8x32xf32> to vector<8x32xf32>
      %212 = arith.addf %211, %209 : vector<8x32xf32>
      %c0_146 = arith.constant 0 : index
      %c0_147 = arith.constant 0 : index
      %c0_148 = arith.constant 0 : index
      %213 = vector.load %arg10[%c0_146, %c0_147, %c0_148] : memref<1x8x32xf32, #tpu.memory_space<vmem>>, vector<1x8x32xf32>
      %214 = vector.shape_cast %213 : vector<1x8x32xf32> to vector<8x32xf32>
      %215 = vector.shape_cast %212 : vector<8x32xf32> to vector<1x8x32xf32>
      tpu.vector_store %arg10[%c0_146, %c0_147, %c0_148], %215 {strides = array<i32>} : memref<1x8x32xf32, #tpu.memory_space<vmem>>, vector<1x8x32xf32>,
    } else {
    }
    return
  }
  func.func @transform_0(%arg0: i32, %arg1: i32, %arg2: i32) -> (i32, i32, i32) {
    %c0_i32 = arith.constant 0 : i32
    return %arg0, %arg1, %arg2 : i32, i32, i32
  }
  func.func @transform_1(%arg0: i32, %arg1: i32, %arg2: i32) -> (i32, i32, i32) {
    %c0_i32 = arith.constant 0 : i32
    %c0_i32_0 = arith.constant 0 : i32
    return %arg0, %arg1, %c0_i32 : i32, i32, i32
  }
  func.func @transform_2(%arg0: i32, %arg1: i32, %arg2: i32) -> (i32, i32, i32) {
    %c0_i32 = arith.constant 0 : i32
    %c0_i32_0 = arith.constant 0 : i32
    return %arg0, %arg2, %c0_i32 : i32, i32, i32
  }
  func.func @transform_3(%arg0: i32, %arg1: i32, %arg2: i32) -> (i32, i32, i32) {
    %c0_i32 = arith.constant 0 : i32
    %c0_i32_0 = arith.constant 0 : i32
    return %arg0, %arg2, %c0_i32 : i32, i32, i32
  }
  func.func @transform_4(%arg0: i32, %arg1: i32, %arg2: i32) -> (i32, i32) {
    %c0_i32 = arith.constant 0 : i32
    %c0_i32_0 = arith.constant 0 : i32
    %c0_i32_1 = arith.constant 0 : i32
    return %c0_i32, %c0_i32_0 : i32, i32
  }
  func.func @transform_5(%arg0: i32, %arg1: i32, %arg2: i32) -> (i32, i32) {
    %c0_i32 = arith.constant 0 : i32
    %c0_i32_0 = arith.constant 0 : i32
    %c0_i32_1 = arith.constant 0 : i32
    return %c0_i32, %c0_i32_0 : i32, i32
  }
  func.func @transform_6(%arg0: i32, %arg1: i32, %arg2: i32) -> (i32, i32, i32) {
    %c0_i32 = arith.constant 0 : i32
    %c0_i32_0 = arith.constant 0 : i32
    return %arg0, %arg1, %c0_i32 : i32, i32, i32
  }
  func.func @transform_7(%arg0: i32, %arg1: i32, %arg2: i32) -> (i32, i32, i32) {
    %c0_i32 = arith.constant 0 : i32
    %c0_i32_0 = arith.constant 0 : i32
    return %arg0, %arg1, %c0_i32 : i32, i32, i32
  }
}

</mosaic_0001>

<llo_original>
// kernel: transformer_block.3
$region0: #{transformer_block.3}
  #allocation0 [shape = 'u32[]', space=smem, size = 0x4, offset = 0x4, fixed_abs, tag = 'smem constant byte address 0x4 - core index']
  #allocation1 [shape = 'u32[144,128]{1,0:T(1,128)}', space=vmem, size = 0x12000, scoped, tag = 'internal scratch']
  %s0 = inlined_call_operand.vmem [shape: f32[16,32], index: 0, kind: input, shape index: {}]
  %s1 = inlined_call_operand.vmem [shape: f32[1,32], index: 1, kind: input, shape index: {}]
  %s2 = inlined_call_operand.vmem [shape: f32[1,32], index: 2, kind: input, shape index: {}]
  %s3 = inlined_call_operand.hbm [shape: f32[32,96], index: 3, kind: input, shape index: {}]
  %s4 = inlined_call_operand.vmem [shape: f32[1,96], index: 4, kind: input, shape index: {}]
  %s5 = inlined_call_operand.vmem [shape: f32[16,32], index: 5, kind: output, shape index: {0}]
  %s6 = inlined_call_operand.vmem [shape: f32[16,32], index: 6, kind: output, shape index: {1}]
  %s7 = inlined_call_operand.vmem [shape: f32[16,32], index: 7, kind: output, shape index: {2}]
  %8 = xla_tuple %s5, %s6, %s7
  %s9 = sld [smem:[#allocation0]]
  $region50: #{transformer_block.3} parent=0
    _
  %s11 = ssub.s32 1, %s9
  %s12 = scalar_select 0, %s11, %s9
  $region1: #{transformer_block.3} parent=0
    #allocation2 [shape = 'u8[16384]{0}', space=vmem, size = 0x4000, scoped, tag = 'input window, operand 3, single buffered']
    #allocation3 [shape = 's32[1]{0}', space=sflag, size = 0x4, scoped, tag = 'scoped memory for transformer_block.3']
    %13 = vsyncpa [#allocation3], 0
    // Predicated region
    $region2: #{transformer_block.3} parent=1 // pred_check
      _
    $region3: #{transformer_block.3} parent=1 // pred_check_branch
      %15 = sbr.rel (0) target = $region5
    $region4: #{transformer_block.3} parent=1 // pred_region
      _
    $region5: #{transformer_block.3} parent=1 // pred_fallthru
      _
    // Predicated region
    $region6: #{transformer_block.3} parent=1 // pred_check
      _
    $region7: #{transformer_block.3} parent=1 // pred_check_branch
      %17 = sbr.rel (0) target = $region9
    $region8: #{transformer_block.3} parent=1 // pred_region
      _
    $region9: #{transformer_block.3} parent=1 // pred_fallthru
      _
    // Predicated region
    $region10: #{transformer_block.3} parent=1 // pred_check
      _
    $region11: #{transformer_block.3} parent=1 // pred_check_branch
      %19 = sbr.rel (0) target = $region13
    $region12: #{transformer_block.3} parent=1 // pred_region
      _
    $region13: #{transformer_block.3} parent=1 // pred_fallthru
      _
    // Predicated region
    $region14: #{transformer_block.3} parent=1 // pred_check
      _
    $region15: #{transformer_block.3} parent=1 // pred_check_branch
      %21 = sbr.rel (0) target = $region17
    $region16: #{transformer_block.3} parent=1 // pred_region
      %s23 = ssub.s32 512, 512
      %24 = vsyncadd [#allocation3], %s23
      %s25 = sshll.u32 [#allocation2], 4
      %s26 = int_to_ptr.vmem [resolvable:$true] %s25
      %31 = dma.hbm_to_vmem [thread:$0]  %s3, 512, %s26, [#allocation3], 128, 128, 8
    $region17: #{transformer_block.3} parent=1 // pred_fallthru
      _
    // Predicated region
    $region18: #{transformer_block.3} parent=1 // pred_check
      _
    $region19: #{transformer_block.3} parent=1 // pred_check_branch
      %33 = sbr.rel (0) target = $region21
    $region20: #{transformer_block.3} parent=1 // pred_region
      _
    $region21: #{transformer_block.3} parent=1 // pred_fallthru
      _
    // Predicated region
    $region22: #{transformer_block.3} parent=1 // pred_check
      _
    $region23: #{transformer_block.3} parent=1 // pred_check_branch
      %35 = sbr.rel (0) target = $region25
    $region24: #{transformer_block.3} parent=1 // pred_region
      %36 = dma.done [#allocation3], 512
    $region25: #{transformer_block.3} parent=1 // pred_fallthru
      _
    %v37 = vld [vmem:[%s0] sm:$0xff]
    %v38 = vld [vmem:[%s0 + $0x8] sm:$0xff]
    %v39 = vld [vmem:[%s1] sm:$0x1]
    %v40 = vld [vmem:[%s2] sm:$0x1]
    %vm41 = vcmask 261120
    %v42 = vsel %vm41, %v37, 0.0
    %43 = vadd.xlane.f32.xlu0 %v42
    %v44 = vpop.xlane.xlu0 %43
    %v45 = vsel %vm41, %v38, 0.0
    %46 = vadd.xlane.f32.xlu0 %v45
    %v47 = vpop.xlane.xlu0 %46
    %v48 = vrcp.pop 32.0
    %v49 = vmul.f32 %v44, %v48
    %v50 = vmul.f32 %v47, %v48
    %v51 = vsub.f32 %v37, %v49
    %v52 = vsub.f32 %v38, %v50
    %v53 = vmul.f32 %v51, %v51
    %v54 = vmul.f32 %v52, %v52
    %v55 = vsel %vm41, %v53, 0.0
    %56 = vadd.xlane.f32.xlu0 %v55
    %v57 = vpop.xlane.xlu0 %56
    %v58 = vsel %vm41, %v54, 0.0
    %59 = vadd.xlane.f32.xlu0 %v58
    %v60 = vpop.xlane.xlu0 %59
    %v61 = vmul.f32 %v57, %v48
    %v62 = vmul.f32 %v60, %v48
    %v63 = vadd.f32 %v61, 1e-05
    %v64 = vadd.f32 %v62, 1e-05
    %v65 = vrsqrt.pop %v63
    %v66 = vrsqrt.pop %v64
    %v67 = vmul.f32 %v51, %v65
    %v68 = vmul.f32 %v52, %v66
    %v70 = vlaneseq
    %v71 = vshrl.u32 %v70, 7
    %v72 = vsub.s32 0, %v71
    %v73 = vrot.slane %v39, %v72
    %v75 = vmul.f32 %v67, %v73
    %v76 = vmul.f32 %v68, %v73
    %v78 = vlaneseq
    %v79 = vshrl.u32 %v78, 7
    %v80 = vsub.s32 0, %v79
    %v81 = vrot.slane %v40, %v80
    %v83 = vadd.f32 %v75, %v81
    %v84 = vadd.f32 %v76, %v81
    %v85 = vld [vmem:[#allocation2] sm:$0xff]
    %v86 = vld [vmem:[#allocation2 + $0x8] sm:$0xff]
    %v87 = vld [vmem:[#allocation2 + $0x10] sm:$0xff]
    %v88 = vld [vmem:[#allocation2 + $0x18] sm:$0xff]
    %v89 = vld [vmem:[%s4] sm:$0x1]
    %v91 = vlaneseq
    %v92 = vshrl.u32 %v91, 7
    %v93 = vsub.s32 0, %v92
    %v94 = vrot.slane %v89, %v93
    %v97 = vsel %vm41, %v83, 0
    %v100 = vsel %vm41, %v84, 0
    %102 = vmatprep.subr.mxu0 0.0
    %103 = vmatpush1.msra.mxu0 0.0
    %104 = vmatprep.subr.mxu0 0.0
    %105 = vmatpush1.msra.mxu0 0.0
    %106 = vmatprep.subr.mxu0 0.0
    %107 = vmatpush1.msra.mxu0 0.0
    %108 = vmatprep.subr.mxu0 0.0
    %109 = vmatpush1.msra.mxu0 0.0
    %110 = vmatprep.subr.mxu0 0.0
    %111 = vmatpush1.msra.mxu0 0.0
    %112 = vmatprep.subr.mxu0 0.0
    %113 = vmatpush1.msra.mxu0 0.0
    %114 = vmatprep.subr.mxu0 0.0
    %115 = vmatpush1.msra.mxu0 0.0
    %116 = vmatprep.subr.mxu0 0.0
    %117 = vmatpush1.msra.mxu0 0.0
    %118 = vmatprep.subr.mxu0 0.0
    %119 = vmatpush1.msra.mxu0 0.0
    %120 = vmatprep.subr.mxu0 0.0
    %121 = vmatpush1.msra.mxu0 0.0
    %122 = vmatprep.subr.mxu0 0.0
    %123 = vmatpush1.msra.mxu0 0.0
    %124 = vmatprep.subr.mxu0 0.0
    %125 = vmatpush1.msra.mxu0 0.0
    %126 = vmatprep.subr.mxu0 0.0
    %127 = vmatpush1.msra.mxu0 %v88
    %128 = vmatprep.subr.mxu0 0.0
    %129 = vmatpush1.msra.mxu0 %v87
    %130 = vmatprep.subr.mxu0 0.0
    %131 = vmatpush1.msra.mxu0 %v86
    %132 = vmatprep.subr.mxu0 0.0
    %133 = vmatpush1.msra.mxu0 %v85
    %134 = vmatprep.subr.mxu0 0.0
    %135 = vmatpush2.msra.mxu0 0.0
    %136 = vmatprep.subr.mxu0 0.0
    %137 = vmatpush2.msra.mxu0 0.0
    %138 = vmatprep.subr.mxu0 0.0
    %139 = vmatpush2.msra.mxu0 0.0
    %140 = vmatprep.subr.mxu0 0.0
    %141 = vmatpush2.msra.mxu0 0.0
    %142 = vmatprep.subr.mxu0 0.0
    %143 = vmatpush2.msra.mxu0 0.0
    %144 = vmatprep.subr.mxu0 0.0
    %145 = vmatpush2.msra.mxu0 0.0
    %146 = vmatprep.subr.mxu0 0.0
    %147 = vmatpush2.msra.mxu0 0.0
    %148 = vmatprep.subr.mxu0 0.0
    %149 = vmatpush2.msra.mxu0 0.0
    %150 = vmatprep.subr.mxu0 0.0
    %151 = vmatpush2.msra.mxu0 0.0
    %152 = vmatprep.subr.mxu0 0.0
    %153 = vmatpush2.msra.mxu0 0.0
    %154 = vmatprep.subr.mxu0 0.0
    %155 = vmatpush2.msra.mxu0 0.0
    %156 = vmatprep.subr.mxu0 0.0
    %157 = vmatpush2.msra.mxu0 0.0
    %158 = vmatprep.subr.mxu0 0.0
    %159 = vmatpush2.msra.mxu0 0.0
    %160 = vmatprep.subr.mxu0 0.0
    %161 = vmatpush2.msra.mxu0 0.0
    %162 = vmatprep.subr.mxu0 0.0
    %163 = vmatpush2.msra.mxu0 0.0
    %164 = vmatprep.subr.mxu0 0.0
    %165 = vmatpush2.msra.mxu0 0.0
    %166 = vmatprep.mubr.f32.mxu0 0.0
    %167 = vmatmul.mubr.f32.gmra.mxu0 %v97
    %v168 = vpop.f32.mrf.mxu0
    %v169 = vadd.f32 %v94, %v168
    %v170 = vpop.f32.mrf.mxu0
    %171 = vmatprep.mubr.f32.mxu0 0.0
    %172 = vmatmul.mubr.f32.gmra.mxu0 %v100
    %v173 = vpop.f32.mrf.mxu0
    %v174 = vadd.f32 %v94, %v173
    %v175 = vpop.f32.mrf.mxu0
    %176 = vdwg.mxu0
    %177 = vst.msk [vmem:[%s5] sm:$0xff] %vm41, %v169
    %178 = vst.msk [vmem:[%s5 + $0x8] sm:$0xff] %vm41, %v174
    %181 = vrot.lane.b32.xlu0 %v169, 96
    %v182 = vpop.permute.xlu0 %181
    %183 = vrot.lane.b32.xlu0 %v174, 96
    %v184 = vpop.permute.xlu0 %183
    %187 = vst.msk [vmem:[%s6] sm:$0xff] %vm41, %v182
    %188 = vst.msk [vmem:[%s6 + $0x8] sm:$0xff] %vm41, %v184
    %189 = vrot.lane.b32.xlu0 %v169, 64
    %v190 = vpop.permute.xlu0 %189
    %191 = vrot.lane.b32.xlu0 %v174, 64
    %v192 = vpop.permute.xlu0 %191
    %195 = vst.msk [vmem:[%s7] sm:$0xff] %vm41, %v190
    %196 = vst.msk [vmem:[%s7 + $0x8] sm:$0xff] %vm41, %v192
    // Predicated region
    $region26: #{transformer_block.3} parent=1 // pred_check
      _
    $region27: #{transformer_block.3} parent=1 // pred_check_branch
      %198 = sbr.rel (0) target = $region29
    $region28: #{transformer_block.3} parent=1 // pred_region
      _
    $region29: #{transformer_block.3} parent=1 // pred_fallthru
      _
    // Predicated region
    $region30: #{transformer_block.3} parent=1 // pred_check
      _
    $region31: #{transformer_block.3} parent=1 // pred_check_branch
      %200 = sbr.rel (0) target = $region33
    $region32: #{transformer_block.3} parent=1 // pred_region
      _
    $region33: #{transformer_block.3} parent=1 // pred_fallthru
      _
    // Predicated region
    $region34: #{transformer_block.3} parent=1 // pred_check
      _
    $region35: #{transformer_block.3} parent=1 // pred_check_branch
      %202 = sbr.rel (0) target = $region37
    $region36: #{transformer_block.3} parent=1 // pred_region
      _
    $region37: #{transformer_block.3} parent=1 // pred_fallthru
      _
    // Predicated region
    $region38: #{transformer_block.3} parent=1 // pred_check
      _
    $region39: #{transformer_block.3} parent=1 // pred_check_branch
      %204 = sbr.rel (0) target = $region41
    $region40: #{transformer_block.3} parent=1 // pred_region
      _
    $region41: #{transformer_block.3} parent=1 // pred_fallthru
      _
    // Predicated region
    $region42: #{transformer_block.3} parent=1 // pred_check
      _
    $region43: #{transformer_block.3} parent=1 // pred_check_branch
      %206 = sbr.rel (0) target = $region45
    $region44: #{transformer_block.3} parent=1 // pred_region
      _
    $region45: #{transformer_block.3} parent=1 // pred_fallthru
      _
    // Predicated region
    $region46: #{transformer_block.3} parent=1 // pred_check
      _
    $region47: #{transformer_block.3} parent=1 // pred_check_branch
      %208 = sbr.rel (0) target = $region49
    $region48: #{transformer_block.3} parent=1 // pred_region
      _
    $region49: #{transformer_block.3} parent=1 // pred_fallthru
      _
    %209 = vsyncpa [#allocation3], 1

// kernel: transformer_block.5
$region0: #{transformer_block.5}
  #allocation0 [shape = 'u32[]', space=smem, size = 0x4, offset = 0x4, fixed_abs, tag = 'smem constant byte address 0x4 - core index']
  #allocation1 [shape = 'u32[144,128]{1,0:T(1,128)}', space=vmem, size = 0x12000, scoped, tag = 'internal scratch']
  #allocation2 [shape = 'f32[16,32]{1,0:T(8,128)}', space=vmem, size = 0x2000, scoped, tag = 'scratch operand']
  #allocation3 [shape = 'f32[16,32]{1,0:T(8,128)}', space=vmem, size = 0x2000, scoped, tag = 'scratch operand']
  %s0 = inlined_call_operand.vmem [shape: f32[16,32], index: 0, kind: input, shape index: {}, may-alias: {0,7}]
  %s1 = inlined_call_operand.vmem [shape: f32[1,32], index: 1, kind: input, shape index: {}]
  %s2 = inlined_call_operand.vmem [shape: f32[1,32], index: 2, kind: input, shape index: {}]
  %s3 = inlined_call_operand.vmem [shape: f32[32,128], index: 3, kind: input, shape index: {}]
  %s4 = inlined_call_operand.vmem [shape: f32[1,128], index: 4, kind: input, shape index: {}]
  %s5 = inlined_call_operand.vmem [shape: f32[128,32], index: 5, kind: input, shape index: {}]
  %s6 = inlined_call_operand.vmem [shape: f32[1,32], index: 6, kind: input, shape index: {}]
  %s7 = inlined_call_operand.vmem [shape: f32[16,32], index: 7, kind: output, shape index: {}, may-alias: {0,7}]
  %s8 = sld [smem:[#allocation0]]
  $region46: #{transformer_block.5} parent=0
    _
  %s10 = ssub.s32 1, %s8
  %s11 = scalar_select 0, %s10, %s8
  // Predicated region
  $region2: #{transformer_block.5} parent=0 // pred_check
    _
  $region3: #{transformer_block.5} parent=0 // pred_check_branch
    %13 = sbr.rel (0) target = $region5
  $region4: #{transformer_block.5} parent=0 // pred_region
    _
  $region5: #{transformer_block.5} parent=0 // pred_fallthru
    _
  // Predicated region
  $region6: #{transformer_block.5} parent=0 // pred_check
    _
  $region7: #{transformer_block.5} parent=0 // pred_check_branch
    %15 = sbr.rel (0) target = $region9
  $region8: #{transformer_block.5} parent=0 // pred_region
    _
  $region9: #{transformer_block.5} parent=0 // pred_fallthru
    _
  // Predicated region
  $region10: #{transformer_block.5} parent=0 // pred_check
    _
  $region11: #{transformer_block.5} parent=0 // pred_check_branch
    %17 = sbr.rel (0) target = $region13
  $region12: #{transformer_block.5} parent=0 // pred_region
    _
  $region13: #{transformer_block.5} parent=0 // pred_fallthru
    _
  // Predicated region
  $region14: #{transformer_block.5} parent=0 // pred_check
    _
  $region15: #{transformer_block.5} parent=0 // pred_check_branch
    %19 = sbr.rel (0) target = $region17
  $region16: #{transformer_block.5} parent=0 // pred_region
    _
  $region17: #{transformer_block.5} parent=0 // pred_fallthru
    _
  // Predicated region
  $region18: #{transformer_block.5} parent=0 // pred_check
    _
  $region19: #{transformer_block.5} parent=0 // pred_check_branch
    %21 = sbr.rel (0) target = $region21
  $region20: #{transformer_block.5} parent=0 // pred_region
    _
  $region21: #{transformer_block.5} parent=0 // pred_fallthru
    _
  // Predicated region
  $region22: #{transformer_block.5} parent=0 // pred_check
    _
  $region23: #{transformer_block.5} parent=0 // pred_check_branch
    %23 = sbr.rel (0) target = $region25
  $region24: #{transformer_block.5} parent=0 // pred_region
    _
  $region25: #{transformer_block.5} parent=0 // pred_fallthru
    _
  // Predicated region
  $region26: #{transformer_block.5} parent=0 // pred_check
    _
  $region27: #{transformer_block.5} parent=0 // pred_check_branch
    %25 = sbr.rel (0) target = $region29
  $region28: #{transformer_block.5} parent=0 // pred_region
    _
  $region29: #{transformer_block.5} parent=0 // pred_fallthru
    _
  %p26 = scmp.eq.s32.totalorder 0, 0
  // Predicated region
  $region30: #{transformer_block.5} parent=0 // pred_check
    %p27 = pneg %p26
  $region31: #{transformer_block.5} parent=0 // pred_check_branch
    %29 = sbr.rel (%p27) target = $region33
  $region32: #{transformer_block.5} parent=0 // pred_region
    %v30 = vld [vmem:[%s0] sm:$0xff]
    %v31 = vld [vmem:[%s0 + $0x8] sm:$0xff]
    %v32 = vld [vmem:[%s1] sm:$0x1]
    %v33 = vld [vmem:[%s2] sm:$0x1]
    %vm34 = vcmask 261120
    %v35 = vsel %vm34, %v30, 0.0
    %36 = vadd.xlane.f32.xlu0 %v35
    %v37 = vpop.xlane.xlu0 %36
    %v38 = vsel %vm34, %v31, 0.0
    %39 = vadd.xlane.f32.xlu0 %v38
    %v40 = vpop.xlane.xlu0 %39
    %v41 = vrcp.pop 32.0
    %v42 = vmul.f32 %v37, %v41
    %v43 = vmul.f32 %v40, %v41
    %v44 = vsub.f32 %v30, %v42
    %v45 = vsub.f32 %v31, %v43
    %v46 = vmul.f32 %v44, %v44
    %v47 = vmul.f32 %v45, %v45
    %v48 = vsel %vm34, %v46, 0.0
    %49 = vadd.xlane.f32.xlu0 %v48
    %v50 = vpop.xlane.xlu0 %49
    %v51 = vsel %vm34, %v47, 0.0
    %52 = vadd.xlane.f32.xlu0 %v51
    %v53 = vpop.xlane.xlu0 %52
    %v54 = vmul.f32 %v50, %v41
    %v55 = vmul.f32 %v53, %v41
    %v56 = vadd.f32 %v54, 1e-05
    %v57 = vadd.f32 %v55, 1e-05
    %v58 = vrsqrt.pop %v56
    %v59 = vrsqrt.pop %v57
    %v60 = vmul.f32 %v44, %v58
    %v61 = vmul.f32 %v45, %v59
    %v63 = vlaneseq
    %v64 = vshrl.u32 %v63, 7
    %v65 = vsub.s32 0, %v64
    %v66 = vrot.slane %v32, %v65
    %v68 = vmul.f32 %v60, %v66
    %v69 = vmul.f32 %v61, %v66
    %v71 = vlaneseq
    %v72 = vshrl.u32 %v71, 7
    %v73 = vsub.s32 0, %v72
    %v74 = vrot.slane %v33, %v73
    %v76 = vadd.f32 %v68, %v74
    %v77 = vadd.f32 %v69, %v74
    %78 = vst.msk [vmem:[#allocation2] sm:$0xff] %vm34, %v76
    %79 = vst.msk [vmem:[#allocation2 + $0x8] sm:$0xff] %vm34, %v77
    %80 = vst.msk [vmem:[#allocation3] sm:$0xff] %vm34, 0.0
    %81 = vst.msk [vmem:[#allocation3 + $0x8] sm:$0xff] %vm34, 0.0
  $region33: #{transformer_block.5} parent=0 // pred_fallthru
    _
  %v82 = vld [vmem:[#allocation2] sm:$0xff]
  %v83 = vld [vmem:[#allocation2 + $0x8] sm:$0xff]
  %v84 = vld [vmem:[%s3] sm:$0xff]
  %v85 = vld [vmem:[%s3 + $0x8] sm:$0xff]
  %v86 = vld [vmem:[%s3 + $0x10] sm:$0xff]
  %v87 = vld [vmem:[%s3 + $0x18] sm:$0xff]
  %v88 = vld [vmem:[%s4] sm:$0x1]
  %v90 = vlaneseq
  %v91 = vshrl.u32 %v90, 7
  %v92 = vsub.s32 0, %v91
  %v93 = vrot.slane %v88, %v92
  %vm95 = vcmask 261120
  %v97 = vsel %vm95, %v82, 0
  %v100 = vsel %vm95, %v83, 0
  %102 = vmatprep.subr.mxu0 0.0
  %103 = vmatpush1.msra.mxu0 0.0
  %104 = vmatprep.subr.mxu0 0.0
  %105 = vmatpush1.msra.mxu0 0.0
  %106 = vmatprep.subr.mxu0 0.0
  %107 = vmatpush1.msra.mxu0 0.0
  %108 = vmatprep.subr.mxu0 0.0
  %109 = vmatpush1.msra.mxu0 0.0
  %110 = vmatprep.subr.mxu0 0.0
  %111 = vmatpush1.msra.mxu0 0.0
  %112 = vmatprep.subr.mxu0 0.0
  %113 = vmatpush1.msra.mxu0 0.0
  %114 = vmatprep.subr.mxu0 0.0
  %115 = vmatpush1.msra.mxu0 0.0
  %116 = vmatprep.subr.mxu0 0.0
  %117 = vmatpush1.msra.mxu0 0.0
  %118 = vmatprep.subr.mxu0 0.0
  %119 = vmatpush1.msra.mxu0 0.0
  %120 = vmatprep.subr.mxu0 0.0
  %121 = vmatpush1.msra.mxu0 0.0
  %122 = vmatprep.subr.mxu0 0.0
  %123 = vmatpush1.msra.mxu0 0.0
  %124 = vmatprep.subr.mxu0 0.0
  %125 = vmatpush1.msra.mxu0 0.0
  %126 = vmatprep.subr.mxu0 0.0
  %127 = vmatpush1.msra.mxu0 %v87
  %128 = vmatprep.subr.mxu0 0.0
  %129 = vmatpush1.msra.mxu0 %v86
  %130 = vmatprep.subr.mxu0 0.0
  %131 = vmatpush1.msra.mxu0 %v85
  %132 = vmatprep.subr.mxu0 0.0
  %133 = vmatpush1.msra.mxu0 %v84
  %134 = vmatprep.subr.mxu0 0.0
  %135 = vmatpush2.msra.mxu0 0.0
  %136 = vmatprep.subr.mxu0 0.0
  %137 = vmatpush2.msra.mxu0 0.0
  %138 = vmatprep.subr.mxu0 0.0
  %139 = vmatpush2.msra.mxu0 0.0
  %140 = vmatprep.subr.mxu0 0.0
  %141 = vmatpush2.msra.mxu0 0.0
  %142 = vmatprep.subr.mxu0 0.0
  %143 = vmatpush2.msra.mxu0 0.0
  %144 = vmatprep.subr.mxu0 0.0
  %145 = vmatpush2.msra.mxu0 0.0
  %146 = vmatprep.subr.mxu0 0.0
  %147 = vmatpush2.msra.mxu0 0.0
  %148 = vmatprep.subr.mxu0 0.0
  %149 = vmatpush2.msra.mxu0 0.0
  %150 = vmatprep.subr.mxu0 0.0
  %151 = vmatpush2.msra.mxu0 0.0
  %152 = vmatprep.subr.mxu0 0.0
  %153 = vmatpush2.msra.mxu0 0.0
  %154 = vmatprep.subr.mxu0 0.0
  %155 = vmatpush2.msra.mxu0 0.0
  %156 = vmatprep.subr.mxu0 0.0
  %157 = vmatpush2.msra.mxu0 0.0
  %158 = vmatprep.subr.mxu0 0.0
  %159 = vmatpush2.msra.mxu0 0.0
  %160 = vmatprep.subr.mxu0 0.0
  %161 = vmatpush2.msra.mxu0 0.0
  %162 = vmatprep.subr.mxu0 0.0
  %163 = vmatpush2.msra.mxu0 0.0
  %164 = vmatprep.subr.mxu0 0.0
  %165 = vmatpush2.msra.mxu0 0.0
  %166 = vmatprep.mubr.f32.mxu0 0.0
  %167 = vmatmul.mubr.f32.gmra.mxu0 %v97
  %v168 = vpop.f32.mrf.mxu0
  %v169 = vadd.f32 %v93, %v168
  %v170 = vpop.f32.mrf.mxu0
  %171 = vmatprep.mubr.f32.mxu0 0.0
  %172 = vmatmul.mubr.f32.gmra.mxu0 %v100
  %v173 = vpop.f32.mrf.mxu0
  %v174 = vadd.f32 %v93, %v173
  %v175 = vpop.f32.mrf.mxu0
  %176 = vdwg.mxu0
  %v177 = vmul.f32 %v169, 0.5
  %v178 = vmul.f32 %v174, 0.5
  %v179 = vmul.f32 %v169, 0.044715
  %v180 = vmul.f32 %v174, 0.044715
  %v181 = vmul.f32 %v179, %v169
  %v182 = vmul.f32 %v180, %v174
  %v183 = vmul.f32 %v181, %v169
  %v184 = vmul.f32 %v182, %v174
  %v185 = vadd.f32 %v169, %v183
  %v186 = vadd.f32 %v174, %v184
  %v187 = vmul.f32 %v185, 0.7978846
  %v188 = vmul.f32 %v186, 0.7978846
  %v189 = vtanh.pop %v187
  %v190 = vtanh.pop %v188
  %v191 = vadd.f32 %v189, 1.0
  %v192 = vadd.f32 %v190, 1.0
  %v193 = vmul.f32 %v177, %v191
  %v194 = vmul.f32 %v178, %v192
  %v195 = vld [vmem:[#allocation3] sm:$0xff]
  %v196 = vld [vmem:[#allocation3 + $0x8] sm:$0xff]
  %v197 = vld [vmem:[%s5] sm:$0xff]
  %v198 = vld [vmem:[%s5 + $0x8] sm:$0xff]
  %v199 = vld [vmem:[%s5 + $0x10] sm:$0xff]
  %v200 = vld [vmem:[%s5 + $0x18] sm:$0xff]
  %v201 = vld [vmem:[%s5 + $0x20] sm:$0xff]
  %v202 = vld [vmem:[%s5 + $0x28] sm:$0xff]
  %v203 = vld [vmem:[%s5 + $0x30] sm:$0xff]
  %v204 = vld [vmem:[%s5 + $0x38] sm:$0xff]
  %v205 = vld [vmem:[%s5 + $0x40] sm:$0xff]
  %v206 = vld [vmem:[%s5 + $0x48] sm:$0xff]
  %v207 = vld [vmem:[%s5 + $0x50] sm:$0xff]
  %v208 = vld [vmem:[%s5 + $0x58] sm:$0xff]
  %v209 = vld [vmem:[%s5 + $0x60] sm:$0xff]
  %v210 = vld [vmem:[%s5 + $0x68] sm:$0xff]
  %v211 = vld [vmem:[%s5 + $0x70] sm:$0xff]
  %v212 = vld [vmem:[%s5 + $0x78] sm:$0xff]
  %213 = vmatprep.subr.mxu0 0.0
  %214 = vmatpush1.msra.mxu0 %v212
  %215 = vmatprep.subr.mxu0 0.0
  %216 = vmatpush1.msra.mxu0 %v211
  %217 = vmatprep.subr.mxu0 0.0
  %218 = vmatpush1.msra.mxu0 %v210
  %219 = vmatprep.subr.mxu0 0.0
  %220 = vmatpush1.msra.mxu0 %v209
  %221 = vmatprep.subr.mxu0 0.0
  %222 = vmatpush1.msra.mxu0 %v208
  %223 = vmatprep.subr.mxu0 0.0
  %224 = vmatpush1.msra.mxu0 %v207
  %225 = vmatprep.subr.mxu0 0.0
  %226 = vmatpush1.msra.mxu0 %v206
  %227 = vmatprep.subr.mxu0 0.0
  %228 = vmatpush1.msra.mxu0 %v205
  %229 = vmatprep.subr.mxu0 0.0
  %230 = vmatpush1.msra.mxu0 %v204
  %231 = vmatprep.subr.mxu0 0.0
  %232 = vmatpush1.msra.mxu0 %v203
  %233 = vmatprep.subr.mxu0 0.0
  %234 = vmatpush1.msra.mxu0 %v202
  %235 = vmatprep.subr.mxu0 0.0
  %236 = vmatpush1.msra.mxu0 %v201
  %237 = vmatprep.subr.mxu0 0.0
  %238 = vmatpush1.msra.mxu0 %v200
  %239 = vmatprep.subr.mxu0 0.0
  %240 = vmatpush1.msra.mxu0 %v199
  %241 = vmatprep.subr.mxu0 0.0
  %242 = vmatpush1.msra.mxu0 %v198
  %243 = vmatprep.subr.mxu0 0.0
  %244 = vmatpush1.msra.mxu0 %v197
  %245 = vmatprep.subr.mxu0 0.0
  %246 = vmatpush2.msra.mxu0 0.0
  %247 = vmatprep.subr.mxu0 0.0
  %248 = vmatpush2.msra.mxu0 0.0
  %249 = vmatprep.subr.mxu0 0.0
  %250 = vmatpush2.msra.mxu0 0.0
  %251 = vmatprep.subr.mxu0 0.0
  %252 = vmatpush2.msra.mxu0 0.0
  %253 = vmatprep.subr.mxu0 0.0
  %254 = vmatpush2.msra.mxu0 0.0
  %255 = vmatprep.subr.mxu0 0.0
  %256 = vmatpush2.msra.mxu0 0.0
  %257 = vmatprep.subr.mxu0 0.0
  %258 = vmatpush2.msra.mxu0 0.0
  %259 = vmatprep.subr.mxu0 0.0
  %260 = vmatpush2.msra.mxu0 0.0
  %261 = vmatprep.subr.mxu0 0.0
  %262 = vmatpush2.msra.mxu0 0.0
  %263 = vmatprep.subr.mxu0 0.0
  %264 = vmatpush2.msra.mxu0 0.0
  %265 = vmatprep.subr.mxu0 0.0
  %266 = vmatpush2.msra.mxu0 0.0
  %267 = vmatprep.subr.mxu0 0.0
  %268 = vmatpush2.msra.mxu0 0.0
  %269 = vmatprep.subr.mxu0 0.0
  %270 = vmatpush2.msra.mxu0 0.0
  %271 = vmatprep.subr.mxu0 0.0
  %272 = vmatpush2.msra.mxu0 0.0
  %273 = vmatprep.subr.mxu0 0.0
  %274 = vmatpush2.msra.mxu0 0.0
  %275 = vmatprep.subr.mxu0 0.0
  %276 = vmatpush2.msra.mxu0 0.0
  %277 = vmatprep.mubr.f32.mxu0 0.0
  %278 = vmatmul.mubr.f32.gmra.mxu0 %v193
  %v279 = vpop.f32.mrf.mxu0
  %v280 = vadd.f32 0.0, %v279
  %v281 = vpop.f32.mrf.mxu0
  %282 = vmatprep.mubr.f32.mxu0 0.0
  %283 = vmatmul.mubr.f32.gmra.mxu0 %v194
  %v284 = vpop.f32.mrf.mxu0
  %v285 = vadd.f32 0.0, %v284
  %v286 = vpop.f32.mrf.mxu0
  %287 = vdwg.mxu0
  %v288 = vadd.f32 %v195, %v280
  %v289 = vadd.f32 %v196, %v285
  %290 = vst.msk [vmem:[#allocation3] sm:$0xff] %vm95, %v288
  %291 = vst.msk [vmem:[#allocation3 + $0x8] sm:$0xff] %vm95, %v289
  // Predicated region
  $region34: #{transformer_block.5} parent=0 // pred_check
    %p292 = pneg %p26
  $region35: #{transformer_block.5} parent=0 // pred_check_branch
    %294 = sbr.rel (%p292) target = $region37
  $region36: #{transformer_block.5} parent=0 // pred_region
    %v295 = vld [vmem:[%s0] sm:$0xff]
    %v296 = vld [vmem:[%s0 + $0x8] sm:$0xff]
    %v297 = vld [vmem:[#allocation3] sm:$0xff]
    %v298 = vld [vmem:[#allocation3 + $0x8] sm:$0xff]
    %v299 = vadd.f32 %v295, %v297
    %v300 = vadd.f32 %v296, %v298
    %v301 = vld [vmem:[%s6] sm:$0x1]
    %v303 = vlaneseq
    %v304 = vshrl.u32 %v303, 7
    %v305 = vsub.s32 0, %v304
    %v306 = vrot.slane %v301, %v305
    %v308 = vadd.f32 %v299, %v306
    %v309 = vadd.f32 %v300, %v306
    %310 = vst.msk [vmem:[%s7] sm:$0xff] %vm95, %v308
    %311 = vst.msk [vmem:[%s7 + $0x8] sm:$0xff] %vm95, %v309
  $region37: #{transformer_block.5} parent=0 // pred_fallthru
    _
  // Predicated region
  $region38: #{transformer_block.5} parent=0 // pred_check
    _
  $region39: #{transformer_block.5} parent=0 // pred_check_branch
    %313 = sbr.rel (0) target = $region41
  $region40: #{transformer_block.5} parent=0 // pred_region
    _
  $region41: #{transformer_block.5} parent=0 // pred_fallthru
    _
  // Predicated region
  $region42: #{transformer_block.5} parent=0 // pred_check
    _
  $region43: #{transformer_block.5} parent=0 // pred_check_branch
    %315 = sbr.rel (0) target = $region45
  $region44: #{transformer_block.5} parent=0 // pred_region
    _
  $region45: #{transformer_block.5} parent=0 // pred_fallthru
    _

// kernel: transformer_block.4
$region0: #{transformer_block.4}
  #allocation0 [shape = 'u32[]', space=smem, size = 0x4, offset = 0x4, fixed_abs, tag = 'smem constant byte address 0x4 - core index']
  #allocation1 [shape = 'u32[144,128]{1,0:T(1,128)}', space=vmem, size = 0x12000, scoped, tag = 'internal scratch']
  #allocation2 [shape = 'f32[4,8,1]{2,1,0:T(8,128)}', space=vmem, size = 0x4000, scoped, tag = 'scratch operand']
  #allocation3 [shape = 'f32[4,8,1]{2,1,0:T(8,128)}', space=vmem, size = 0x4000, scoped, tag = 'scratch operand']
  #allocation4 [shape = 'f32[4,8,8]{2,1,0:T(8,128)}', space=vmem, size = 0x4000, scoped, tag = 'scratch operand']
  #allocation5 [shape = 'f32[8,32]{1,0:T(8,128)}', space=vmem, size = 0x1000, scoped, tag = 'scratch operand']
  %s0 = inlined_call_operand.vmem [shape: s32[2,8,8], index: 0, kind: input, shape index: {}]
  %s1 = inlined_call_operand.vmem [shape: f32[2,8,32], index: 1, kind: input, shape index: {}]
  %s2 = inlined_call_operand.vmem [shape: f32[2,8,32], index: 2, kind: input, shape index: {}]
  %s3 = inlined_call_operand.vmem [shape: f32[2,8,32], index: 3, kind: input, shape index: {}]
  %s4 = inlined_call_operand.vmem [shape: f32[32,32], index: 4, kind: input, shape index: {}]
  %s5 = inlined_call_operand.vmem [shape: f32[1,32], index: 5, kind: input, shape index: {}]
  %s6 = inlined_call_operand.vmem [shape: f32[2,8,32], index: 6, kind: input, shape index: {}]
  %s7 = inlined_call_operand.vmem [shape: f32[2,8,32], index: 7, kind: output, shape index: {}]
  %s8 = sld [smem:[#allocation0]]
  $region69: #{transformer_block.4} parent=0
    _
  %s10 = ssub.s32 1, %s8
  %s11 = scalar_select 0, %s10, %s8
  loop: start=0, step=1, limit=4
  $region2: #{transformer_block.4} parent=0 // loop_pre_header
    _
  $region3: #{transformer_block.4} parent=0 // loop_header
    %s13 = sphi 0, %s17
    %p14 = scmp.ge.s32.totalorder %s13, 4
    %s20 = sphi 0, %s39
    %s21 = sphi 0, %s35
    %s22 = sphi 0, %s31
    %s23 = sphi 0, %s20
    %s24 = sphi 0, %s21
    %s25 = sphi 0, %s22
    %s26 = sphi 0, %s23
    %s27 = sphi 0, %s24
    %s28 = sphi 0, %s25
    %s46 = sphi 0, %s48
    %s49 = sphi 0, %s46
    %s50 = sphi 0, %s49
    %s66 = sphi 0, %s50
    %s74 = sphi 0, %s76
    %s77 = sphi 0, %s74
    %s78 = sphi 0, %s77
    %s94 = sphi 0, %s78
    %s102 = sphi 0, %s104
    %s105 = sphi 0, %s102
    %s106 = sphi 0, %s105
    %s122 = sphi 0, %s106
    %s130 = sphi 0, %s132
    %s133 = sphi 0, %s130
    %s134 = sphi 0, %s133
    %s150 = sphi 0, %s134
    %s154 = sphi 0, %s154
    %s156 = sphi 0, %s154
    %s157 = sphi 0, %s156
    %s171 = sphi 0, %s157
    %s175 = sphi 0, %s175
    %s177 = sphi 0, %s175
    %s178 = sphi 0, %s177
    %s192 = sphi 0, %s178
    %s200 = sphi 0, %s202
    %s203 = sphi 0, %s200
    %s204 = sphi 0, %s203
    %s220 = sphi 0, %s204
    %s228 = sphi 0, %s230
    %s231 = sphi 0, %s228
    %s232 = sphi 0, %s231
    %s248 = sphi 0, %s232
  $region4: #{transformer_block.4} parent=0 // loop_header_branch
    %16 = sbr.rel (%p14) target = $region8
  $region5: #{transformer_block.4} parent=0 // loop_body
    %s18 = ssub.s32 %s13, 1
    %s19 = ssub.s32 %s13, 2
    %s29 = sadd.s32 1, %s22
    %p30 = scmp.ge.s32.totalorder %s29, 1
    %s31 = scalar_select %p30, 0, %s29
    %s32 = sadd.s32 1, %s21
    %s33 = scalar_select %p30, %s32, %s21
    %p34 = scmp.ge.s32.totalorder %s33, 1
    %s35 = scalar_select %p34, 0, %s33
    %s36 = sadd.s32 1, %s20
    %s37 = scalar_select %p34, %s36, %s20
    %p38 = scmp.ge.s32.totalorder %s37, 2
    %s39 = scalar_select %p38, 0, %s37
    %s40 = ssub.s32 %s20, %s39
    %s41 = ssub.s32 %s21, %s35
    %s42 = sor.u32 %s40, %s41
    %s43 = ssub.s32 %s22, %s31
    %s44 = sor.u32 %s42, %s43
    %p45 = scmp.eq.s32.totalorder %s44, 0
    %s47 = sadd.s32 %s46, 1
    %s48 = scalar_select %p45, %s46, %s47
    %p51 = pneg %p45
    %p52 = scmp.eq.s32.totalorder %s13, 1
    %p53 = por %p51, %p52
    %p54 = scmp.ne.s32.totalorder %s46, %s49
    %p55 = scmp.eq.s32.totalorder %s13, 0
    %p56 = por %p54, %p55
    %p57 = scmp.ne.s32.totalorder %s46, %s49
    %p58 = scmp.eq.s32.totalorder %s18, 1
    %p59 = por %p57, %p58
    %p60 = scmp.ne.s32.totalorder %s49, %s50
    %p61 = scmp.eq.s32.totalorder %s18, 0
    %p62 = por %p60, %p61
    %p63 = scmp.ne.s32.totalorder %s49, %s50
    %p64 = scmp.eq.s32.totalorder %s19, 1
    %p65 = por %p63, %p64
    %p67 = scmp.ne.s32.totalorder %s50, %s66
    %p68 = scmp.eq.s32.totalorder %s19, 0
    %p69 = por %p67, %p68
    %s70 = ssub.s32 %s20, %s39
    %s71 = ssub.s32 %s21, %s35
    %s72 = sor.u32 %s70, %s71
    %p73 = scmp.eq.s32.totalorder %s72, 0
    %s75 = sadd.s32 %s74, 1
    %s76 = scalar_select %p73, %s74, %s75
    %p79 = pneg %p73
    %p80 = scmp.eq.s32.totalorder %s13, 1
    %p81 = por %p79, %p80
    %p82 = scmp.ne.s32.totalorder %s74, %s77
    %p83 = scmp.eq.s32.totalorder %s13, 0
    %p84 = por %p82, %p83
    %p85 = scmp.ne.s32.totalorder %s74, %s77
    %p86 = scmp.eq.s32.totalorder %s18, 1
    %p87 = por %p85, %p86
    %p88 = scmp.ne.s32.totalorder %s77, %s78
    %p89 = scmp.eq.s32.totalorder %s18, 0
    %p90 = por %p88, %p89
    %p91 = scmp.ne.s32.totalorder %s77, %s78
    %p92 = scmp.eq.s32.totalorder %s19, 1
    %p93 = por %p91, %p92
    %p95 = scmp.ne.s32.totalorder %s78, %s94
    %p96 = scmp.eq.s32.totalorder %s19, 0
    %p97 = por %p95, %p96
    %s98 = ssub.s32 %s20, %s39
    %s99 = ssub.s32 %s22, %s31
    %s100 = sor.u32 %s98, %s99
    %p101 = scmp.eq.s32.totalorder %s100, 0
    %s103 = sadd.s32 %s102, 1
    %s104 = scalar_select %p101, %s102, %s103
    %p107 = pneg %p101
    %p108 = scmp.eq.s32.totalorder %s13, 1
    %p109 = por %p107, %p108
    %p110 = scmp.ne.s32.totalorder %s102, %s105
    %p111 = scmp.eq.s32.totalorder %s13, 0
    %p112 = por %p110, %p111
    %p113 = scmp.ne.s32.totalorder %s102, %s105
    %p114 = scmp.eq.s32.totalorder %s18, 1
    %p115 = por %p113, %p114
    %p116 = scmp.ne.s32.totalorder %s105, %s106
    %p117 = scmp.eq.s32.totalorder %s18, 0
    %p118 = por %p116, %p117
    %p119 = scmp.ne.s32.totalorder %s105, %s106
    %p120 = scmp.eq.s32.totalorder %s19, 1
    %p121 = por %p119, %p120
    %p123 = scmp.ne.s32.totalorder %s106, %s122
    %p124 = scmp.eq.s32.totalorder %s19, 0
    %p125 = por %p123, %p124
    %s126 = ssub.s32 %s20, %s39
    %s127 = ssub.s32 %s22, %s31
    %s128 = sor.u32 %s126, %s127
    %p129 = scmp.eq.s32.totalorder %s128, 0
    %s131 = sadd.s32 %s130, 1
    %s132 = scalar_select %p129, %s130, %s131
    %p135 = pneg %p129
    %p136 = scmp.eq.s32.totalorder %s13, 1
    %p137 = por %p135, %p136
    %p138 = scmp.ne.s32.totalorder %s130, %s133
    %p139 = scmp.eq.s32.totalorder %s13, 0
    %p140 = por %p138, %p139
    %p141 = scmp.ne.s32.totalorder %s130, %s133
    %p142 = scmp.eq.s32.totalorder %s18, 1
    %p143 = por %p141, %p142
    %p144 = scmp.ne.s32.totalorder %s133, %s134
    %p145 = scmp.eq.s32.totalorder %s18, 0
    %p146 = por %p144, %p145
    %p147 = scmp.ne.s32.totalorder %s133, %s134
    %p148 = scmp.eq.s32.totalorder %s19, 1
    %p149 = por %p147, %p148
    %p151 = scmp.ne.s32.totalorder %s134, %s150
    %p152 = scmp.eq.s32.totalorder %s19, 0
    %p153 = por %p151, %p152
    %s155 = sadd.s32 %s154, 1
    %p158 = scmp.eq.s32.totalorder %s13, 1
    %p159 = scmp.ne.s32.totalorder %s154, %s156
    %p160 = scmp.eq.s32.totalorder %s13, 0
    %p161 = por %p159, %p160
    %p162 = scmp.ne.s32.totalorder %s154, %s156
    %p163 = scmp.eq.s32.totalorder %s18, 1
    %p164 = por %p162, %p163
    %p165 = scmp.ne.s32.totalorder %s156, %s157
    %p166 = scmp.eq.s32.totalorder %s18, 0
    %p167 = por %p165, %p166
    %p168 = scmp.ne.s32.totalorder %s156, %s157
    %p169 = scmp.eq.s32.totalorder %s19, 1
    %p170 = por %p168, %p169
    %p172 = scmp.ne.s32.totalorder %s157, %s171
    %p173 = scmp.eq.s32.totalorder %s19, 0
    %p174 = por %p172, %p173
    %s176 = sadd.s32 %s175, 1
    %p179 = scmp.eq.s32.totalorder %s13, 1
    %p180 = scmp.ne.s32.totalorder %s175, %s177
    %p181 = scmp.eq.s32.totalorder %s13, 0
    %p182 = por %p180, %p181
    %p183 = scmp.ne.s32.totalorder %s175, %s177
    %p184 = scmp.eq.s32.totalorder %s18, 1
    %p185 = por %p183, %p184
    %p186 = scmp.ne.s32.totalorder %s177, %s178
    %p187 = scmp.eq.s32.totalorder %s18, 0
    %p188 = por %p186, %p187
    %p189 = scmp.ne.s32.totalorder %s177, %s178
    %p190 = scmp.eq.s32.totalorder %s19, 1
    %p191 = por %p189, %p190
    %p193 = scmp.ne.s32.totalorder %s178, %s192
    %p194 = scmp.eq.s32.totalorder %s19, 0
    %p195 = por %p193, %p194
    %s196 = ssub.s32 %s20, %s39
    %s197 = ssub.s32 %s21, %s35
    %s198 = sor.u32 %s196, %s197
    %p199 = scmp.eq.s32.totalorder %s198, 0
    %s201 = sadd.s32 %s200, 1
    %s202 = scalar_select %p199, %s200, %s201
    %p205 = pneg %p199
    %p206 = scmp.eq.s32.totalorder %s13, 1
    %p207 = por %p205, %p206
    %p208 = scmp.ne.s32.totalorder %s200, %s203
    %p209 = scmp.eq.s32.totalorder %s13, 0
    %p210 = por %p208, %p209
    %p211 = scmp.ne.s32.totalorder %s200, %s203
    %p212 = scmp.eq.s32.totalorder %s18, 1
    %p213 = por %p211, %p212
    %p214 = scmp.ne.s32.totalorder %s203, %s204
    %p215 = scmp.eq.s32.totalorder %s18, 0
    %p216 = por %p214, %p215
    %p217 = scmp.ne.s32.totalorder %s203, %s204
    %p218 = scmp.eq.s32.totalorder %s19, 1
    %p219 = por %p217, %p218
    %p221 = scmp.ne.s32.totalorder %s204, %s220
    %p222 = scmp.eq.s32.totalorder %s19, 0
    %p223 = por %p221, %p222
    %s224 = ssub.s32 %s20, %s39
    %s225 = ssub.s32 %s21, %s35
    %s226 = sor.u32 %s224, %s225
    %p227 = scmp.eq.s32.totalorder %s226, 0
    %s229 = sadd.s32 %s228, 1
    %s230 = scalar_select %p227, %s228, %s229
    %p233 = pneg %p227
    %p234 = scmp.eq.s32.totalorder %s13, 1
    %p235 = por %p233, %p234
    %p236 = scmp.ne.s32.totalorder %s228, %s231
    %p237 = scmp.eq.s32.totalorder %s13, 0
    %p238 = por %p236, %p237
    %p239 = scmp.ne.s32.totalorder %s228, %s231
    %p240 = scmp.eq.s32.totalorder %s18, 1
    %p241 = por %p239, %p240
    %p242 = scmp.ne.s32.totalorder %s231, %s232
    %p243 = scmp.eq.s32.totalorder %s18, 0
    %p244 = por %p242, %p243
    %p245 = scmp.ne.s32.totalorder %s231, %s232
    %p246 = scmp.eq.s32.totalorder %s19, 1
    %p247 = por %p245, %p246
    %p249 = scmp.ne.s32.totalorder %s232, %s248
    %p250 = scmp.eq.s32.totalorder %s19, 0
    %p251 = por %p249, %p250
    %p252 = scmp.le.s32.totalorder 1, %s13
    %p253 = scmp.lt.s32.totalorder %s13, 3
    %p254 = pnand %p252, %p253
    %p255 = pneg %p254
    // Predicated region
    $region9: #{transformer_block.4} parent=5 // pred_check
      _
    $region10: #{transformer_block.4} parent=5 // pred_check_branch
      %257 = sbr.rel (%p254) target = $region12
    $region11: #{transformer_block.4} parent=5 // pred_region
      %s258 = ssub.s32 %s13, 1
      // Predicated region
      $region13: #{transformer_block.4} parent=11 // pred_check
        %p259 = pneg %p167
      $region14: #{transformer_block.4} parent=11 // pred_check_branch
        %261 = sbr.rel (%p259) target = $region16
      $region15: #{transformer_block.4} parent=11 // pred_region
        _
      $region16: #{transformer_block.4} parent=11 // pred_fallthru
        _
      // Predicated region
      $region17: #{transformer_block.4} parent=11 // pred_check
        %p262 = pneg %p188
      $region18: #{transformer_block.4} parent=11 // pred_check_branch
        %264 = sbr.rel (%p262) target = $region20
      $region19: #{transformer_block.4} parent=11 // pred_region
        _
      $region20: #{transformer_block.4} parent=11 // pred_fallthru
        _
    $region12: #{transformer_block.4} parent=5 // pred_fallthru
      _
    %p265 = scmp.lt.s32.totalorder %s13, 2
    // Predicated region
    $region21: #{transformer_block.4} parent=5 // pred_check
      %p266 = pneg %p265
    $region22: #{transformer_block.4} parent=5 // pred_check_branch
      %268 = sbr.rel (%p266) target = $region24
    $region23: #{transformer_block.4} parent=5 // pred_region
      // Predicated region
      $region25: #{transformer_block.4} parent=23 // pred_check
        %p269 = pneg %p56
      $region26: #{transformer_block.4} parent=23 // pred_check_branch
        %271 = sbr.rel (%p269) target = $region28
      $region27: #{transformer_block.4} parent=23 // pred_region
        %p272 = scmp.lt.s32.totalorder %s20, 1
        %s273 = scalar_select %p272, %s20, 1
        %p274 = scmp.lt.s32.totalorder %s21, 0
        %s275 = scalar_select %p274, %s21, 0
        %p276 = scmp.lt.s32.totalorder %s22, 0
        %s277 = scalar_select %p276, %s22, 0
        %s278 = sadd.s32 %s277, %s275
        %s279 = sadd.s32 %s278, %s273
        %s280 = smul.addr %s279, 8
        %s281 = scalar_lea.vmem %s0, %s280
      $region28: #{transformer_block.4} parent=23 // pred_fallthru
        _
      // Predicated region
      $region29: #{transformer_block.4} parent=23 // pred_check
        %p282 = pneg %p84
      $region30: #{transformer_block.4} parent=23 // pred_check_branch
        %284 = sbr.rel (%p282) target = $region32
      $region31: #{transformer_block.4} parent=23 // pred_region
        %p285 = scmp.lt.s32.totalorder %s20, 1
        %s286 = scalar_select %p285, %s20, 1
        %p287 = scmp.lt.s32.totalorder %s21, 0
        %s288 = scalar_select %p287, %s21, 0
        %s289 = sadd.s32 %s288, %s286
        %s290 = smul.addr %s289, 8
        %s291 = scalar_lea.vmem %s1, %s290
      $region32: #{transformer_block.4} parent=23 // pred_fallthru
        _
      // Predicated region
      $region33: #{transformer_block.4} parent=23 // pred_check
        %p292 = pneg %p112
      $region34: #{transformer_block.4} parent=23 // pred_check_branch
        %294 = sbr.rel (%p292) target = $region36
      $region35: #{transformer_block.4} parent=23 // pred_region
        %p295 = scmp.lt.s32.totalorder %s20, 1
        %s296 = scalar_select %p295, %s20, 1
        %p297 = scmp.lt.s32.totalorder %s22, 0
        %s298 = scalar_select %p297, %s22, 0
        %s299 = sadd.s32 %s298, %s296
        %s300 = smul.addr %s299, 8
        %s301 = scalar_lea.vmem %s2, %s300
      $region36: #{transformer_block.4} parent=23 // pred_fallthru
        _
      // Predicated region
      $region37: #{transformer_block.4} parent=23 // pred_check
        %p302 = pneg %p140
      $region38: #{transformer_block.4} parent=23 // pred_check_branch
        %304 = sbr.rel (%p302) target = $region40
      $region39: #{transformer_block.4} parent=23 // pred_region
        %p305 = scmp.lt.s32.totalorder %s20, 1
        %s306 = scalar_select %p305, %s20, 1
        %p307 = scmp.lt.s32.totalorder %s22, 0
        %s308 = scalar_select %p307, %s22, 0
        %s309 = sadd.s32 %s308, %s306
        %s310 = smul.addr %s309, 8
        %s311 = scalar_lea.vmem %s3, %s310
      $region40: #{transformer_block.4} parent=23 // pred_fallthru
        _
      // Predicated region
      $region41: #{transformer_block.4} parent=23 // pred_check
        %p312 = pneg %p210
      $region42: #{transformer_block.4} parent=23 // pred_check_branch
        %314 = sbr.rel (%p312) target = $region44
      $region43: #{transformer_block.4} parent=23 // pred_region
        %p315 = scmp.lt.s32.totalorder %s20, 1
        %s316 = scalar_select %p315, %s20, 1
        %p317 = scmp.lt.s32.totalorder %s21, 0
        %s318 = scalar_select %p317, %s21, 0
        %s319 = sadd.s32 %s318, %s316
        %s320 = smul.addr %s319, 8
        %s321 = scalar_lea.vmem %s6, %s320
      $region44: #{transformer_block.4} parent=23 // pred_fallthru
        _
    $region24: #{transformer_block.4} parent=5 // pred_fallthru
      _
    %p322 = scmp.le.s32.totalorder 1, %s13
    %p323 = scmp.lt.s32.totalorder %s13, 3
    %p324 = pnand %p322, %p323
    %p325 = pneg %p324
    // Predicated region
    $region45: #{transformer_block.4} parent=5 // pred_check
      _
    $region46: #{transformer_block.4} parent=5 // pred_check_branch
      %327 = sbr.rel (%p324) target = $region48
    $region47: #{transformer_block.4} parent=5 // pred_region
      %s328 = ssub.s32 %s13, 1
      %p329 = scmp.lt.s32.totalorder %s23, 1
      %s330 = scalar_select %p329, %s23, 1
      %p331 = scmp.lt.s32.totalorder %s24, 0
      %s332 = scalar_select %p331, %s24, 0
      %p333 = scmp.lt.s32.totalorder %s25, 0
      %s334 = scalar_select %p333, %s25, 0
      %s335 = sadd.s32 %s334, %s332
      %s336 = sadd.s32 %s335, %s330
      %s337 = smul.addr %s336, 8
      %s338 = scalar_lea.vmem %s0, %s337
      %p339 = pneg %p62
      %p340 = pneg %p59
      %p341 = scmp.lt.s32.totalorder %s23, 1
      %s342 = scalar_select %p341, %s23, 1
      %p343 = scmp.lt.s32.totalorder %s24, 0
      %s344 = scalar_select %p343, %s24, 0
      %s345 = sadd.s32 %s344, %s342
      %s346 = smul.addr %s345, 8
      %s347 = scalar_lea.vmem %s1, %s346
      %p348 = pneg %p90
      %p349 = pneg %p87
      %p350 = scmp.lt.s32.totalorder %s23, 1
      %s351 = scalar_select %p350, %s23, 1
      %p352 = scmp.lt.s32.totalorder %s25, 0
      %s353 = scalar_select %p352, %s25, 0
      %s354 = sadd.s32 %s353, %s351
      %s355 = smul.addr %s354, 8
      %s356 = scalar_lea.vmem %s2, %s355
      %p357 = pneg %p118
      %p358 = pneg %p115
      %p359 = scmp.lt.s32.totalorder %s23, 1
      %s360 = scalar_select %p359, %s23, 1
      %p361 = scmp.lt.s32.totalorder %s25, 0
      %s362 = scalar_select %p361, %s25, 0
      %s363 = sadd.s32 %s362, %s360
      %s364 = smul.addr %s363, 8
      %s365 = scalar_lea.vmem %s3, %s364
      %p366 = pneg %p146
      %p367 = pneg %p143
      %p368 = pneg %p167
      %p369 = pneg %p164
      %p370 = pneg %p188
      %p371 = pneg %p185
      %p372 = scmp.lt.s32.totalorder %s23, 1
      %s373 = scalar_select %p372, %s23, 1
      %p374 = scmp.lt.s32.totalorder %s24, 0
      %s375 = scalar_select %p374, %s24, 0
      %s376 = sadd.s32 %s375, %s373
      %s377 = smul.addr %s376, 8
      %s378 = scalar_lea.vmem %s6, %s377
      %p379 = pneg %p216
      %p380 = pneg %p213
      %p381 = pneg %p244
      %p382 = pneg %p241
      %p383 = scmp.lt.s32.totalorder %s23, 1
      %s384 = scalar_select %p383, %s23, 1
      %p385 = scmp.lt.s32.totalorder %s24, 0
      %s386 = scalar_select %p385, %s24, 0
      %s387 = sadd.s32 %s386, %s384
      %s388 = smul.addr %s387, 8
      %s389 = scalar_lea.vmem %s7, %s388
      %p390 = scmp.lt.s32.totalorder %s23, 1
      %s391 = scalar_select %p390, %s23, 1
      %p392 = scmp.lt.s32.totalorder %s24, 0
      %s393 = scalar_select %p392, %s24, 0
      %p394 = scmp.lt.s32.totalorder %s25, 0
      %s395 = scalar_select %p394, %s25, 0
      %s396 = sadd.s32 %s395, %s393
      %s397 = sadd.s32 %s396, %s391
      %s398 = smul.addr %s397, 8
      %s399 = scalar_lea.vmem %s0, %s398
      %p400 = scmp.lt.s32.totalorder %s23, 1
      %s401 = scalar_select %p400, %s23, 1
      %p402 = scmp.lt.s32.totalorder %s24, 0
      %s403 = scalar_select %p402, %s24, 0
      %s404 = sadd.s32 %s403, %s401
      %s405 = smul.addr %s404, 8
      %s406 = scalar_lea.vmem %s1, %s405
      %p407 = scmp.lt.s32.totalorder %s23, 1
      %s408 = scalar_select %p407, %s23, 1
      %p409 = scmp.lt.s32.totalorder %s25, 0
      %s410 = scalar_select %p409, %s25, 0
      %s411 = sadd.s32 %s410, %s408
      %s412 = smul.addr %s411, 8
      %s413 = scalar_lea.vmem %s2, %s412
      %p414 = scmp.lt.s32.totalorder %s23, 1
      %s415 = scalar_select %p414, %s23, 1
      %p416 = scmp.lt.s32.totalorder %s25, 0
      %s417 = scalar_select %p416, %s25, 0
      %s418 = sadd.s32 %s417, %s415
      %s419 = smul.addr %s418, 8
      %s420 = scalar_lea.vmem %s3, %s419
      %p421 = scmp.lt.s32.totalorder %s23, 1
      %s422 = scalar_select %p421, %s23, 1
      %p423 = scmp.lt.s32.totalorder %s24, 0
      %s424 = scalar_select %p423, %s24, 0
      %s425 = sadd.s32 %s424, %s422
      %s426 = smul.addr %s425, 8
      %s427 = scalar_lea.vmem %s6, %s426
      %p428 = scmp.lt.s32.totalorder %s23, 1
      %s429 = scalar_select %p428, %s23, 1
      %p430 = scmp.lt.s32.totalorder %s24, 0
      %s431 = scalar_select %p430, %s24, 0
      %s432 = sadd.s32 %s431, %s429
      %s433 = smul.addr %s432, 8
      %s434 = scalar_lea.vmem %s7, %s433
      %p435 = scmp.eq.s32.totalorder %s25, 0
      // Predicated region
      $region49: #{transformer_block.4} parent=47 // pred_check
        %p436 = pneg %p435
      $region50: #{transformer_block.4} parent=47 // pred_check_branch
        %438 = sbr.rel (%p436) target = $region52
      $region51: #{transformer_block.4} parent=47 // pred_region
        %vm439 = vcmask 7168
        %440 = vst.msk [vmem:[#allocation2] sm:$0xff] %vm439, -inf
        %441 = vst.msk [vmem:[#allocation2 + $0x8] sm:$0xff] %vm439, -inf
        %442 = vst.msk [vmem:[#allocation2 + $0x10] sm:$0xff] %vm439, -inf
        %443 = vst.msk [vmem:[#allocation2 + $0x18] sm:$0xff] %vm439, -inf
        %444 = vst.msk [vmem:[#allocation3] sm:$0xff] %vm439, 0.0
        %445 = vst.msk [vmem:[#allocation3 + $0x8] sm:$0xff] %vm439, 0.0
        %446 = vst.msk [vmem:[#allocation3 + $0x10] sm:$0xff] %vm439, 0.0
        %447 = vst.msk [vmem:[#allocation3 + $0x18] sm:$0xff] %vm439, 0.0
        %vm448 = vcmask 64512
        %449 = vst.msk [vmem:[#allocation4] sm:$0xff] %vm448, 0.0
        %450 = vst.msk [vmem:[#allocation4 + $0x8] sm:$0xff] %vm448, 0.0
        %451 = vst.msk [vmem:[#allocation4 + $0x10] sm:$0xff] %vm448, 0.0
        %452 = vst.msk [vmem:[#allocation4 + $0x18] sm:$0xff] %vm448, 0.0
      $region52: #{transformer_block.4} parent=47 // pred_fallthru
        _
      %v453 = vld [vmem:[%s406] sm:$0xff]
      %v454 = vld [vmem:[%s413] sm:$0xff]
      %v455 = vld [vmem:[%s420] sm:$0xff]
      %v456 = vld [vmem:[%s399] sm:$0xff]
      %vm457 = vcmp.eq.s32.totalorder %v456, 0
      %v458 = vmul.f32 %v453, 0.35355338
      %vm459 = vcmask 64512
      %v461 = vsel %vm459, %v458, 0
      %v464 = vsel %vm459, %v454, 0
      %466 = vmatprep.subr.mxu0 0.0
      %467 = vmatpush1.xpose.msra.mxu0 0.0
      %468 = vmatprep.subr.mxu0 0.0
      %469 = vmatpush1.xpose.msra.mxu0 0.0
      %470 = vmatprep.subr.mxu0 0.0
      %471 = vmatpush1.xpose.msra.mxu0 0.0
      %472 = vmatprep.subr.mxu0 0.0
      %473 = vmatpush1.xpose.msra.mxu0 0.0
      %474 = vmatprep.subr.mxu0 0.0
      %475 = vmatpush1.xpose.msra.mxu0 0.0
      %476 = vmatprep.subr.mxu0 0.0
      %477 = vmatpush1.xpose.msra.mxu0 0.0
      %478 = vmatprep.subr.mxu0 0.0
      %479 = vmatpush1.xpose.msra.mxu0 0.0
      %480 = vmatprep.subr.mxu0 0.0
      %481 = vmatpush1.xpose.msra.mxu0 0.0
      %482 = vmatprep.subr.mxu0 0.0
      %483 = vmatpush1.xpose.msra.mxu0 0.0
      %484 = vmatprep.subr.mxu0 0.0
      %485 = vmatpush1.xpose.msra.mxu0 0.0
      %486 = vmatprep.subr.mxu0 0.0
      %487 = vmatpush1.xpose.msra.mxu0 0.0
      %488 = vmatprep.subr.mxu0 0.0
      %489 = vmatpush1.xpose.msra.mxu0 0.0
      %490 = vmatprep.subr.mxu0 0.0
      %491 = vmatpush1.xpose.msra.mxu0 0.0
      %492 = vmatprep.subr.mxu0 0.0
      %493 = vmatpush1.xpose.msra.mxu0 0.0
      %494 = vmatprep.subr.mxu0 0.0
      %495 = vmatpush1.xpose.msra.mxu0 0.0
      %496 = vmatprep.subr.mxu0 0.0
      %497 = vmatpush1.xpose.msra.mxu0 %v464
      %498 = vmatprep.subr.mxu0 0.0
      %499 = vmatpush2.xpose.msra.mxu0 0.0
      %500 = vmatprep.subr.mxu0 0.0
      %501 = vmatpush2.xpose.msra.mxu0 0.0
      %502 = vmatprep.subr.mxu0 0.0
      %503 = vmatpush2.xpose.msra.mxu0 0.0
      %504 = vmatprep.subr.mxu0 0.0
      %505 = vmatpush2.xpose.msra.mxu0 0.0
      %506 = vmatprep.subr.mxu0 0.0
      %507 = vmatpush2.xpose.msra.mxu0 0.0
      %508 = vmatprep.subr.mxu0 0.0
      %509 = vmatpush2.xpose.msra.mxu0 0.0
      %510 = vmatprep.subr.mxu0 0.0
      %511 = vmatpush2.xpose.msra.mxu0 0.0
      %512 = vmatprep.subr.mxu0 0.0
      %513 = vmatpush2.xpose.msra.mxu0 0.0
      %514 = vmatprep.subr.mxu0 0.0
      %515 = vmatpush2.xpose.msra.mxu0 0.0
      %516 = vmatprep.subr.mxu0 0.0
      %517 = vmatpush2.xpose.msra.mxu0 0.0
      %518 = vmatprep.subr.mxu0 0.0
      %519 = vmatpush2.xpose.msra.mxu0 0.0
      %520 = vmatprep.subr.mxu0 0.0
      %521 = vmatpush2.xpose.msra.mxu0 0.0
      %522 = vmatprep.subr.mxu0 0.0
      %523 = vmatpush2.xpose.msra.mxu0 0.0
      %524 = vmatprep.subr.mxu0 0.0
      %525 = vmatpush2.xpose.msra.mxu0 0.0
      %526 = vmatprep.subr.mxu0 0.0
      %527 = vmatpush2.xpose.msra.mxu0 0.0
      %528 = vmatprep.subr.mxu0 0.0
      %529 = vmatpush2.xpose.msra.mxu0 0.0
      %530 = vmatprep.mubr.f32.mxu0 0.0
      %531 = vmatmul.mubr.f32.gmra.mxu0 %v461
      %v532 = vpop.f32.mrf.mxu0
      %v533 = vadd.f32 0.0, %v532
      %v534 = vpop.f32.mrf.mxu0
      %535 = vdwg.mxu0
      %v536 = vsel %vm457, -1e+09, %v533
      %v537 = vld [vmem:[#allocation2] sm:$0xff]
      %v538 = vsel %vm459, %v536, -inf
      %539 = vmax.xlane.f32.xlu0 %v538
      %v540 = vpop.xlane.xlu0 %539
      %v541 = vmax.f32 %v537, %v540
      %v542 = vsub.f32 %v537, %v541
      %v543 = vmul.f32 %v542, 1.442695
      %v544 = vpow.pop %v543
      %546 = vset.pattern.permute.xlu0 0
      %547 = vperm.xlu0 %546, %v541
      %v548 = vpop.permute.xlu0 %547
      %v550 = vsub.f32 %v536, %v548
      %v551 = vmul.f32 %v550, 1.442695
      %v552 = vpow.pop %v551
      %v553 = vld [vmem:[#allocation3] sm:$0xff]
      %v554 = vmul.f32 %v544, %v553
      %v555 = vsel %vm459, %v552, 0.0
      %556 = vadd.xlane.f32.xlu0 %v555
      %v557 = vpop.xlane.xlu0 %556
      %v558 = vadd.f32 %v554, %v557
      %vm559 = vcmask 7168
      %560 = vst.msk [vmem:[#allocation3] sm:$0xff] %vm559, %v558
      %v561 = vld [vmem:[#allocation4] sm:$0xff]
      %563 = vset.pattern.permute.xlu0 0
      %564 = vperm.xlu0 %563, %v544
      %v565 = vpop.permute.xlu0 %564
      %v567 = vmul.f32 %v565, %v561
      %v569 = vsel %vm459, %v552, 0
      %571 = vmatprep.subr.mxu0 0.0
      %572 = vmatpush1.msra.mxu0 0.0
      %573 = vmatprep.subr.mxu0 0.0
      %574 = vmatpush1.msra.mxu0 0.0
      %575 = vmatprep.subr.mxu0 0.0
      %576 = vmatpush1.msra.mxu0 0.0
      %577 = vmatprep.subr.mxu0 0.0
      %578 = vmatpush1.msra.mxu0 0.0
      %579 = vmatprep.subr.mxu0 0.0
      %580 = vmatpush1.msra.mxu0 0.0
      %581 = vmatprep.subr.mxu0 0.0
      %582 = vmatpush1.msra.mxu0 0.0
      %583 = vmatprep.subr.mxu0 0.0
      %584 = vmatpush1.msra.mxu0 0.0
      %585 = vmatprep.subr.mxu0 0.0
      %586 = vmatpush1.msra.mxu0 0.0
      %587 = vmatprep.subr.mxu0 0.0
      %588 = vmatpush1.msra.mxu0 0.0
      %589 = vmatprep.subr.mxu0 0.0
      %590 = vmatpush1.msra.mxu0 0.0
      %591 = vmatprep.subr.mxu0 0.0
      %592 = vmatpush1.msra.mxu0 0.0
      %593 = vmatprep.subr.mxu0 0.0
      %594 = vmatpush1.msra.mxu0 0.0
      %595 = vmatprep.subr.mxu0 0.0
      %596 = vmatpush1.msra.mxu0 0.0
      %597 = vmatprep.subr.mxu0 0.0
      %598 = vmatpush1.msra.mxu0 0.0
      %599 = vmatprep.subr.mxu0 0.0
      %600 = vmatpush1.msra.mxu0 0.0
      %601 = vmatprep.subr.mxu0 0.0
      %602 = vmatpush1.msra.mxu0 %v455
      %603 = vmatprep.subr.mxu0 0.0
      %604 = vmatpush2.msra.mxu0 0.0
      %605 = vmatprep.subr.mxu0 0.0
      %606 = vmatpush2.msra.mxu0 0.0
      %607 = vmatprep.subr.mxu0 0.0
      %608 = vmatpush2.msra.mxu0 0.0
      %609 = vmatprep.subr.mxu0 0.0
      %610 = vmatpush2.msra.mxu0 0.0
      %611 = vmatprep.subr.mxu0 0.0
      %612 = vmatpush2.msra.mxu0 0.0
      %613 = vmatprep.subr.mxu0 0.0
      %614 = vmatpush2.msra.mxu0 0.0
      %615 = vmatprep.subr.mxu0 0.0
      %616 = vmatpush2.msra.mxu0 0.0
      %617 = vmatprep.subr.mxu0 0.0
      %618 = vmatpush2.msra.mxu0 0.0
      %619 = vmatprep.subr.mxu0 0.0
      %620 = vmatpush2.msra.mxu0 0.0
      %621 = vmatprep.subr.mxu0 0.0
      %622 = vmatpush2.msra.mxu0 0.0
      %623 = vmatprep.subr.mxu0 0.0
      %624 = vmatpush2.msra.mxu0 0.0
      %625 = vmatprep.subr.mxu0 0.0
      %626 = vmatpush2.msra.mxu0 0.0
      %627 = vmatprep.subr.mxu0 0.0
      %628 = vmatpush2.msra.mxu0 0.0
      %629 = vmatprep.subr.mxu0 0.0
      %630 = vmatpush2.msra.mxu0 0.0
      %631 = vmatprep.subr.mxu0 0.0
      %632 = vmatpush2.msra.mxu0 0.0
      %633 = vmatprep.subr.mxu0 0.0
      %634 = vmatpush2.msra.mxu0 0.0
      %635 = vmatprep.mubr.f32.mxu0 0.0
      %636 = vmatmul.mubr.f32.gmra.mxu0 %v569
      %v637 = vpop.f32.mrf.mxu0
      %v638 = vadd.f32 0.0, %v637
      %v639 = vpop.f32.mrf.mxu0
      %640 = vdwg.mxu0
      %v641 = vadd.f32 %v567, %v638
      %642 = vst.msk [vmem:[#allocation4] sm:$0xff] %vm459, %v641
      %643 = vst.msk [vmem:[#allocation2] sm:$0xff] %vm559, %v541
      %644 = vrot.lane.b32.xlu0 %v458, 120
      %v645 = vpop.permute.xlu0 %644
      %646 = vrot.lane.b32.xlu0 %v454, 120
      %v647 = vpop.permute.xlu0 %646
      %v648 = vsel %vm459, %v645, 0
      %v650 = vsel %vm459, %v647, 0
      %652 = vmatprep.subr.mxu0 0.0
      %653 = vmatpush1.xpose.msra.mxu0 0.0
      %654 = vmatprep.subr.mxu0 0.0
      %655 = vmatpush1.xpose.msra.mxu0 0.0
      %656 = vmatprep.subr.mxu0 0.0
      %657 = vmatpush1.xpose.msra.mxu0 0.0
      %658 = vmatprep.subr.mxu0 0.0
      %659 = vmatpush1.xpose.msra.mxu0 0.0
      %660 = vmatprep.subr.mxu0 0.0
      %661 = vmatpush1.xpose.msra.mxu0 0.0
      %662 = vmatprep.subr.mxu0 0.0
      %663 = vmatpush1.xpose.msra.mxu0 0.0
      %664 = vmatprep.subr.mxu0 0.0
      %665 = vmatpush1.xpose.msra.mxu0 0.0
      %666 = vmatprep.subr.mxu0 0.0
      %667 = vmatpush1.xpose.msra.mxu0 0.0
      %668 = vmatprep.subr.mxu0 0.0
      %669 = vmatpush1.xpose.msra.mxu0 0.0
      %670 = vmatprep.subr.mxu0 0.0
      %671 = vmatpush1.xpose.msra.mxu0 0.0
      %672 = vmatprep.subr.mxu0 0.0
      %673 = vmatpush1.xpose.msra.mxu0 0.0
      %674 = vmatprep.subr.mxu0 0.0
      %675 = vmatpush1.xpose.msra.mxu0 0.0
      %676 = vmatprep.subr.mxu0 0.0
      %677 = vmatpush1.xpose.msra.mxu0 0.0
      %678 = vmatprep.subr.mxu0 0.0
      %679 = vmatpush1.xpose.msra.mxu0 0.0
      %680 = vmatprep.subr.mxu0 0.0
      %681 = vmatpush1.xpose.msra.mxu0 0.0
      %682 = vmatprep.subr.mxu0 0.0
      %683 = vmatpush1.xpose.msra.mxu0 %v650
      %684 = vmatprep.subr.mxu0 0.0
      %685 = vmatpush2.xpose.msra.mxu0 0.0
      %686 = vmatprep.subr.mxu0 0.0
      %687 = vmatpush2.xpose.msra.mxu0 0.0
      %688 = vmatprep.subr.mxu0 0.0
      %689 = vmatpush2.xpose.msra.mxu0 0.0
      %690 = vmatprep.subr.mxu0 0.0
      %691 = vmatpush2.xpose.msra.mxu0 0.0
      %692 = vmatprep.subr.mxu0 0.0
      %693 = vmatpush2.xpose.msra.mxu0 0.0
      %694 = vmatprep.subr.mxu0 0.0
      %695 = vmatpush2.xpose.msra.mxu0 0.0
      %696 = vmatprep.subr.mxu0 0.0
      %697 = vmatpush2.xpose.msra.mxu0 0.0
      %698 = vmatprep.subr.mxu0 0.0
      %699 = vmatpush2.xpose.msra.mxu0 0.0
      %700 = vmatprep.subr.mxu0 0.0
      %701 = vmatpush2.xpose.msra.mxu0 0.0
      %702 = vmatprep.subr.mxu0 0.0
      %703 = vmatpush2.xpose.msra.mxu0 0.0
      %704 = vmatprep.subr.mxu0 0.0
      %705 = vmatpush2.xpose.msra.mxu0 0.0
      %706 = vmatprep.subr.mxu0 0.0
      %707 = vmatpush2.xpose.msra.mxu0 0.0
      %708 = vmatprep.subr.mxu0 0.0
      %709 = vmatpush2.xpose.msra.mxu0 0.0
      %710 = vmatprep.subr.mxu0 0.0
      %711 = vmatpush2.xpose.msra.mxu0 0.0
      %712 = vmatprep.subr.mxu0 0.0
      %713 = vmatpush2.xpose.msra.mxu0 0.0
      %714 = vmatprep.subr.mxu0 0.0
      %715 = vmatpush2.xpose.msra.mxu0 0.0
      %716 = vmatprep.mubr.f32.mxu0 0.0
      %717 = vmatmul.mubr.f32.gmra.mxu0 %v648
      %v718 = vpop.f32.mrf.mxu0
      %v719 = vadd.f32 0.0, %v718
      %v720 = vpop.f32.mrf.mxu0
      %721 = vdwg.mxu0
      %v722 = vsel %vm457, -1e+09, %v719
      %s723 = scalar_lea.vmem [#allocation2], 8
      %v724 = vld [vmem:[%s723] sm:$0xff]
      %v725 = vsel %vm459, %v722, -inf
      %726 = vmax.xlane.f32.xlu0 %v725
      %v727 = vpop.xlane.xlu0 %726
      %v728 = vmax.f32 %v724, %v727
      %v729 = vsub.f32 %v724, %v728
      %v730 = vmul.f32 %v729, 1.442695
      %v731 = vpow.pop %v730
      %733 = vset.pattern.permute.xlu0 0
      %734 = vperm.xlu0 %733, %v728
      %v735 = vpop.permute.xlu0 %734
      %v737 = vsub.f32 %v722, %v735
      %v738 = vmul.f32 %v737, 1.442695
      %v739 = vpow.pop %v738
      %s740 = scalar_lea.vmem [#allocation3], 8
      %v741 = vld [vmem:[%s740] sm:$0xff]
      %v742 = vmul.f32 %v731, %v741
      %v743 = vsel %vm459, %v739, 0.0
      %744 = vadd.xlane.f32.xlu0 %v743
      %v745 = vpop.xlane.xlu0 %744
      %v746 = vadd.f32 %v742, %v745
      %747 = vst.msk [vmem:[%s740] sm:$0xff] %vm559, %v746
      %s748 = scalar_lea.vmem [#allocation4], 8
      %v749 = vld [vmem:[%s748] sm:$0xff]
      %751 = vset.pattern.permute.xlu0 0
      %752 = vperm.xlu0 %751, %v731
      %v753 = vpop.permute.xlu0 %752
      %v755 = vmul.f32 %v753, %v749
      %757 = vrot.lane.b32.xlu0 %v455, 120
      %v758 = vpop.permute.xlu0 %757
      %v761 = vsel %vm459, %v739, 0
      %763 = vmatprep.subr.mxu0 0.0
      %764 = vmatpush1.msra.mxu0 0.0
      %765 = vmatprep.subr.mxu0 0.0
      %766 = vmatpush1.msra.mxu0 0.0
      %767 = vmatprep.subr.mxu0 0.0
      %768 = vmatpush1.msra.mxu0 0.0
      %769 = vmatprep.subr.mxu0 0.0
      %770 = vmatpush1.msra.mxu0 0.0
      %771 = vmatprep.subr.mxu0 0.0
      %772 = vmatpush1.msra.mxu0 0.0
      %773 = vmatprep.subr.mxu0 0.0
      %774 = vmatpush1.msra.mxu0 0.0
      %775 = vmatprep.subr.mxu0 0.0
      %776 = vmatpush1.msra.mxu0 0.0
      %777 = vmatprep.subr.mxu0 0.0
      %778 = vmatpush1.msra.mxu0 0.0
      %779 = vmatprep.subr.mxu0 0.0
      %780 = vmatpush1.msra.mxu0 0.0
      %781 = vmatprep.subr.mxu0 0.0
      %782 = vmatpush1.msra.mxu0 0.0
      %783 = vmatprep.subr.mxu0 0.0
      %784 = vmatpush1.msra.mxu0 0.0
      %785 = vmatprep.subr.mxu0 0.0
      %786 = vmatpush1.msra.mxu0 0.0
      %787 = vmatprep.subr.mxu0 0.0
      %788 = vmatpush1.msra.mxu0 0.0
      %789 = vmatprep.subr.mxu0 0.0
      %790 = vmatpush1.msra.mxu0 0.0
      %791 = vmatprep.subr.mxu0 0.0
      %792 = vmatpush1.msra.mxu0 0.0
      %793 = vmatprep.subr.mxu0 0.0
      %794 = vmatpush1.msra.mxu0 %v758
      %795 = vmatprep.subr.mxu0 0.0
      %796 = vmatpush2.msra.mxu0 0.0
      %797 = vmatprep.subr.mxu0 0.0
      %798 = vmatpush2.msra.mxu0 0.0
      %799 = vmatprep.subr.mxu0 0.0
      %800 = vmatpush2.msra.mxu0 0.0
      %801 = vmatprep.subr.mxu0 0.0
      %802 = vmatpush2.msra.mxu0 0.0
      %803 = vmatprep.subr.mxu0 0.0
      %804 = vmatpush2.msra.mxu0 0.0
      %805 = vmatprep.subr.mxu0 0.0
      %806 = vmatpush2.msra.mxu0 0.0
      %807 = vmatprep.subr.mxu0 0.0
      %808 = vmatpush2.msra.mxu0 0.0
      %809 = vmatprep.subr.mxu0 0.0
      %810 = vmatpush2.msra.mxu0 0.0
      %811 = vmatprep.subr.mxu0 0.0
      %812 = vmatpush2.msra.mxu0 0.0
      %813 = vmatprep.subr.mxu0 0.0
      %814 = vmatpush2.msra.mxu0 0.0
      %815 = vmatprep.subr.mxu0 0.0
      %816 = vmatpush2.msra.mxu0 0.0
      %817 = vmatprep.subr.mxu0 0.0
      %818 = vmatpush2.msra.mxu0 0.0
      %819 = vmatprep.subr.mxu0 0.0
      %820 = vmatpush2.msra.mxu0 0.0
      %821 = vmatprep.subr.mxu0 0.0
      %822 = vmatpush2.msra.mxu0 0.0
      %823 = vmatprep.subr.mxu0 0.0
      %824 = vmatpush2.msra.mxu0 0.0
      %825 = vmatprep.subr.mxu0 0.0
      %826 = vmatpush2.msra.mxu0 0.0
      %827 = vmatprep.mubr.f32.mxu0 0.0
      %828 = vmatmul.mubr.f32.gmra.mxu0 %v761
      %v829 = vpop.f32.mrf.mxu0
      %v830 = vadd.f32 0.0, %v829
      %v831 = vpop.f32.mrf.mxu0
      %832 = vdwg.mxu0
      %v833 = vadd.f32 %v755, %v830
      %834 = vst.msk [vmem:[%s748] sm:$0xff] %vm459, %v833
      %835 = vst.msk [vmem:[%s723] sm:$0xff] %vm559, %v728
      %836 = vrot.lane.b32.xlu0 %v458, 112
      %v837 = vpop.permute.xlu0 %836
      %838 = vrot.lane.b32.xlu0 %v454, 112
      %v839 = vpop.permute.xlu0 %838
      %v840 = vsel %vm459, %v837, 0
      %v842 = vsel %vm459, %v839, 0
      %844 = vmatprep.subr.mxu0 0.0
      %845 = vmatpush1.xpose.msra.mxu0 0.0
      %846 = vmatprep.subr.mxu0 0.0
      %847 = vmatpush1.xpose.msra.mxu0 0.0
      %848 = vmatprep.subr.mxu0 0.0
      %849 = vmatpush1.xpose.msra.mxu0 0.0
      %850 = vmatprep.subr.mxu0 0.0
      %851 = vmatpush1.xpose.msra.mxu0 0.0
      %852 = vmatprep.subr.mxu0 0.0
      %853 = vmatpush1.xpose.msra.mxu0 0.0
      %854 = vmatprep.subr.mxu0 0.0
      %855 = vmatpush1.xpose.msra.mxu0 0.0
      %856 = vmatprep.subr.mxu0 0.0
      %857 = vmatpush1.xpose.msra.mxu0 0.0
      %858 = vmatprep.subr.mxu0 0.0
      %859 = vmatpush1.xpose.msra.mxu0 0.0
      %860 = vmatprep.subr.mxu0 0.0
      %861 = vmatpush1.xpose.msra.mxu0 0.0
      %862 = vmatprep.subr.mxu0 0.0
      %863 = vmatpush1.xpose.msra.mxu0 0.0
      %864 = vmatprep.subr.mxu0 0.0
      %865 = vmatpush1.xpose.msra.mxu0 0.0
      %866 = vmatprep.subr.mxu0 0.0
      %867 = vmatpush1.xpose.msra.mxu0 0.0
      %868 = vmatprep.subr.mxu0 0.0
      %869 = vmatpush1.xpose.msra.mxu0 0.0
      %870 = vmatprep.subr.mxu0 0.0
      %871 = vmatpush1.xpose.msra.mxu0 0.0
      %872 = vmatprep.subr.mxu0 0.0
      %873 = vmatpush1.xpose.msra.mxu0 0.0
      %874 = vmatprep.subr.mxu0 0.0
      %875 = vmatpush1.xpose.msra.mxu0 %v842
      %876 = vmatprep.subr.mxu0 0.0
      %877 = vmatpush2.xpose.msra.mxu0 0.0
      %878 = vmatprep.subr.mxu0 0.0
      %879 = vmatpush2.xpose.msra.mxu0 0.0
      %880 = vmatprep.subr.mxu0 0.0
      %881 = vmatpush2.xpose.msra.mxu0 0.0
      %882 = vmatprep.subr.mxu0 0.0
      %883 = vmatpush2.xpose.msra.mxu0 0.0
      %884 = vmatprep.subr.mxu0 0.0
      %885 = vmatpush2.xpose.msra.mxu0 0.0
      %886 = vmatprep.subr.mxu0 0.0
      %887 = vmatpush2.xpose.msra.mxu0 0.0
      %888 = vmatprep.subr.mxu0 0.0
      %889 = vmatpush2.xpose.msra.mxu0 0.0
      %890 = vmatprep.subr.mxu0 0.0
      %891 = vmatpush2.xpose.msra.mxu0 0.0
      %892 = vmatprep.subr.mxu0 0.0
      %893 = vmatpush2.xpose.msra.mxu0 0.0
      %894 = vmatprep.subr.mxu0 0.0
      %895 = vmatpush2.xpose.msra.mxu0 0.0
      %896 = vmatprep.subr.mxu0 0.0
      %897 = vmatpush2.xpose.msra.mxu0 0.0
      %898 = vmatprep.subr.mxu0 0.0
      %899 = vmatpush2.xpose.msra.mxu0 0.0
      %900 = vmatprep.subr.mxu0 0.0
      %901 = vmatpush2.xpose.msra.mxu0 0.0
      %902 = vmatprep.subr.mxu0 0.0
      %903 = vmatpush2.xpose.msra.mxu0 0.0
      %904 = vmatprep.subr.mxu0 0.0
      %905 = vmatpush2.xpose.msra.mxu0 0.0
      %906 = vmatprep.subr.mxu0 0.0
      %907 = vmatpush2.xpose.msra.mxu0 0.0
      %908 = vmatprep.mubr.f32.mxu0 0.0
      %909 = vmatmul.mubr.f32.gmra.mxu0 %v840
      %v910 = vpop.f32.mrf.mxu0
      %v911 = vadd.f32 0.0, %v910
      %v912 = vpop.f32.mrf.mxu0
      %913 = vdwg.mxu0
      %v914 = vsel %vm457, -1e+09, %v911
      %s915 = scalar_lea.vmem [#allocation2], 16
      %v916 = vld [vmem:[%s915] sm:$0xff]
      %v917 = vsel %vm459, %v914, -inf
      %918 = vmax.xlane.f32.xlu0 %v917
      %v919 = vpop.xlane.xlu0 %918
      %v920 = vmax.f32 %v916, %v919
      %v921 = vsub.f32 %v916, %v920
      %v922 = vmul.f32 %v921, 1.442695
      %v923 = vpow.pop %v922
      %925 = vset.pattern.permute.xlu0 0
      %926 = vperm.xlu0 %925, %v920
      %v927 = vpop.permute.xlu0 %926
      %v929 = vsub.f32 %v914, %v927
      %v930 = vmul.f32 %v929, 1.442695
      %v931 = vpow.pop %v930
      %s932 = scalar_lea.vmem [#allocation3], 16
      %v933 = vld [vmem:[%s932] sm:$0xff]
      %v934 = vmul.f32 %v923, %v933
      %v935 = vsel %vm459, %v931, 0.0
      %936 = vadd.xlane.f32.xlu0 %v935
      %v937 = vpop.xlane.xlu0 %936
      %v938 = vadd.f32 %v934, %v937
      %939 = vst.msk [vmem:[%s932] sm:$0xff] %vm559, %v938
      %s940 = scalar_lea.vmem [#allocation4], 16
      %v941 = vld [vmem:[%s940] sm:$0xff]
      %943 = vset.pattern.permute.xlu0 0
      %944 = vperm.xlu0 %943, %v923
      %v945 = vpop.permute.xlu0 %944
      %v947 = vmul.f32 %v945, %v941
      %948 = vrot.lane.b32.xlu0 %v455, 112
      %v949 = vpop.permute.xlu0 %948
      %v952 = vsel %vm459, %v931, 0
      %954 = vmatprep.subr.mxu0 0.0
      %955 = vmatpush1.msra.mxu0 0.0
      %956 = vmatprep.subr.mxu0 0.0
      %957 = vmatpush1.msra.mxu0 0.0
      %958 = vmatprep.subr.mxu0 0.0
      %959 = vmatpush1.msra.mxu0 0.0
      %960 = vmatprep.subr.mxu0 0.0
      %961 = vmatpush1.msra.mxu0 0.0
      %962 = vmatprep.subr.mxu0 0.0
      %963 = vmatpush1.msra.mxu0 0.0
      %964 = vmatprep.subr.mxu0 0.0
      %965 = vmatpush1.msra.mxu0 0.0
      %966 = vmatprep.subr.mxu0 0.0
      %967 = vmatpush1.msra.mxu0 0.0
      %968 = vmatprep.subr.mxu0 0.0
      %969 = vmatpush1.msra.mxu0 0.0
      %970 = vmatprep.subr.mxu0 0.0
      %971 = vmatpush1.msra.mxu0 0.0
      %972 = vmatprep.subr.mxu0 0.0
      %973 = vmatpush1.msra.mxu0 0.0
      %974 = vmatprep.subr.mxu0 0.0
      %975 = vmatpush1.msra.mxu0 0.0
      %976 = vmatprep.subr.mxu0 0.0
      %977 = vmatpush1.msra.mxu0 0.0
      %978 = vmatprep.subr.mxu0 0.0
      %979 = vmatpush1.msra.mxu0 0.0
      %980 = vmatprep.subr.mxu0 0.0
      %981 = vmatpush1.msra.mxu0 0.0
      %982 = vmatprep.subr.mxu0 0.0
      %983 = vmatpush1.msra.mxu0 0.0
      %984 = vmatprep.subr.mxu0 0.0
      %985 = vmatpush1.msra.mxu0 %v949
      %986 = vmatprep.subr.mxu0 0.0
      %987 = vmatpush2.msra.mxu0 0.0
      %988 = vmatprep.subr.mxu0 0.0
      %989 = vmatpush2.msra.mxu0 0.0
      %990 = vmatprep.subr.mxu0 0.0
      %991 = vmatpush2.msra.mxu0 0.0
      %992 = vmatprep.subr.mxu0 0.0
      %993 = vmatpush2.msra.mxu0 0.0
      %994 = vmatprep.subr.mxu0 0.0
      %995 = vmatpush2.msra.mxu0 0.0
      %996 = vmatprep.subr.mxu0 0.0
      %997 = vmatpush2.msra.mxu0 0.0
      %998 = vmatprep.subr.mxu0 0.0
      %999 = vmatpush2.msra.mxu0 0.0
      %1000 = vmatprep.subr.mxu0 0.0
      %1001 = vmatpush2.msra.mxu0 0.0
      %1002 = vmatprep.subr.mxu0 0.0
      %1003 = vmatpush2.msra.mxu0 0.0
      %1004 = vmatprep.subr.mxu0 0.0
      %1005 = vmatpush2.msra.mxu0 0.0
      %1006 = vmatprep.subr.mxu0 0.0
      %1007 = vmatpush2.msra.mxu0 0.0
      %1008 = vmatprep.subr.mxu0 0.0
      %1009 = vmatpush2.msra.mxu0 0.0
      %1010 = vmatprep.subr.mxu0 0.0
      %1011 = vmatpush2.msra.mxu0 0.0
      %1012 = vmatprep.subr.mxu0 0.0
      %1013 = vmatpush2.msra.mxu0 0.0
      %1014 = vmatprep.subr.mxu0 0.0
      %1015 = vmatpush2.msra.mxu0 0.0
      %1016 = vmatprep.subr.mxu0 0.0
      %1017 = vmatpush2.msra.mxu0 0.0
      %1018 = vmatprep.mubr.f32.mxu0 0.0
      %1019 = vmatmul.mubr.f32.gmra.mxu0 %v952
      %v1020 = vpop.f32.mrf.mxu0
      %v1021 = vadd.f32 0.0, %v1020
      %v1022 = vpop.f32.mrf.mxu0
      %1023 = vdwg.mxu0
      %v1024 = vadd.f32 %v947, %v1021
      %1025 = vst.msk [vmem:[%s940] sm:$0xff] %vm459, %v1024
      %1026 = vst.msk [vmem:[%s915] sm:$0xff] %vm559, %v920
      %1027 = vrot.lane.b32.xlu0 %v458, 104
      %v1028 = vpop.permute.xlu0 %1027
      %1029 = vrot.lane.b32.xlu0 %v454, 104
      %v1030 = vpop.permute.xlu0 %1029
      %v1031 = vsel %vm459, %v1028, 0
      %v1033 = vsel %vm459, %v1030, 0
      %1035 = vmatprep.subr.mxu0 0.0
      %1036 = vmatpush1.xpose.msra.mxu0 0.0
      %1037 = vmatprep.subr.mxu0 0.0
      %1038 = vmatpush1.xpose.msra.mxu0 0.0
      %1039 = vmatprep.subr.mxu0 0.0
      %1040 = vmatpush1.xpose.msra.mxu0 0.0
      %1041 = vmatprep.subr.mxu0 0.0
      %1042 = vmatpush1.xpose.msra.mxu0 0.0
      %1043 = vmatprep.subr.mxu0 0.0
      %1044 = vmatpush1.xpose.msra.mxu0 0.0
      %1045 = vmatprep.subr.mxu0 0.0
      %1046 = vmatpush1.xpose.msra.mxu0 0.0
      %1047 = vmatprep.subr.mxu0 0.0
      %1048 = vmatpush1.xpose.msra.mxu0 0.0
      %1049 = vmatprep.subr.mxu0 0.0
      %1050 = vmatpush1.xpose.msra.mxu0 0.0
      %1051 = vmatprep.subr.mxu0 0.0
      %1052 = vmatpush1.xpose.msra.mxu0 0.0
      %1053 = vmatprep.subr.mxu0 0.0
      %1054 = vmatpush1.xpose.msra.mxu0 0.0
      %1055 = vmatprep.subr.mxu0 0.0
      %1056 = vmatpush1.xpose.msra.mxu0 0.0
      %1057 = vmatprep.subr.mxu0 0.0
      %1058 = vmatpush1.xpose.msra.mxu0 0.0
      %1059 = vmatprep.subr.mxu0 0.0
      %1060 = vmatpush1.xpose.msra.mxu0 0.0
      %1061 = vmatprep.subr.mxu0 0.0
      %1062 = vmatpush1.xpose.msra.mxu0 0.0
      %1063 = vmatprep.subr.mxu0 0.0
      %1064 = vmatpush1.xpose.msra.mxu0 0.0
      %1065 = vmatprep.subr.mxu0 0.0
      %1066 = vmatpush1.xpose.msra.mxu0 %v1033
      %1067 = vmatprep.subr.mxu0 0.0
      %1068 = vmatpush2.xpose.msra.mxu0 0.0
      %1069 = vmatprep.subr.mxu0 0.0
      %1070 = vmatpush2.xpose.msra.mxu0 0.0
      %1071 = vmatprep.subr.mxu0 0.0
      %1072 = vmatpush2.xpose.msra.mxu0 0.0
      %1073 = vmatprep.subr.mxu0 0.0
      %1074 = vmatpush2.xpose.msra.mxu0 0.0
      %1075 = vmatprep.subr.mxu0 0.0
      %1076 = vmatpush2.xpose.msra.mxu0 0.0
      %1077 = vmatprep.subr.mxu0 0.0
      %1078 = vmatpush2.xpose.msra.mxu0 0.0
      %1079 = vmatprep.subr.mxu0 0.0
      %1080 = vmatpush2.xpose.msra.mxu0 0.0
      %1081 = vmatprep.subr.mxu0 0.0
      %1082 = vmatpush2.xpose.msra.mxu0 0.0
      %1083 = vmatprep.subr.mxu0 0.0
      %1084 = vmatpush2.xpose.msra.mxu0 0.0
      %1085 = vmatprep.subr.mxu0 0.0
      %1086 = vmatpush2.xpose.msra.mxu0 0.0
      %1087 = vmatprep.subr.mxu0 0.0
      %1088 = vmatpush2.xpose.msra.mxu0 0.0
      %1089 = vmatprep.subr.mxu0 0.0
      %1090 = vmatpush2.xpose.msra.mxu0 0.0
      %1091 = vmatprep.subr.mxu0 0.0
      %1092 = vmatpush2.xpose.msra.mxu0 0.0
      %1093 = vmatprep.subr.mxu0 0.0
      %1094 = vmatpush2.xpose.msra.mxu0 0.0
      %1095 = vmatprep.subr.mxu0 0.0
      %1096 = vmatpush2.xpose.msra.mxu0 0.0
      %1097 = vmatprep.subr.mxu0 0.0
      %1098 = vmatpush2.xpose.msra.mxu0 0.0
      %1099 = vmatprep.mubr.f32.mxu0 0.0
      %1100 = vmatmul.mubr.f32.gmra.mxu0 %v1031
      %v1101 = vpop.f32.mrf.mxu0
      %v1102 = vadd.f32 0.0, %v1101
      %v1103 = vpop.f32.mrf.mxu0
      %1104 = vdwg.mxu0
      %v1105 = vsel %vm457, -1e+09, %v1102
      %s1106 = scalar_lea.vmem [#allocation2], 24
      %v1107 = vld [vmem:[%s1106] sm:$0xff]
      %v1108 = vsel %vm459, %v1105, -inf
      %1109 = vmax.xlane.f32.xlu0 %v1108
      %v1110 = vpop.xlane.xlu0 %1109
      %v1111 = vmax.f32 %v1107, %v1110
      %v1112 = vsub.f32 %v1107, %v1111
      %v1113 = vmul.f32 %v1112, 1.442695
      %v1114 = vpow.pop %v1113
      %1116 = vset.pattern.permute.xlu0 0
      %1117 = vperm.xlu0 %1116, %v1111
      %v1118 = vpop.permute.xlu0 %1117
      %v1120 = vsub.f32 %v1105, %v1118
      %v1121 = vmul.f32 %v1120, 1.442695
      %v1122 = vpow.pop %v1121
      %s1123 = scalar_lea.vmem [#allocation3], 24
      %v1124 = vld [vmem:[%s1123] sm:$0xff]
      %v1125 = vmul.f32 %v1114, %v1124
      %v1126 = vsel %vm459, %v1122, 0.0
      %1127 = vadd.xlane.f32.xlu0 %v1126
      %v1128 = vpop.xlane.xlu0 %1127
      %v1129 = vadd.f32 %v1125, %v1128
      %1130 = vst.msk [vmem:[%s1123] sm:$0xff] %vm559, %v1129
      %s1131 = scalar_lea.vmem [#allocation4], 24
      %v1132 = vld [vmem:[%s1131] sm:$0xff]
      %1134 = vset.pattern.permute.xlu0 0
      %1135 = vperm.xlu0 %1134, %v1114
      %v1136 = vpop.permute.xlu0 %1135
      %v1138 = vmul.f32 %v1136, %v1132
      %1139 = vrot.lane.b32.xlu0 %v455, 104
      %v1140 = vpop.permute.xlu0 %1139
      %v1143 = vsel %vm459, %v1122, 0
      %1145 = vmatprep.subr.mxu0 0.0
      %1146 = vmatpush1.msra.mxu0 0.0
      %1147 = vmatprep.subr.mxu0 0.0
      %1148 = vmatpush1.msra.mxu0 0.0
      %1149 = vmatprep.subr.mxu0 0.0
      %1150 = vmatpush1.msra.mxu0 0.0
      %1151 = vmatprep.subr.mxu0 0.0
      %1152 = vmatpush1.msra.mxu0 0.0
      %1153 = vmatprep.subr.mxu0 0.0
      %1154 = vmatpush1.msra.mxu0 0.0
      %1155 = vmatprep.subr.mxu0 0.0
      %1156 = vmatpush1.msra.mxu0 0.0
      %1157 = vmatprep.subr.mxu0 0.0
      %1158 = vmatpush1.msra.mxu0 0.0
      %1159 = vmatprep.subr.mxu0 0.0
      %1160 = vmatpush1.msra.mxu0 0.0
      %1161 = vmatprep.subr.mxu0 0.0
      %1162 = vmatpush1.msra.mxu0 0.0
      %1163 = vmatprep.subr.mxu0 0.0
      %1164 = vmatpush1.msra.mxu0 0.0
      %1165 = vmatprep.subr.mxu0 0.0
      %1166 = vmatpush1.msra.mxu0 0.0
      %1167 = vmatprep.subr.mxu0 0.0
      %1168 = vmatpush1.msra.mxu0 0.0
      %1169 = vmatprep.subr.mxu0 0.0
      %1170 = vmatpush1.msra.mxu0 0.0
      %1171 = vmatprep.subr.mxu0 0.0
      %1172 = vmatpush1.msra.mxu0 0.0
      %1173 = vmatprep.subr.mxu0 0.0
      %1174 = vmatpush1.msra.mxu0 0.0
      %1175 = vmatprep.subr.mxu0 0.0
      %1176 = vmatpush1.msra.mxu0 %v1140
      %1177 = vmatprep.subr.mxu0 0.0
      %1178 = vmatpush2.msra.mxu0 0.0
      %1179 = vmatprep.subr.mxu0 0.0
      %1180 = vmatpush2.msra.mxu0 0.0
      %1181 = vmatprep.subr.mxu0 0.0
      %1182 = vmatpush2.msra.mxu0 0.0
      %1183 = vmatprep.subr.mxu0 0.0
      %1184 = vmatpush2.msra.mxu0 0.0
      %1185 = vmatprep.subr.mxu0 0.0
      %1186 = vmatpush2.msra.mxu0 0.0
      %1187 = vmatprep.subr.mxu0 0.0
      %1188 = vmatpush2.msra.mxu0 0.0
      %1189 = vmatprep.subr.mxu0 0.0
      %1190 = vmatpush2.msra.mxu0 0.0
      %1191 = vmatprep.subr.mxu0 0.0
      %1192 = vmatpush2.msra.mxu0 0.0
      %1193 = vmatprep.subr.mxu0 0.0
      %1194 = vmatpush2.msra.mxu0 0.0
      %1195 = vmatprep.subr.mxu0 0.0
      %1196 = vmatpush2.msra.mxu0 0.0
      %1197 = vmatprep.subr.mxu0 0.0
      %1198 = vmatpush2.msra.mxu0 0.0
      %1199 = vmatprep.subr.mxu0 0.0
      %1200 = vmatpush2.msra.mxu0 0.0
      %1201 = vmatprep.subr.mxu0 0.0
      %1202 = vmatpush2.msra.mxu0 0.0
      %1203 = vmatprep.subr.mxu0 0.0
      %1204 = vmatpush2.msra.mxu0 0.0
      %1205 = vmatprep.subr.mxu0 0.0
      %1206 = vmatpush2.msra.mxu0 0.0
      %1207 = vmatprep.subr.mxu0 0.0
      %1208 = vmatpush2.msra.mxu0 0.0
      %1209 = vmatprep.mubr.f32.mxu0 0.0
      %1210 = vmatmul.mubr.f32.gmra.mxu0 %v1143
      %v1211 = vpop.f32.mrf.mxu0
      %v1212 = vadd.f32 0.0, %v1211
      %v1213 = vpop.f32.mrf.mxu0
      %1214 = vdwg.mxu0
      %v1215 = vadd.f32 %v1138, %v1212
      %1216 = vst.msk [vmem:[%s1131] sm:$0xff] %vm459, %v1215
      %1217 = vst.msk [vmem:[%s1106] sm:$0xff] %vm559, %v1111
      // Predicated region
      $region53: #{transformer_block.4} parent=47 // pred_check
        %p1218 = pneg %p435
      $region54: #{transformer_block.4} parent=47 // pred_check_branch
        %1220 = sbr.rel (%p1218) target = $region56
      $region55: #{transformer_block.4} parent=47 // pred_region
        %v1221 = vld [vmem:[#allocation3] sm:$0xff]
        %v1222 = vrcp.pop %v1221
        %v1223 = vld [vmem:[#allocation4] sm:$0xff]
        %1225 = vset.pattern.permute.xlu0 0
        %1226 = vperm.xlu0 %1225, %v1222
        %v1227 = vpop.permute.xlu0 %1226
        %v1229 = vmul.f32 %v1223, %v1227
        %1230 = vst.msk [vmem:[#allocation5] sm:$0xff] %vm459, %v1229
        %v1231 = vld [vmem:[%s740] sm:$0xff]
        %v1232 = vrcp.pop %v1231
        %v1233 = vld [vmem:[%s748] sm:$0xff]
        %1235 = vset.pattern.permute.xlu0 0
        %1236 = vperm.xlu0 %1235, %v1232
        %v1237 = vpop.permute.xlu0 %1236
        %v1239 = vmul.f32 %v1233, %v1237
        %1241 = vrot.lane.b32.xlu0 %v1239, 8
        %v1242 = vpop.permute.xlu0 %1241
        %vm1244 = vcmask 130112
        %1245 = vst.msk [vmem:[#allocation5] sm:$0xff] %vm1244, %v1242
        %v1246 = vld [vmem:[%s932] sm:$0xff]
        %v1247 = vrcp.pop %v1246
        %v1248 = vld [vmem:[%s940] sm:$0xff]
        %1250 = vset.pattern.permute.xlu0 0
        %1251 = vperm.xlu0 %1250, %v1247
        %v1252 = vpop.permute.xlu0 %1251
        %v1254 = vmul.f32 %v1248, %v1252
        %1256 = vrot.lane.b32.xlu0 %v1254, 16
        %v1257 = vpop.permute.xlu0 %1256
        %vm1259 = vcmask 195712
        %1260 = vst.msk [vmem:[#allocation5] sm:$0xff] %vm1259, %v1257
        %v1261 = vld [vmem:[%s1123] sm:$0xff]
        %v1262 = vrcp.pop %v1261
        %v1263 = vld [vmem:[%s1131] sm:$0xff]
        %1265 = vset.pattern.permute.xlu0 0
        %1266 = vperm.xlu0 %1265, %v1262
        %v1267 = vpop.permute.xlu0 %1266
        %v1269 = vmul.f32 %v1263, %v1267
        %1271 = vrot.lane.b32.xlu0 %v1269, 24
        %v1272 = vpop.permute.xlu0 %1271
        %vm1274 = vcmask 261312
        %1275 = vst.msk [vmem:[#allocation5] sm:$0xff] %vm1274, %v1272
        %v1276 = vld [vmem:[#allocation5] sm:$0xff]
        %v1277 = vld [vmem:[%s4] sm:$0xff]
        %v1278 = vld [vmem:[%s4 + $0x8] sm:$0xff]
        %v1279 = vld [vmem:[%s4 + $0x10] sm:$0xff]
        %v1280 = vld [vmem:[%s4 + $0x18] sm:$0xff]
        %v1281 = vld [vmem:[%s5] sm:$0x1]
        %v1283 = vlaneseq
        %v1284 = vshrl.u32 %v1283, 7
        %v1285 = vsub.s32 0, %v1284
        %v1286 = vrot.slane %v1281, %v1285
        %vm1288 = vcmask 261120
        %v1290 = vsel %vm1288, %v1276, 0
        %1292 = vmatprep.subr.mxu0 0.0
        %1293 = vmatpush1.msra.mxu0 0.0
        %1294 = vmatprep.subr.mxu0 0.0
        %1295 = vmatpush1.msra.mxu0 0.0
        %1296 = vmatprep.subr.mxu0 0.0
        %1297 = vmatpush1.msra.mxu0 0.0
        %1298 = vmatprep.subr.mxu0 0.0
        %1299 = vmatpush1.msra.mxu0 0.0
        %1300 = vmatprep.subr.mxu0 0.0
        %1301 = vmatpush1.msra.mxu0 0.0
        %1302 = vmatprep.subr.mxu0 0.0
        %1303 = vmatpush1.msra.mxu0 0.0
        %1304 = vmatprep.subr.mxu0 0.0
        %1305 = vmatpush1.msra.mxu0 0.0
        %1306 = vmatprep.subr.mxu0 0.0
        %1307 = vmatpush1.msra.mxu0 0.0
        %1308 = vmatprep.subr.mxu0 0.0
        %1309 = vmatpush1.msra.mxu0 0.0
        %1310 = vmatprep.subr.mxu0 0.0
        %1311 = vmatpush1.msra.mxu0 0.0
        %1312 = vmatprep.subr.mxu0 0.0
        %1313 = vmatpush1.msra.mxu0 0.0
        %1314 = vmatprep.subr.mxu0 0.0
        %1315 = vmatpush1.msra.mxu0 0.0
        %1316 = vmatprep.subr.mxu0 0.0
        %1317 = vmatpush1.msra.mxu0 %v1280
        %1318 = vmatprep.subr.mxu0 0.0
        %1319 = vmatpush1.msra.mxu0 %v1279
        %1320 = vmatprep.subr.mxu0 0.0
        %1321 = vmatpush1.msra.mxu0 %v1278
        %1322 = vmatprep.subr.mxu0 0.0
        %1323 = vmatpush1.msra.mxu0 %v1277
        %1324 = vmatprep.subr.mxu0 0.0
        %1325 = vmatpush2.msra.mxu0 0.0
        %1326 = vmatprep.subr.mxu0 0.0
        %1327 = vmatpush2.msra.mxu0 0.0
        %1328 = vmatprep.subr.mxu0 0.0
        %1329 = vmatpush2.msra.mxu0 0.0
        %1330 = vmatprep.subr.mxu0 0.0
        %1331 = vmatpush2.msra.mxu0 0.0
        %1332 = vmatprep.subr.mxu0 0.0
        %1333 = vmatpush2.msra.mxu0 0.0
        %1334 = vmatprep.subr.mxu0 0.0
        %1335 = vmatpush2.msra.mxu0 0.0
        %1336 = vmatprep.subr.mxu0 0.0
        %1337 = vmatpush2.msra.mxu0 0.0
        %1338 = vmatprep.subr.mxu0 0.0
        %1339 = vmatpush2.msra.mxu0 0.0
        %1340 = vmatprep.subr.mxu0 0.0
        %1341 = vmatpush2.msra.mxu0 0.0
        %1342 = vmatprep.subr.mxu0 0.0
        %1343 = vmatpush2.msra.mxu0 0.0
        %1344 = vmatprep.subr.mxu0 0.0
        %1345 = vmatpush2.msra.mxu0 0.0
        %1346 = vmatprep.subr.mxu0 0.0
        %1347 = vmatpush2.msra.mxu0 0.0
        %1348 = vmatprep.subr.mxu0 0.0
        %1349 = vmatpush2.msra.mxu0 0.0
        %1350 = vmatprep.subr.mxu0 0.0
        %1351 = vmatpush2.msra.mxu0 0.0
        %1352 = vmatprep.subr.mxu0 0.0
        %1353 = vmatpush2.msra.mxu0 0.0
        %1354 = vmatprep.subr.mxu0 0.0
        %1355 = vmatpush2.msra.mxu0 0.0
        %1356 = vmatprep.mubr.f32.mxu0 0.0
        %1357 = vmatmul.mubr.f32.gmra.mxu0 %v1290
        %v1358 = vpop.f32.mrf.mxu0
        %v1359 = vadd.f32 %v1286, %v1358
        %v1360 = vpop.f32.mrf.mxu0
        %1361 = vdwg.mxu0
        %v1362 = vld [vmem:[%s427] sm:$0xff]
        %v1363 = vadd.f32 %v1362, %v1359
        %1364 = vst.msk [vmem:[%s434] sm:$0xff] %vm1288, %v1363
      $region56: #{transformer_block.4} parent=47 // pred_fallthru
        _
      %p1365 = scmp.lt.s32.totalorder %s23, 1
      %s1366 = scalar_select %p1365, %s23, 1
      %p1367 = scmp.lt.s32.totalorder %s24, 0
      %s1368 = scalar_select %p1367, %s24, 0
      %s1369 = sadd.s32 %s1368, %s1366
      %s1370 = smul.addr %s1369, 8
      %s1371 = scalar_lea.vmem %s7, %s1370
      // Predicated region
      $region57: #{transformer_block.4} parent=47 // pred_check
        %p1372 = pneg %p241
      $region58: #{transformer_block.4} parent=47 // pred_check_branch
        %1374 = sbr.rel (%p1372) target = $region60
      $region59: #{transformer_block.4} parent=47 // pred_region
        _
      $region60: #{transformer_block.4} parent=47 // pred_fallthru
        _
    $region48: #{transformer_block.4} parent=5 // pred_fallthru
      _
    %p1375 = scmp.le.s32.totalorder 2, %s13
    // Predicated region
    $region61: #{transformer_block.4} parent=5 // pred_check
      %p1376 = pneg %p1375
    $region62: #{transformer_block.4} parent=5 // pred_check_branch
      %1378 = sbr.rel (%p1376) target = $region64
    $region63: #{transformer_block.4} parent=5 // pred_region
      %s1379 = ssub.s32 %s13, 2
      // Predicated region
      $region65: #{transformer_block.4} parent=63 // pred_check
        %p1380 = pneg %p247
      $region66: #{transformer_block.4} parent=63 // pred_check_branch
        %1382 = sbr.rel (%p1380) target = $region68
      $region67: #{transformer_block.4} parent=63 // pred_region
        %p1383 = scmp.lt.s32.totalorder %s26, 1
        %s1384 = scalar_select %p1383, %s26, 1
        %p1385 = scmp.lt.s32.totalorder %s27, 0
        %s1386 = scalar_select %p1385, %s27, 0
        %s1387 = sadd.s32 %s1386, %s1384
        %s1388 = smul.addr %s1387, 8
        %s1389 = scalar_lea.vmem %s7, %s1388
      $region68: #{transformer_block.4} parent=63 // pred_fallthru
        _
    $region64: #{transformer_block.4} parent=5 // pred_fallthru
      _
  $region6: #{transformer_block.4} parent=0 // loop_footer
    %s17 = sadd.s32 1, %s13
  $region7: #{transformer_block.4} parent=0 // loop_footer_branch
    %12 = sbr.rel target = $region3
  $region8: #{transformer_block.4} parent=0 // loop_exit
    _

</llo_original>
